<compile_context>
chip_gen: v6e
topology: v6e:2x2x1
jax: 0.10.0
libtpu: 0.0.40
codegen_flags: <defaults>
</compile_context>

<pallas_src>
import functools

import numpy as np

import jax
import jax.numpy as jnp
from jax import lax
from jax.experimental import pallas as pl
from jax.experimental.pallas import tpu as pltpu


# ---------------------------------------------------------------------------
# small helpers
# ---------------------------------------------------------------------------
def _round_up(x, m):
    return -(-x // m) * m


def _round_bf16(x):
    """Round an f32 array to bf16-representable values (kept in f32)."""
    return x.astype(jnp.bfloat16).astype(jnp.float32)


def _pick_tile(n, pref):
    """Largest multiple of 128 that divides n and is <= pref (else n itself)."""
    t = min(pref, n)
    t = (t // 128) * 128
    while t >= 128:
        if n % t == 0:
            return t
        t -= 128
    return n


def _pick_tm(n_padded, pref=512):
    """Spatial (lane) tile for the conv kernels: multiple of 128, <= pref."""
    return min(pref, _round_up(n_padded, 128))


# ---------------------------------------------------------------------------
# Pallas kernel 1: tiled cond_proj + fused AgeEmbedMLP (+ folded post_quant_conv)
# ---------------------------------------------------------------------------
def _cond_proj_kernel(z_ref, wz_ref, age_ref, w1_ref, b1_ref, w2_ref, b2_ref,
                      wa_ref, bias_ref, o_ref, acc_ref):
    """out[:, n-tile] = z_flat @ Wz[:, n-tile] + age_mlp(age) @ Wa[:, n-tile] + b."""
    k = pl.program_id(1)

    @pl.when(k == 0)
    def _init():
        acc_ref[...] = jnp.zeros_like(acc_ref)

    acc_ref[...] += jnp.dot(z_ref[...], wz_ref[...],
                            preferred_element_type=jnp.float32)

    @pl.when(k == pl.num_programs(1) - 1)
    def _finalize():
        # Tiny two-layer age MLP, recomputed per N tile (negligible cost).
        h = jnp.maximum(age_ref[...] * w1_ref[...] + b1_ref[...], 0.0)     # [B, E]
        h = jnp.maximum(
            jnp.dot(h, w2_ref[...], preferred_element_type=jnp.float32) + b2_ref[...],
            0.0)
        out = (acc_ref[...]
               + jnp.dot(h, wa_ref[...], preferred_element_type=jnp.float32)
               + bias_ref[...])
        o_ref[...] = out.astype(o_ref.dtype)


def _cond_project(z_flat, age, p, *, tn, tk):
    """z_flat: [B, F] bf16, age: [B, 1] f32 -> [B, F] bf16 (tiled F x F GEMM)."""
    B, F = z_flat.shape
    E = p["age_w1"].shape[1]
    nN, nK = F // tn, F // tk
    flops = 2 * B * F * F + 2 * B * E * (E + F)
    bytes_acc = F * F * 2 + 2 * B * F * 2 + E * F * 4 + F * 4
    return pl.pallas_call(
        _cond_proj_kernel,
        out_shape=jax.ShapeDtypeStruct((B, F), jnp.bfloat16),
        grid=(nN, nK),
        in_specs=[
            pl.BlockSpec((B, tk), lambda n, k: (0, k)),      # z_flat (bf16)
            pl.BlockSpec((tk, tn), lambda n, k: (k, n)),     # folded Wz (bf16)
            pl.BlockSpec((B, 1), lambda n, k: (0, 0)),       # age
            pl.BlockSpec((1, E), lambda n, k: (0, 0)),       # age mlp W1^T
            pl.BlockSpec((1, E), lambda n, k: (0, 0)),       # age mlp b1
            pl.BlockSpec((E, E), lambda n, k: (0, 0)),       # age mlp W2^T
            pl.BlockSpec((1, E), lambda n, k: (0, 0)),       # age mlp b2
            pl.BlockSpec((E, tn), lambda n, k: (0, n)),      # Wa
            pl.BlockSpec((1, tn), lambda n, k: (0, n)),      # folded bias
        ],
        out_specs=pl.BlockSpec((B, tn), lambda n, k: (0, n)),
        scratch_shapes=[pltpu.VMEM((B, tn), jnp.float32)],
        compiler_params=pltpu.CompilerParams(
            dimension_semantics=("parallel", "arbitrary"),
            vmem_limit_bytes=32 * 1024 * 1024),
        cost_estimate=pl.CostEstimate(flops=flops, transcendentals=0,
                                      bytes_accessed=bytes_acc),
    )(z_flat, p["proj_wz"], age, p["age_w1"], p["age_b1"], p["age_w2"], p["age_b2"],
      p["proj_wa"], p["proj_b"])


# ---------------------------------------------------------------------------
# Pallas kernel 2: 3x3x3 conv with fused im2col (and optionally fused upsample
# via the window gather), channels-in-sublanes / spatial-in-lanes layout.
# ---------------------------------------------------------------------------
def _conv3x3_kernel(win_ref, w_ref, b_ref, o_ref, patch_ref, *, hp, wp, tm, cin, relu):
    # win_ref: (1, 1, Cin, TM + 2*P2)  haloed window on the padded output grid
    # w_ref:   (Cout, 27*Cin)          bf16 GEMM weight (tap-major, then channel)
    # b_ref:   (Cout, 1) f32
    # o_ref:   (1, Cout, TM)           lane-dense store (TM spatial positions)
    # patch_ref: VMEM (27*Cin, TM)     in-VMEM im2col tile
    x = win_ref[0, 0, :, :]                               # [Cin, TW]
    t = 0
    for dd in range(3):
        for dh in range(3):
            for dw in range(3):
                s = dd * hp * wp + dh * wp + dw           # static lane offset
                patch_ref[t * cin:(t + 1) * cin, :] = x[:, s:s + tm]
                t += 1
    acc = jnp.dot(w_ref[...], patch_ref[...],
                  preferred_element_type=jnp.float32)     # [Cout, TM]
    acc = acc + b_ref[...]
    if relu:
        acc = jnp.maximum(acc, 0.0)
    o_ref[0, :, :] = acc.astype(o_ref.dtype)


def _conv_layer(src, w, b, *, idx, hp, wp, tm, relu, out_dtype):
    """src: [B, Cin, S] (flat activation) -> [B, Cout, Np_r] on the padded output grid.

    `idx` ([nT, TM+2*P2] int32) gathers the haloed, zero-padded (and, for the
    upsample-fused layer, nearest-upsampled) input window for each output tile; the
    kernel then builds the 27-tap patch entirely in VMEM (no im2col in HBM).
    """
    B, Cin, _ = src.shape
    Cout = w.shape[0]
    nT, TW = idx.shape
    np_r = nT * tm
    assert TW == tm + 2 * (hp * wp + wp + 1)

    zero_col = jnp.zeros((B, Cin, 1), src.dtype)
    src_ext = jnp.concatenate([src, zero_col], axis=-1)
    win = jnp.take(src_ext, idx.reshape(-1), axis=-1).reshape(B, Cin, nT, TW)
    win = jnp.transpose(win, (0, 2, 1, 3))                # [B, nT, Cin, TW]
    # TODO(synk): the window gather/transpose runs in XLA (~1.5-2x activation bytes);
    # it could be moved into a manual-DMA Pallas gather for further HBM savings.

    kernel = functools.partial(_conv3x3_kernel, hp=hp, wp=wp, tm=tm, cin=Cin, relu=relu)
    flops = 2 * B * np_r * 27 * Cin * Cout
    bytes_acc = (win.size * win.dtype.itemsize
                 + w.size * w.dtype.itemsize
                 + B * Cout * np_r * jnp.dtype(out_dtype).itemsize)
    return pl.pallas_call(
        kernel,
        out_shape=jax.ShapeDtypeStruct((B, Cout, np_r), out_dtype),
        grid=(B, nT),
        in_specs=[
            pl.BlockSpec((1, 1, Cin, TW), lambda bb, t: (bb, t, 0, 0)),
            pl.BlockSpec((Cout, 27 * Cin), lambda bb, t: (0, 0)),
            pl.BlockSpec((Cout, 1), lambda bb, t: (0, 0)),
        ],
        out_specs=pl.BlockSpec((1, Cout, tm), lambda bb, t: (bb, 0, t)),
        scratch_shapes=[pltpu.VMEM((27 * Cin, tm), src.dtype)],
        compiler_params=pltpu.CompilerParams(
            dimension_semantics=("parallel", "parallel"),
            vmem_limit_bytes=32 * 1024 * 1024),
        cost_estimate=pl.CostEstimate(flops=flops, transcendentals=0,
                                      bytes_accessed=bytes_acc),
    )(win, w, b)


# ---------------------------------------------------------------------------
# Window gather index maps (fuse zero-padding, halo, tiling and upsample).
# ---------------------------------------------------------------------------
def _window_idx(out_dhw, src_index_fn, src_size, tm):
    """Precompute gather indices for haloed windows on the padded output grid.

    out_dhw: conv output spatial dims.  src_index_fn(od,oh,ow) -> flat index into the
    source activation for output coord (od,oh,ow).  src_size is the zero-slot index.
    """
    Do, Ho, Wo = out_dhw
    Dp, Hp, Wp = Do + 2, Ho + 2, Wo + 2
    Np = Dp * Hp * Wp
    nT = -(-Np // tm)
    P2 = Hp * Wp + Wp + 1
    TW = tm + 2 * P2

    base = (np.arange(nT, dtype=np.int64) * tm)[:, None]
    off = np.arange(TW, dtype=np.int64)[None, :] - P2
    r = base + off                                        # padded flat position
    pd, rem = np.divmod(r, Hp * Wp)
    ph, pw = np.divmod(rem, Wp)
    interior = ((r >= 0) & (r < Np)
                & (pd >= 1) & (pd <= Do)
                & (ph >= 1) & (ph <= Ho)
                & (pw >= 1) & (pw <= Wo))
    od = np.clip(pd - 1, 0, Do - 1)
    oh = np.clip(ph - 1, 0, Ho - 1)
    ow = np.clip(pw - 1, 0, Wo - 1)
    src = src_index_fn(od, oh, ow)
    idx = np.where(interior, src, src_size).astype(np.int32)
    return idx, nT * tm, Hp, Wp


# ---------------------------------------------------------------------------
# Parameters (PyTorch layouts) + preparation into kernel layouts
# ---------------------------------------------------------------------------
def init_raw_params(key, *, C_lat, hidden, E, latent_dhw):
    Dl, Hl, Wl = latent_dhw
    S = Dl * Hl * Wl
    F = C_lat * S
    ks = jax.random.split(key, 12)

    def nrm(k, shape, scale):
        return _round_bf16(scale * jax.random.normal(k, shape, jnp.float32))

    kaiming = (2.0 / (F + E)) ** 0.5
    return {
        # post_quant_conv: Conv3d(C,C,1) weight [Cout, Cin] (+ bias)
        "pq_w": nrm(ks[0], (C_lat, C_lat), 0.4),
        "pq_b": nrm(ks[1], (C_lat,), 0.05),
        # AgeEmbedMLP: Linear(1,E), Linear(E,E) stored PyTorch-style [out, in]
        "mlp_w1": nrm(ks[2], (E, 1), 0.8),
        "mlp_b1": nrm(ks[3], (E,), 0.1),
        "mlp_w2": nrm(ks[4], (E, E), 0.4),
        "mlp_b2": nrm(ks[5], (E,), 0.1),
        # cond_proj: Linear(F+E, F) weight [out, in] (+ bias)
        "proj_w": nrm(ks[6], (F, F + E), kaiming),
        "proj_b": nrm(ks[7], (F,), 0.05),
        # synthetic decoder convs, PyTorch layout [Cout, Cin, kD, kH, kW]
        "c1_w": nrm(ks[8], (hidden, C_lat, 3, 3, 3), 0.12),
        "c1_b": nrm(ks[9], (hidden,), 0.05),
        "c2_w": nrm(ks[10], (hidden, hidden, 3, 3, 3), 0.08),
        "c2_b": jnp.zeros((hidden,), jnp.float32),
        "c3_w": nrm(ks[11], (1, hidden, 3, 3, 3), 0.08),
        "c3_b": jnp.zeros((1,), jnp.float32),
    }


def prepare_params(raw, *, C_lat, hidden, latent_dhw):
    """Fold post_quant_conv into cond_proj, convert to GEMM layouts, cast to bf16."""
    Dl, Hl, Wl = latent_dhw
    S = Dl * Hl * Wl
    F = C_lat * S
    E = raw["mlp_b1"].shape[0]
    cin1 = _round_up(C_lat, 8)

    # Split cond_proj columns into z part and age part, transpose to [in, out].
    Wp = raw["proj_w"]                  # [F, F+E]
    Wpz = jnp.transpose(Wp[:, :F])      # [F(in), F(out)]
    Wpa = jnp.transpose(Wp[:, F:])      # [E, F]
    # Fold the 1x1x1 post_quant_conv:  z_flat[o*S+s] = sum_c pq_w[o,c] z[c,s] + pq_b[o]
    Wpz_r = Wpz.reshape(C_lat, S, F)
    Wz = jnp.einsum("oc,osf->csf", raw["pq_w"], Wpz_r).reshape(F, F)
    bz = raw["proj_b"] + jnp.einsum("o,osf->f", raw["pq_b"], Wpz_r)

    def conv_gemm(w):   # [Cout, Cin, 3,3,3] -> [Cout, 27*Cin] (taps major, then Cin)
        co, ci = w.shape[0], w.shape[1]
        return jnp.transpose(w, (0, 2, 3, 4, 1)).reshape(co, 27 * ci)

    c1_w = raw["c1_w"]
    if cin1 > C_lat:                    # pad Cin up to a multiple of 8 (zero taps)
        c1_w = jnp.concatenate(
            [c1_w, jnp.zeros((hidden, cin1 - C_lat, 3, 3, 3), c1_w.dtype)], axis=1)

    c3_w = conv_gemm(raw["c3_w"])       # [1, 27*hidden]
    cout3 = _round_up(c3_w.shape[0], 8)
    c3_w = jnp.concatenate(
        [c3_w, jnp.zeros((cout3 - 1, 27 * hidden), c3_w.dtype)], axis=0)
    c3_b = jnp.concatenate([raw["c3_b"], jnp.zeros((cout3 - 1,), jnp.float32)])

    bf = lambda x: x.astype(jnp.bfloat16)
    return {
        "proj_wz": bf(Wz),
        "proj_wa": Wpa.astype(jnp.float32),
        "proj_b": bz.reshape(1, F).astype(jnp.float32),
        "age_w1": jnp.transpose(raw["mlp_w1"]).astype(jnp.float32),   # [1, E]
        "age_b1": raw["mlp_b1"].reshape(1, E).astype(jnp.float32),
        "age_w2": jnp.transpose(raw["mlp_w2"]).astype(jnp.float32),   # [E, E] (in,out)
        "age_b2": raw["mlp_b2"].reshape(1, E).astype(jnp.float32),
        "c1_w": bf(conv_gemm(c1_w)), "c1_b": raw["c1_b"].reshape(hidden, 1),
        "c2_w": bf(conv_gemm(raw["c2_w"])), "c2_b": raw["c2_b"].reshape(hidden, 1),
        "c3_w": bf(c3_w), "c3_b": c3_b.reshape(cout3, 1),
    }


# ---------------------------------------------------------------------------
# Decoder builder (static geometry captured in the closure)
# ---------------------------------------------------------------------------
def build_decoder(*, C_lat, hidden, latent_dhw, tm_pref=512, tn_pref=256, tk_pref=512):
    assert hidden % 8 == 0, "hidden channels must be a multiple of 8"
    Dl, Hl, Wl = latent_dhw
    S = Dl * Hl * Wl
    F = C_lat * S
    Do, Ho, Wo = 2 * Dl, 2 * Hl, 2 * Wl
    cin1 = _round_up(C_lat, 8)

    TN = _pick_tile(F, tn_pref)
    TK = _pick_tile(F, tk_pref)

    tm1 = _pick_tm((Dl + 2) * (Hl + 2) * (Wl + 2), tm_pref)
    tm2 = _pick_tm((Do + 2) * (Ho + 2) * (Wo + 2), tm_pref)

    # Layer 1: conv on the latent grid; source = z_proj [B, C, Dl*Hl*Wl] (unpadded flat).
    def src1(od, oh, ow):
        return (od * Hl + oh) * Wl + ow
    idx1, np1r, hp1, wp1 = _window_idx((Dl, Hl, Wl), src1, S, tm1)

    # Layer 2: nearest x2 upsample fused into the window gather (source = out//2);
    # source = c1 output stored on its padded grid [B, hidden, np1r].
    Hq, Wq = Hl + 2, Wl + 2
    def src2(od, oh, ow):
        return ((od // 2 + 1) * Hq + (oh // 2 + 1)) * Wq + (ow // 2 + 1)
    idx2, np2r, hp2, wp2 = _window_idx((Do, Ho, Wo), src2, np1r, tm2)

    # Layer 3: same grid; source = c2 output stored on its padded grid [B, hidden, np2r].
    Hr, Wr = Ho + 2, Wo + 2
    def src3(od, oh, ow):
        return ((od + 1) * Hr + (oh + 1)) * Wr + (ow + 1)
    idx3, np3r, hp3, wp3 = _window_idx((Do, Ho, Wo), src3, np2r, tm2)

    Dp3, Hp3, Wp3 = Do + 2, Ho + 2, Wo + 2
    np3 = Dp3 * Hp3 * Wp3

    def forward(z, age, p):
        B = z.shape[0]
        # view(B, -1) on NCDHW is a C-major flatten -> plain reshape (pq conv folded).
        z_flat = z.reshape(B, F).astype(jnp.bfloat16)
        zp = _cond_project(z_flat, age, p, tn=TN, tk=TK)            # [B, F] bf16
        x0 = zp.reshape(B, C_lat, S)
        if cin1 > C_lat:
            x0 = jnp.concatenate(
                [x0, jnp.zeros((B, cin1 - C_lat, S), x0.dtype)], axis=1)
        y1 = _conv_layer(x0, p["c1_w"], p["c1_b"], idx=idx1, hp=hp1, wp=wp1,
                         tm=tm1, relu=True, out_dtype=jnp.bfloat16)
        y2 = _conv_layer(y1, p["c2_w"], p["c2_b"], idx=idx2, hp=hp2, wp=wp2,
                         tm=tm2, relu=True, out_dtype=jnp.bfloat16)
        y3 = _conv_layer(y2, p["c3_w"], p["c3_b"], idx=idx3, hp=hp3, wp=wp3,
                         tm=tm2, relu=False, out_dtype=jnp.float32)
        out = y3[:, :1, :np3].reshape(B, 1, Dp3, Hp3, Wp3)
        return out[:, :, 1:-1, 1:-1, 1:-1]                          # crop padded ring

    return forward


# ---------------------------------------------------------------------------
# Pure-JAX reference (PyTorch semantics) for validation
# ---------------------------------------------------------------------------
def reference_forward(z, age, raw):
    B, C, Dl, Hl, Wl = z.shape
    zq = jnp.einsum("oc,bcdhw->bodhw", raw["pq_w"], z) \
        + raw["pq_b"][None, :, None, None, None]
    z_flat = zq.reshape(B, -1)
    h = jnp.maximum(age @ raw["mlp_w1"].T + raw["mlp_b1"], 0.0)
    h = jnp.maximum(h @ raw["mlp_w2"].T + raw["mlp_b2"], 0.0)
    comb = jnp.concatenate([z_flat, h], axis=1)
    zp = comb @ raw["proj_w"].T + raw["proj_b"]
    x = zp.reshape(B, C, Dl, Hl, Wl)

    def conv3(x, w, b):
        y = lax.conv_general_dilated(x, w, (1, 1, 1), "SAME",
                                     dimension_numbers=("NCDHW", "OIDHW", "NCDHW"))
        return y + b[None, :, None, None, None]

    x = jnp.maximum(conv3(x, raw["c1_w"], raw["c1_b"]), 0.0)
    x = jnp.repeat(jnp.repeat(jnp.repeat(x, 2, axis=2), 2, axis=3), 2, axis=4)
    x = jnp.maximum(conv3(x, raw["c2_w"], raw["c2_b"]), 0.0)
    x = conv3(x, raw["c3_w"], raw["c3_b"])
    return x


# ---------------------------------------------------------------------------
if __name__ == "__main__":
    B, C_lat, hidden, age_embed_dim = 2, 4, 8, 16
    Dl = Hl = Wl = 8                    # latent 8^3 -> output 16^3

    key = jax.random.PRNGKey(0)
    k_z, k_age, k_par = jax.random.split(key, 3)

    z = _round_bf16(jax.random.normal(k_z, (B, C_lat, Dl, Hl, Wl), jnp.float32))
    age = jax.random.uniform(k_age, (B, 1), jnp.float32)   # normalized in [0, 1]

    raw = init_raw_params(k_par, C_lat=C_lat, hidden=hidden, E=age_embed_dim,
                          latent_dhw=(Dl, Hl, Wl))
    prep = prepare_params(raw, C_lat=C_lat, hidden=hidden, latent_dhw=(Dl, Hl, Wl))
    fwd = build_decoder(C_lat=C_lat, hidden=hidden, latent_dhw=(Dl, Hl, Wl))

    out = jax.jit(fwd)(z, age, prep)
    out = jax.block_until_ready(out)

    assert out.shape == (B, 1, 2 * Dl, 2 * Hl, 2 * Wl), out.shape
    assert out.dtype == jnp.float32

    ref = jax.block_until_ready(reference_forward(z, age, raw))
    max_err = float(jnp.max(jnp.abs(out - ref)))
    scale = float(jnp.max(jnp.abs(ref)))
    assert max_err <= 0.1 * (1.0 + scale), (max_err, scale)

    print("KERNEL_OK")
</pallas_src>

<mosaic_0001>
module attributes {stable_mosaic.version = 11 : i64} {
  func.func @_cond_proj_kernel(%arg0: i32, %arg1: i32, %arg2: memref<2x512xbf16, #tpu.memory_space<vmem>>, %arg3: memref<512x256xbf16, #tpu.memory_space<vmem>>, %arg4: memref<2x1xf32, #tpu.memory_space<vmem>>, %arg5: memref<1x16xf32, #tpu.memory_space<vmem>>, %arg6: memref<1x16xf32, #tpu.memory_space<vmem>>, %arg7: memref<16x16xf32, #tpu.memory_space<vmem>>, %arg8: memref<1x16xf32, #tpu.memory_space<vmem>>, %arg9: memref<16x256xf32, #tpu.memory_space<vmem>>, %arg10: memref<1x256xf32, #tpu.memory_space<vmem>>, %arg11: memref<2x256xbf16, #tpu.memory_space<vmem>>, %arg12: memref<2x256xf32, #tpu.memory_space<vmem>>) attributes {dimension_semantics = [#tpu.dimension_semantics<parallel>, #tpu.dimension_semantics<arbitrary>], iteration_bounds = array<i64: 8, 4>, scalar_prefetch = 0 : i64, scratch_operands = 1 : i64, tpu.core_type = #tpu.core_type<tc>, window_params = [{transform_indices = @transform_0, window_bounds = array<i64: 2, 512>}, {transform_indices = @transform_1, window_bounds = array<i64: 512, 256>}, {pipeline_mode = #tpu.pipeline_mode<synchronous>, transform_indices = @transform_2, window_bounds = array<i64: 2, 1>}, {pipeline_mode = #tpu.pipeline_mode<synchronous>, transform_indices = @transform_3, window_bounds = array<i64: 1, 16>}, {pipeline_mode = #tpu.pipeline_mode<synchronous>, transform_indices = @transform_4, window_bounds = array<i64: 1, 16>}, {pipeline_mode = #tpu.pipeline_mode<synchronous>, transform_indices = @transform_5, window_bounds = array<i64: 16, 16>}, {pipeline_mode = #tpu.pipeline_mode<synchronous>, transform_indices = @transform_6, window_bounds = array<i64: 1, 16>}, {transform_indices = @transform_7, window_bounds = array<i64: 16, 256>}, {transform_indices = @transform_8, window_bounds = array<i64: 1, 256>}, {transform_indices = @transform_9, window_bounds = array<i64: 2, 256>}]} {
    %c0_i32 = arith.constant 0 : i32
    %0 = arith.cmpi eq, %arg1, %c0_i32 : i32
    %1 = arith.extui %0 : i1 to i32
    %c0_i32_0 = arith.constant 0 : i32
    %2 = arith.cmpi ne, %1, %c0_i32_0 : i32
    scf.if %2 {
      %cst_9 = arith.constant 0.000000e+00 : f32
      %12 = vector.broadcast %cst_9 : f32 to vector<2x256xf32>
      %c0_10 = arith.constant 0 : index
      %c0_11 = arith.constant 0 : index
      %13 = vector.load %arg12[%c0_10, %c0_11] : memref<2x256xf32, #tpu.memory_space<vmem>>, vector<2x256xf32>
      tpu.vector_store %arg12[%c0_10, %c0_11], %12 {strides = array<i32>} : memref<2x256xf32, #tpu.memory_space<vmem>>, vector<2x256xf32>,
    } else {
    }
    %c0 = arith.constant 0 : index
    %c0_1 = arith.constant 0 : index
    %3 = vector.load %arg12[%c0, %c0_1] : memref<2x256xf32, #tpu.memory_space<vmem>>, vector<2x256xf32>
    %c0_2 = arith.constant 0 : index
    %c0_3 = arith.constant 0 : index
    %4 = vector.load %arg2[%c0_2, %c0_3] : memref<2x512xbf16, #tpu.memory_space<vmem>>, vector<2x512xbf16>
    %c0_4 = arith.constant 0 : index
    %c0_5 = arith.constant 0 : index
    %5 = vector.load %arg3[%c0_4, %c0_5] : memref<512x256xbf16, #tpu.memory_space<vmem>>, vector<512x256xbf16>
    %cst = arith.constant dense<0.000000e+00> : vector<2x256xf32>
    %6 = tpu.matmul %4, %5, %cst {dimension_numbers = #tpu.dot_dimension_numbers<[1], [0], [0], [1], [0, 0, 1, 1], [], []>} : vector<2x512xbf16>, vector<512x256xbf16>, vector<2x256xf32> -> vector<2x256xf32>
    %7 = arith.addf %3, %6 : vector<2x256xf32>
    %c0_6 = arith.constant 0 : index
    %c0_7 = arith.constant 0 : index
    %8 = vector.load %arg12[%c0_6, %c0_7] : memref<2x256xf32, #tpu.memory_space<vmem>>, vector<2x256xf32>
    tpu.vector_store %arg12[%c0_6, %c0_7], %7 {strides = array<i32>} : memref<2x256xf32, #tpu.memory_space<vmem>>, vector<2x256xf32>,
    %c3_i32 = arith.constant 3 : i32
    %9 = arith.cmpi eq, %arg1, %c3_i32 : i32
    %10 = arith.extui %9 : i1 to i32
    %c0_i32_8 = arith.constant 0 : i32
    %11 = arith.cmpi ne, %10, %c0_i32_8 : i32
    scf.if %11 {
      %c0_9 = arith.constant 0 : index
      %c0_10 = arith.constant 0 : index
      %12 = vector.load %arg4[%c0_9, %c0_10] : memref<2x1xf32, #tpu.memory_space<vmem>>, vector<2x1xf32>
      %c0_11 = arith.constant 0 : index
      %c0_12 = arith.constant 0 : index
      %13 = vector.load %arg5[%c0_11, %c0_12] : memref<1x16xf32, #tpu.memory_space<vmem>>, vector<1x16xf32>
      %14 = vector.broadcast %12 : vector<2x1xf32> to vector<2x16xf32>
      %15 = vector.broadcast %13 : vector<1x16xf32> to vector<2x16xf32>
      %16 = arith.mulf %14, %15 : vector<2x16xf32>
      %c0_13 = arith.constant 0 : index
      %c0_14 = arith.constant 0 : index
      %17 = vector.load %arg6[%c0_13, %c0_14] : memref<1x16xf32, #tpu.memory_space<vmem>>, vector<1x16xf32>
      %18 = vector.broadcast %17 : vector<1x16xf32> to vector<2x16xf32>
      %19 = arith.addf %16, %18 : vector<2x16xf32>
      %cst_15 = arith.constant 0.000000e+00 : f32
      %20 = vector.broadcast %cst_15 : f32 to vector<2x16xf32>
      %21 = arith.maximumf %19, %20 : vector<2x16xf32>
      %c0_16 = arith.constant 0 : index
      %c0_17 = arith.constant 0 : index
      %22 = vector.load %arg7[%c0_16, %c0_17] : memref<16x16xf32, #tpu.memory_space<vmem>>, vector<16x16xf32>
      %cst_18 = arith.constant dense<0.000000e+00> : vector<2x16xf32>
      %23 = tpu.matmul %21, %22, %cst_18 {dimension_numbers = #tpu.dot_dimension_numbers<[1], [0], [0], [1], [0, 0, 1, 1], [], []>} : vector<2x16xf32>, vector<16x16xf32>, vector<2x16xf32> -> vector<2x16xf32>
      %c0_19 = arith.constant 0 : index
      %c0_20 = arith.constant 0 : index
      %24 = vector.load %arg8[%c0_19, %c0_20] : memref<1x16xf32, #tpu.memory_space<vmem>>, vector<1x16xf32>
      %25 = vector.broadcast %24 : vector<1x16xf32> to vector<2x16xf32>
      %26 = arith.addf %23, %25 : vector<2x16xf32>
      %cst_21 = arith.constant 0.000000e+00 : f32
      %27 = vector.broadcast %cst_21 : f32 to vector<2x16xf32>
      %28 = arith.maximumf %26, %27 : vector<2x16xf32>
      %c0_22 = arith.constant 0 : index
      %c0_23 = arith.constant 0 : index
      %29 = vector.load %arg12[%c0_22, %c0_23] : memref<2x256xf32, #tpu.memory_space<vmem>>, vector<2x256xf32>
      %c0_24 = arith.constant 0 : index
      %c0_25 = arith.constant 0 : index
      %30 = vector.load %arg9[%c0_24, %c0_25] : memref<16x256xf32, #tpu.memory_space<vmem>>, vector<16x256xf32>
      %cst_26 = arith.constant dense<0.000000e+00> : vector<2x256xf32>
      %31 = tpu.matmul %28, %30, %cst_26 {dimension_numbers = #tpu.dot_dimension_numbers<[1], [0], [0], [1], [0, 0, 1, 1], [], []>} : vector<2x16xf32>, vector<16x256xf32>, vector<2x256xf32> -> vector<2x256xf32>
      %32 = arith.addf %29, %31 : vector<2x256xf32>
      %c0_27 = arith.constant 0 : index
      %c0_28 = arith.constant 0 : index
      %33 = vector.load %arg10[%c0_27, %c0_28] : memref<1x256xf32, #tpu.memory_space<vmem>>, vector<1x256xf32>
      %34 = vector.broadcast %33 : vector<1x256xf32> to vector<2x256xf32>
      %35 = arith.addf %32, %34 : vector<2x256xf32>
      %36 = arith.truncf %35 : vector<2x256xf32> to vector<2x256xbf16>
      %c0_29 = arith.constant 0 : index
      %c0_30 = arith.constant 0 : index
      %37 = vector.load %arg11[%c0_29, %c0_30] : memref<2x256xbf16, #tpu.memory_space<vmem>>, vector<2x256xbf16>
      tpu.vector_store %arg11[%c0_29, %c0_30], %36 {strides = array<i32>} : memref<2x256xbf16, #tpu.memory_space<vmem>>, vector<2x256xbf16>,
    } else {
    }
    return
  }
  func.func @transform_0(%arg0: i32, %arg1: i32) -> (i32, i32) {
    %c0_i32 = arith.constant 0 : i32
    %c0_i32_0 = arith.constant 0 : i32
    return %c0_i32, %arg1 : i32, i32
  }
  func.func @transform_1(%arg0: i32, %arg1: i32) -> (i32, i32) {
    %c0_i32 = arith.constant 0 : i32
    return %arg1, %arg0 : i32, i32
  }
  func.func @transform_2(%arg0: i32, %arg1: i32) -> (i32, i32) {
    %c0_i32 = arith.constant 0 : i32
    %c0_i32_0 = arith.constant 0 : i32
    %c0_i32_1 = arith.constant 0 : i32
    return %c0_i32, %c0_i32_0 : i32, i32
  }
  func.func @transform_3(%arg0: i32, %arg1: i32) -> (i32, i32) {
    %c0_i32 = arith.constant 0 : i32
    %c0_i32_0 = arith.constant 0 : i32
    %c0_i32_1 = arith.constant 0 : i32
    return %c0_i32, %c0_i32_0 : i32, i32
  }
  func.func @transform_4(%arg0: i32, %arg1: i32) -> (i32, i32) {
    %c0_i32 = arith.constant 0 : i32
    %c0_i32_0 = arith.constant 0 : i32
    %c0_i32_1 = arith.constant 0 : i32
    return %c0_i32, %c0_i32_0 : i32, i32
  }
  func.func @transform_5(%arg0: i32, %arg1: i32) -> (i32, i32) {
    %c0_i32 = arith.constant 0 : i32
    %c0_i32_0 = arith.constant 0 : i32
    %c0_i32_1 = arith.constant 0 : i32
    return %c0_i32, %c0_i32_0 : i32, i32
  }
  func.func @transform_6(%arg0: i32, %arg1: i32) -> (i32, i32) {
    %c0_i32 = arith.constant 0 : i32
    %c0_i32_0 = arith.constant 0 : i32
    %c0_i32_1 = arith.constant 0 : i32
    return %c0_i32, %c0_i32_0 : i32, i32
  }
  func.func @transform_7(%arg0: i32, %arg1: i32) -> (i32, i32) {
    %c0_i32 = arith.constant 0 : i32
    %c0_i32_0 = arith.constant 0 : i32
    return %c0_i32, %arg0 : i32, i32
  }
  func.func @transform_8(%arg0: i32, %arg1: i32) -> (i32, i32) {
    %c0_i32 = arith.constant 0 : i32
    %c0_i32_0 = arith.constant 0 : i32
    return %c0_i32, %arg0 : i32, i32
  }
  func.func @transform_9(%arg0: i32, %arg1: i32) -> (i32, i32) {
    %c0_i32 = arith.constant 0 : i32
    %c0_i32_0 = arith.constant 0 : i32
    return %c0_i32, %arg0 : i32, i32
  }
}

module attributes {stable_mosaic.version = 11 : i64} {
  func.func @_conv3x3_kernel(%arg0: i32, %arg1: i32, %arg2: memref<1x1x8x734xbf16, #tpu.memory_space<vmem>>, %arg3: memref<8x216xbf16, #tpu.memory_space<vmem>>, %arg4: memref<8x1xf32, #tpu.memory_space<vmem>>, %arg5: memref<1x8x512xbf16, #tpu.memory_space<vmem>>, %arg6: memref<216x512xbf16, #tpu.memory_space<vmem>>) attributes {dimension_semantics = [#tpu.dimension_semantics<parallel>, #tpu.dimension_semantics<parallel>], iteration_bounds = array<i64: 2, 2>, scalar_prefetch = 0 : i64, scratch_operands = 1 : i64, tpu.core_type = #tpu.core_type<tc>, window_params = [{transform_indices = @transform_0, window_bounds = array<i64: 1, 1, 8, 734>}, {pipeline_mode = #tpu.pipeline_mode<synchronous>, transform_indices = @transform_1, window_bounds = array<i64: 8, 216>}, {pipeline_mode = #tpu.pipeline_mode<synchronous>, transform_indices = @transform_2, window_bounds = array<i64: 8, 1>}, {transform_indices = @transform_3, window_bounds = array<i64: 1, 8, 512>}]} {
    %c0 = arith.constant 0 : index
    %c0_0 = arith.constant 0 : index
    %c0_1 = arith.constant 0 : index
    %c0_2 = arith.constant 0 : index
    %0 = vector.load %arg2[%c0, %c0_0, %c0_1, %c0_2] : memref<1x1x8x734xbf16, #tpu.memory_space<vmem>>, vector<1x1x8x734xbf16>
    %1 = vector.shape_cast %0 : vector<1x1x8x734xbf16> to vector<8x734xbf16>
    %2 = vector.extract_strided_slice %1 {offsets = [0, 0], sizes = [8, 512], strides = [1, 1]} : vector<8x734xbf16> to vector<8x512xbf16>
    %c0_3 = arith.constant 0 : index
    %c0_4 = arith.constant 0 : index
    %3 = vector.load %arg6[%c0_3, %c0_4] : memref<216x512xbf16, #tpu.memory_space<vmem>>, vector<8x512xbf16>
    tpu.vector_store %arg6[%c0_3, %c0_4], %2 {strides = array<i32>} : memref<216x512xbf16, #tpu.memory_space<vmem>>, vector<8x512xbf16>,
    %4 = vector.extract_strided_slice %1 {offsets = [0, 1], sizes = [8, 512], strides = [1, 1]} : vector<8x734xbf16> to vector<8x512xbf16>
    %c8 = arith.constant 8 : index
    %c0_5 = arith.constant 0 : index
    %5 = vector.load %arg6[%c8, %c0_5] : memref<216x512xbf16, #tpu.memory_space<vmem>>, vector<8x512xbf16>
    tpu.vector_store %arg6[%c8, %c0_5], %4 {strides = array<i32>} : memref<216x512xbf16, #tpu.memory_space<vmem>>, vector<8x512xbf16>,
    %6 = vector.extract_strided_slice %1 {offsets = [0, 2], sizes = [8, 512], strides = [1, 1]} : vector<8x734xbf16> to vector<8x512xbf16>
    %c16 = arith.constant 16 : index
    %c0_6 = arith.constant 0 : index
    %7 = vector.load %arg6[%c16, %c0_6] : memref<216x512xbf16, #tpu.memory_space<vmem>>, vector<8x512xbf16>
    tpu.vector_store %arg6[%c16, %c0_6], %6 {strides = array<i32>} : memref<216x512xbf16, #tpu.memory_space<vmem>>, vector<8x512xbf16>,
    %8 = vector.extract_strided_slice %1 {offsets = [0, 10], sizes = [8, 512], strides = [1, 1]} : vector<8x734xbf16> to vector<8x512xbf16>
    %c24 = arith.constant 24 : index
    %c0_7 = arith.constant 0 : index
    %9 = vector.load %arg6[%c24, %c0_7] : memref<216x512xbf16, #tpu.memory_space<vmem>>, vector<8x512xbf16>
    tpu.vector_store %arg6[%c24, %c0_7], %8 {strides = array<i32>} : memref<216x512xbf16, #tpu.memory_space<vmem>>, vector<8x512xbf16>,
    %10 = vector.extract_strided_slice %1 {offsets = [0, 11], sizes = [8, 512], strides = [1, 1]} : vector<8x734xbf16> to vector<8x512xbf16>
    %c32 = arith.constant 32 : index
    %c0_8 = arith.constant 0 : index
    %11 = vector.load %arg6[%c32, %c0_8] : memref<216x512xbf16, #tpu.memory_space<vmem>>, vector<8x512xbf16>
    tpu.vector_store %arg6[%c32, %c0_8], %10 {strides = array<i32>} : memref<216x512xbf16, #tpu.memory_space<vmem>>, vector<8x512xbf16>,
    %12 = vector.extract_strided_slice %1 {offsets = [0, 12], sizes = [8, 512], strides = [1, 1]} : vector<8x734xbf16> to vector<8x512xbf16>
    %c40 = arith.constant 40 : index
    %c0_9 = arith.constant 0 : index
    %13 = vector.load %arg6[%c40, %c0_9] : memref<216x512xbf16, #tpu.memory_space<vmem>>, vector<8x512xbf16>
    tpu.vector_store %arg6[%c40, %c0_9], %12 {strides = array<i32>} : memref<216x512xbf16, #tpu.memory_space<vmem>>, vector<8x512xbf16>,
    %14 = vector.extract_strided_slice %1 {offsets = [0, 20], sizes = [8, 512], strides = [1, 1]} : vector<8x734xbf16> to vector<8x512xbf16>
    %c48 = arith.constant 48 : index
    %c0_10 = arith.constant 0 : index
    %15 = vector.load %arg6[%c48, %c0_10] : memref<216x512xbf16, #tpu.memory_space<vmem>>, vector<8x512xbf16>
    tpu.vector_store %arg6[%c48, %c0_10], %14 {strides = array<i32>} : memref<216x512xbf16, #tpu.memory_space<vmem>>, vector<8x512xbf16>,
    %16 = vector.extract_strided_slice %1 {offsets = [0, 21], sizes = [8, 512], strides = [1, 1]} : vector<8x734xbf16> to vector<8x512xbf16>
    %c56 = arith.constant 56 : index
    %c0_11 = arith.constant 0 : index
    %17 = vector.load %arg6[%c56, %c0_11] : memref<216x512xbf16, #tpu.memory_space<vmem>>, vector<8x512xbf16>
    tpu.vector_store %arg6[%c56, %c0_11], %16 {strides = array<i32>} : memref<216x512xbf16, #tpu.memory_space<vmem>>, vector<8x512xbf16>,
    %18 = vector.extract_strided_slice %1 {offsets = [0, 22], sizes = [8, 512], strides = [1, 1]} : vector<8x734xbf16> to vector<8x512xbf16>
    %c64 = arith.constant 64 : index
    %c0_12 = arith.constant 0 : index
    %19 = vector.load %arg6[%c64, %c0_12] : memref<216x512xbf16, #tpu.memory_space<vmem>>, vector<8x512xbf16>
    tpu.vector_store %arg6[%c64, %c0_12], %18 {strides = array<i32>} : memref<216x512xbf16, #tpu.memory_space<vmem>>, vector<8x512xbf16>,
    %20 = vector.extract_strided_slice %1 {offsets = [0, 100], sizes = [8, 512], strides = [1, 1]} : vector<8x734xbf16> to vector<8x512xbf16>
    %c72 = arith.constant 72 : index
    %c0_13 = arith.constant 0 : index
    %21 = vector.load %arg6[%c72, %c0_13] : memref<216x512xbf16, #tpu.memory_space<vmem>>, vector<8x512xbf16>
    tpu.vector_store %arg6[%c72, %c0_13], %20 {strides = array<i32>} : memref<216x512xbf16, #tpu.memory_space<vmem>>, vector<8x512xbf16>,
    %22 = vector.extract_strided_slice %1 {offsets = [0, 101], sizes = [8, 512], strides = [1, 1]} : vector<8x734xbf16> to vector<8x512xbf16>
    %c80 = arith.constant 80 : index
    %c0_14 = arith.constant 0 : index
    %23 = vector.load %arg6[%c80, %c0_14] : memref<216x512xbf16, #tpu.memory_space<vmem>>, vector<8x512xbf16>
    tpu.vector_store %arg6[%c80, %c0_14], %22 {strides = array<i32>} : memref<216x512xbf16, #tpu.memory_space<vmem>>, vector<8x512xbf16>,
    %24 = vector.extract_strided_slice %1 {offsets = [0, 102], sizes = [8, 512], strides = [1, 1]} : vector<8x734xbf16> to vector<8x512xbf16>
    %c88 = arith.constant 88 : index
    %c0_15 = arith.constant 0 : index
    %25 = vector.load %arg6[%c88, %c0_15] : memref<216x512xbf16, #tpu.memory_space<vmem>>, vector<8x512xbf16>
    tpu.vector_store %arg6[%c88, %c0_15], %24 {strides = array<i32>} : memref<216x512xbf16, #tpu.memory_space<vmem>>, vector<8x512xbf16>,
    %26 = vector.extract_strided_slice %1 {offsets = [0, 110], sizes = [8, 512], strides = [1, 1]} : vector<8x734xbf16> to vector<8x512xbf16>
    %c96 = arith.constant 96 : index
    %c0_16 = arith.constant 0 : index
    %27 = vector.load %arg6[%c96, %c0_16] : memref<216x512xbf16, #tpu.memory_space<vmem>>, vector<8x512xbf16>
    tpu.vector_store %arg6[%c96, %c0_16], %26 {strides = array<i32>} : memref<216x512xbf16, #tpu.memory_space<vmem>>, vector<8x512xbf16>,
    %28 = vector.extract_strided_slice %1 {offsets = [0, 111], sizes = [8, 512], strides = [1, 1]} : vector<8x734xbf16> to vector<8x512xbf16>
    %c104 = arith.constant 104 : index
    %c0_17 = arith.constant 0 : index
    %29 = vector.load %arg6[%c104, %c0_17] : memref<216x512xbf16, #tpu.memory_space<vmem>>, vector<8x512xbf16>
    tpu.vector_store %arg6[%c104, %c0_17], %28 {strides = array<i32>} : memref<216x512xbf16, #tpu.memory_space<vmem>>, vector<8x512xbf16>,
    %30 = vector.extract_strided_slice %1 {offsets = [0, 112], sizes = [8, 512], strides = [1, 1]} : vector<8x734xbf16> to vector<8x512xbf16>
    %c112 = arith.constant 112 : index
    %c0_18 = arith.constant 0 : index
    %31 = vector.load %arg6[%c112, %c0_18] : memref<216x512xbf16, #tpu.memory_space<vmem>>, vector<8x512xbf16>
    tpu.vector_store %arg6[%c112, %c0_18], %30 {strides = array<i32>} : memref<216x512xbf16, #tpu.memory_space<vmem>>, vector<8x512xbf16>,
    %32 = vector.extract_strided_slice %1 {offsets = [0, 120], sizes = [8, 512], strides = [1, 1]} : vector<8x734xbf16> to vector<8x512xbf16>
    %c120 = arith.constant 120 : index
    %c0_19 = arith.constant 0 : index
    %33 = vector.load %arg6[%c120, %c0_19] : memref<216x512xbf16, #tpu.memory_space<vmem>>, vector<8x512xbf16>
    tpu.vector_store %arg6[%c120, %c0_19], %32 {strides = array<i32>} : memref<216x512xbf16, #tpu.memory_space<vmem>>, vector<8x512xbf16>,
    %34 = vector.extract_strided_slice %1 {offsets = [0, 121], sizes = [8, 512], strides = [1, 1]} : vector<8x734xbf16> to vector<8x512xbf16>
    %c128 = arith.constant 128 : index
    %c0_20 = arith.constant 0 : index
    %35 = vector.load %arg6[%c128, %c0_20] : memref<216x512xbf16, #tpu.memory_space<vmem>>, vector<8x512xbf16>
    tpu.vector_store %arg6[%c128, %c0_20], %34 {strides = array<i32>} : memref<216x512xbf16, #tpu.memory_space<vmem>>, vector<8x512xbf16>,
    %36 = vector.extract_strided_slice %1 {offsets = [0, 122], sizes = [8, 512], strides = [1, 1]} : vector<8x734xbf16> to vector<8x512xbf16>
    %c136 = arith.constant 136 : index
    %c0_21 = arith.constant 0 : index
    %37 = vector.load %arg6[%c136, %c0_21] : memref<216x512xbf16, #tpu.memory_space<vmem>>, vector<8x512xbf16>
    tpu.vector_store %arg6[%c136, %c0_21], %36 {strides = array<i32>} : memref<216x512xbf16, #tpu.memory_space<vmem>>, vector<8x512xbf16>,
    %38 = vector.extract_strided_slice %1 {offsets = [0, 200], sizes = [8, 512], strides = [1, 1]} : vector<8x734xbf16> to vector<8x512xbf16>
    %c144 = arith.constant 144 : index
    %c0_22 = arith.constant 0 : index
    %39 = vector.load %arg6[%c144, %c0_22] : memref<216x512xbf16, #tpu.memory_space<vmem>>, vector<8x512xbf16>
    tpu.vector_store %arg6[%c144, %c0_22], %38 {strides = array<i32>} : memref<216x512xbf16, #tpu.memory_space<vmem>>, vector<8x512xbf16>,
    %40 = vector.extract_strided_slice %1 {offsets = [0, 201], sizes = [8, 512], strides = [1, 1]} : vector<8x734xbf16> to vector<8x512xbf16>
    %c152 = arith.constant 152 : index
    %c0_23 = arith.constant 0 : index
    %41 = vector.load %arg6[%c152, %c0_23] : memref<216x512xbf16, #tpu.memory_space<vmem>>, vector<8x512xbf16>
    tpu.vector_store %arg6[%c152, %c0_23], %40 {strides = array<i32>} : memref<216x512xbf16, #tpu.memory_space<vmem>>, vector<8x512xbf16>,
    %42 = vector.extract_strided_slice %1 {offsets = [0, 202], sizes = [8, 512], strides = [1, 1]} : vector<8x734xbf16> to vector<8x512xbf16>
    %c160 = arith.constant 160 : index
    %c0_24 = arith.constant 0 : index
    %43 = vector.load %arg6[%c160, %c0_24] : memref<216x512xbf16, #tpu.memory_space<vmem>>, vector<8x512xbf16>
    tpu.vector_store %arg6[%c160, %c0_24], %42 {strides = array<i32>} : memref<216x512xbf16, #tpu.memory_space<vmem>>, vector<8x512xbf16>,
    %44 = vector.extract_strided_slice %1 {offsets = [0, 210], sizes = [8, 512], strides = [1, 1]} : vector<8x734xbf16> to vector<8x512xbf16>
    %c168 = arith.constant 168 : index
    %c0_25 = arith.constant 0 : index
    %45 = vector.load %arg6[%c168, %c0_25] : memref<216x512xbf16, #tpu.memory_space<vmem>>, vector<8x512xbf16>
    tpu.vector_store %arg6[%c168, %c0_25], %44 {strides = array<i32>} : memref<216x512xbf16, #tpu.memory_space<vmem>>, vector<8x512xbf16>,
    %46 = vector.extract_strided_slice %1 {offsets = [0, 211], sizes = [8, 512], strides = [1, 1]} : vector<8x734xbf16> to vector<8x512xbf16>
    %c176 = arith.constant 176 : index
    %c0_26 = arith.constant 0 : index
    %47 = vector.load %arg6[%c176, %c0_26] : memref<216x512xbf16, #tpu.memory_space<vmem>>, vector<8x512xbf16>
    tpu.vector_store %arg6[%c176, %c0_26], %46 {strides = array<i32>} : memref<216x512xbf16, #tpu.memory_space<vmem>>, vector<8x512xbf16>,
    %48 = vector.extract_strided_slice %1 {offsets = [0, 212], sizes = [8, 512], strides = [1, 1]} : vector<8x734xbf16> to vector<8x512xbf16>
    %c184 = arith.constant 184 : index
    %c0_27 = arith.constant 0 : index
    %49 = vector.load %arg6[%c184, %c0_27] : memref<216x512xbf16, #tpu.memory_space<vmem>>, vector<8x512xbf16>
    tpu.vector_store %arg6[%c184, %c0_27], %48 {strides = array<i32>} : memref<216x512xbf16, #tpu.memory_space<vmem>>, vector<8x512xbf16>,
    %50 = vector.extract_strided_slice %1 {offsets = [0, 220], sizes = [8, 512], strides = [1, 1]} : vector<8x734xbf16> to vector<8x512xbf16>
    %c192 = arith.constant 192 : index
    %c0_28 = arith.constant 0 : index
    %51 = vector.load %arg6[%c192, %c0_28] : memref<216x512xbf16, #tpu.memory_space<vmem>>, vector<8x512xbf16>
    tpu.vector_store %arg6[%c192, %c0_28], %50 {strides = array<i32>} : memref<216x512xbf16, #tpu.memory_space<vmem>>, vector<8x512xbf16>,
    %52 = vector.extract_strided_slice %1 {offsets = [0, 221], sizes = [8, 512], strides = [1, 1]} : vector<8x734xbf16> to vector<8x512xbf16>
    %c200 = arith.constant 200 : index
    %c0_29 = arith.constant 0 : index
    %53 = vector.load %arg6[%c200, %c0_29] : memref<216x512xbf16, #tpu.memory_space<vmem>>, vector<8x512xbf16>
    tpu.vector_store %arg6[%c200, %c0_29], %52 {strides = array<i32>} : memref<216x512xbf16, #tpu.memory_space<vmem>>, vector<8x512xbf16>,
    %54 = vector.extract_strided_slice %1 {offsets = [0, 222], sizes = [8, 512], strides = [1, 1]} : vector<8x734xbf16> to vector<8x512xbf16>
    %c208 = arith.constant 208 : index
    %c0_30 = arith.constant 0 : index
    %55 = vector.load %arg6[%c208, %c0_30] : memref<216x512xbf16, #tpu.memory_space<vmem>>, vector<8x512xbf16>
    tpu.vector_store %arg6[%c208, %c0_30], %54 {strides = array<i32>} : memref<216x512xbf16, #tpu.memory_space<vmem>>, vector<8x512xbf16>,
    %c0_31 = arith.constant 0 : index
    %c0_32 = arith.constant 0 : index
    %56 = vector.load %arg3[%c0_31, %c0_32] : memref<8x216xbf16, #tpu.memory_space<vmem>>, vector<8x216xbf16>
    %c0_33 = arith.constant 0 : index
    %c0_34 = arith.constant 0 : index
    %57 = vector.load %arg6[%c0_33, %c0_34] : memref<216x512xbf16, #tpu.memory_space<vmem>>, vector<216x512xbf16>
    %cst = arith.constant dense<0.000000e+00> : vector<8x512xf32>
    %58 = tpu.matmul %56, %57, %cst {dimension_numbers = #tpu.dot_dimension_numbers<[1], [0], [0], [1], [0, 0, 1, 1], [], []>} : vector<8x216xbf16>, vector<216x512xbf16>, vector<8x512xf32> -> vector<8x512xf32>
    %c0_35 = arith.constant 0 : index
    %c0_36 = arith.constant 0 : index
    %59 = vector.load %arg4[%c0_35, %c0_36] : memref<8x1xf32, #tpu.memory_space<vmem>>, vector<8x1xf32>
    %60 = vector.broadcast %59 : vector<8x1xf32> to vector<8x512xf32>
    %61 = arith.addf %58, %60 : vector<8x512xf32>
    %cst_37 = arith.constant 0.000000e+00 : f32
    %62 = vector.broadcast %cst_37 : f32 to vector<8x512xf32>
    %63 = arith.maximumf %61, %62 : vector<8x512xf32>
    %64 = arith.truncf %63 : vector<8x512xf32> to vector<8x512xbf16>
    %c0_38 = arith.constant 0 : index
    %c0_39 = arith.constant 0 : index
    %c0_40 = arith.constant 0 : index
    %65 = vector.load %arg5[%c0_38, %c0_39, %c0_40] : memref<1x8x512xbf16, #tpu.memory_space<vmem>>, vector<1x8x512xbf16>
    %66 = vector.shape_cast %65 : vector<1x8x512xbf16> to vector<8x512xbf16>
    %67 = vector.shape_cast %64 : vector<8x512xbf16> to vector<1x8x512xbf16>
    tpu.vector_store %arg5[%c0_38, %c0_39, %c0_40], %67 {strides = array<i32>} : memref<1x8x512xbf16, #tpu.memory_space<vmem>>, vector<1x8x512xbf16>,
    return
  }
  func.func @transform_0(%arg0: i32, %arg1: i32) -> (i32, i32, i32, i32) {
    %c0_i32 = arith.constant 0 : i32
    %c0_i32_0 = arith.constant 0 : i32
    %c0_i32_1 = arith.constant 0 : i32
    return %arg0, %arg1, %c0_i32, %c0_i32_0 : i32, i32, i32, i32
  }
  func.func @transform_1(%arg0: i32, %arg1: i32) -> (i32, i32) {
    %c0_i32 = arith.constant 0 : i32
    %c0_i32_0 = arith.constant 0 : i32
    %c0_i32_1 = arith.constant 0 : i32
    return %c0_i32, %c0_i32_0 : i32, i32
  }
  func.func @transform_2(%arg0: i32, %arg1: i32) -> (i32, i32) {
    %c0_i32 = arith.constant 0 : i32
    %c0_i32_0 = arith.constant 0 : i32
    %c0_i32_1 = arith.constant 0 : i32
    return %c0_i32, %c0_i32_0 : i32, i32
  }
  func.func @transform_3(%arg0: i32, %arg1: i32) -> (i32, i32, i32) {
    %c0_i32 = arith.constant 0 : i32
    %c0_i32_0 = arith.constant 0 : i32
    return %arg0, %c0_i32, %arg1 : i32, i32, i32
  }
}

module attributes {stable_mosaic.version = 11 : i64} {
  func.func @_conv3x3_kernel(%arg0: i32, %arg1: i32, %arg2: memref<1x1x8x1198xbf16, #tpu.memory_space<vmem>>, %arg3: memref<8x216xbf16, #tpu.memory_space<vmem>>, %arg4: memref<8x1xf32, #tpu.memory_space<vmem>>, %arg5: memref<1x8x512xbf16, #tpu.memory_space<vmem>>, %arg6: memref<216x512xbf16, #tpu.memory_space<vmem>>) attributes {dimension_semantics = [#tpu.dimension_semantics<parallel>, #tpu.dimension_semantics<parallel>], iteration_bounds = array<i64: 2, 12>, scalar_prefetch = 0 : i64, scratch_operands = 1 : i64, tpu.core_type = #tpu.core_type<tc>, window_params = [{transform_indices = @transform_0, window_bounds = array<i64: 1, 1, 8, 1198>}, {pipeline_mode = #tpu.pipeline_mode<synchronous>, transform_indices = @transform_1, window_bounds = array<i64: 8, 216>}, {pipeline_mode = #tpu.pipeline_mode<synchronous>, transform_indices = @transform_2, window_bounds = array<i64: 8, 1>}, {transform_indices = @transform_3, window_bounds = array<i64: 1, 8, 512>}]} {
    %c0 = arith.constant 0 : index
    %c0_0 = arith.constant 0 : index
    %c0_1 = arith.constant 0 : index
    %c0_2 = arith.constant 0 : index
    %0 = vector.load %arg2[%c0, %c0_0, %c0_1, %c0_2] : memref<1x1x8x1198xbf16, #tpu.memory_space<vmem>>, vector<1x1x8x1198xbf16>
    %1 = vector.shape_cast %0 : vector<1x1x8x1198xbf16> to vector<8x1198xbf16>
    %2 = vector.extract_strided_slice %1 {offsets = [0, 0], sizes = [8, 512], strides = [1, 1]} : vector<8x1198xbf16> to vector<8x512xbf16>
    %c0_3 = arith.constant 0 : index
    %c0_4 = arith.constant 0 : index
    %3 = vector.load %arg6[%c0_3, %c0_4] : memref<216x512xbf16, #tpu.memory_space<vmem>>, vector<8x512xbf16>
    tpu.vector_store %arg6[%c0_3, %c0_4], %2 {strides = array<i32>} : memref<216x512xbf16, #tpu.memory_space<vmem>>, vector<8x512xbf16>,
    %4 = vector.extract_strided_slice %1 {offsets = [0, 1], sizes = [8, 512], strides = [1, 1]} : vector<8x1198xbf16> to vector<8x512xbf16>
    %c8 = arith.constant 8 : index
    %c0_5 = arith.constant 0 : index
    %5 = vector.load %arg6[%c8, %c0_5] : memref<216x512xbf16, #tpu.memory_space<vmem>>, vector<8x512xbf16>
    tpu.vector_store %arg6[%c8, %c0_5], %4 {strides = array<i32>} : memref<216x512xbf16, #tpu.memory_space<vmem>>, vector<8x512xbf16>,
    %6 = vector.extract_strided_slice %1 {offsets = [0, 2], sizes = [8, 512], strides = [1, 1]} : vector<8x1198xbf16> to vector<8x512xbf16>
    %c16 = arith.constant 16 : index
    %c0_6 = arith.constant 0 : index
    %7 = vector.load %arg6[%c16, %c0_6] : memref<216x512xbf16, #tpu.memory_space<vmem>>, vector<8x512xbf16>
    tpu.vector_store %arg6[%c16, %c0_6], %6 {strides = array<i32>} : memref<216x512xbf16, #tpu.memory_space<vmem>>, vector<8x512xbf16>,
    %8 = vector.extract_strided_slice %1 {offsets = [0, 18], sizes = [8, 512], strides = [1, 1]} : vector<8x1198xbf16> to vector<8x512xbf16>
    %c24 = arith.constant 24 : index
    %c0_7 = arith.constant 0 : index
    %9 = vector.load %arg6[%c24, %c0_7] : memref<216x512xbf16, #tpu.memory_space<vmem>>, vector<8x512xbf16>
    tpu.vector_store %arg6[%c24, %c0_7], %8 {strides = array<i32>} : memref<216x512xbf16, #tpu.memory_space<vmem>>, vector<8x512xbf16>,
    %10 = vector.extract_strided_slice %1 {offsets = [0, 19], sizes = [8, 512], strides = [1, 1]} : vector<8x1198xbf16> to vector<8x512xbf16>
    %c32 = arith.constant 32 : index
    %c0_8 = arith.constant 0 : index
    %11 = vector.load %arg6[%c32, %c0_8] : memref<216x512xbf16, #tpu.memory_space<vmem>>, vector<8x512xbf16>
    tpu.vector_store %arg6[%c32, %c0_8], %10 {strides = array<i32>} : memref<216x512xbf16, #tpu.memory_space<vmem>>, vector<8x512xbf16>,
    %12 = vector.extract_strided_slice %1 {offsets = [0, 20], sizes = [8, 512], strides = [1, 1]} : vector<8x1198xbf16> to vector<8x512xbf16>
    %c40 = arith.constant 40 : index
    %c0_9 = arith.constant 0 : index
    %13 = vector.load %arg6[%c40, %c0_9] : memref<216x512xbf16, #tpu.memory_space<vmem>>, vector<8x512xbf16>
    tpu.vector_store %arg6[%c40, %c0_9], %12 {strides = array<i32>} : memref<216x512xbf16, #tpu.memory_space<vmem>>, vector<8x512xbf16>,
    %14 = vector.extract_strided_slice %1 {offsets = [0, 36], sizes = [8, 512], strides = [1, 1]} : vector<8x1198xbf16> to vector<8x512xbf16>
    %c48 = arith.constant 48 : index
    %c0_10 = arith.constant 0 : index
    %15 = vector.load %arg6[%c48, %c0_10] : memref<216x512xbf16, #tpu.memory_space<vmem>>, vector<8x512xbf16>
    tpu.vector_store %arg6[%c48, %c0_10], %14 {strides = array<i32>} : memref<216x512xbf16, #tpu.memory_space<vmem>>, vector<8x512xbf16>,
    %16 = vector.extract_strided_slice %1 {offsets = [0, 37], sizes = [8, 512], strides = [1, 1]} : vector<8x1198xbf16> to vector<8x512xbf16>
    %c56 = arith.constant 56 : index
    %c0_11 = arith.constant 0 : index
    %17 = vector.load %arg6[%c56, %c0_11] : memref<216x512xbf16, #tpu.memory_space<vmem>>, vector<8x512xbf16>
    tpu.vector_store %arg6[%c56, %c0_11], %16 {strides = array<i32>} : memref<216x512xbf16, #tpu.memory_space<vmem>>, vector<8x512xbf16>,
    %18 = vector.extract_strided_slice %1 {offsets = [0, 38], sizes = [8, 512], strides = [1, 1]} : vector<8x1198xbf16> to vector<8x512xbf16>
    %c64 = arith.constant 64 : index
    %c0_12 = arith.constant 0 : index
    %19 = vector.load %arg6[%c64, %c0_12] : memref<216x512xbf16, #tpu.memory_space<vmem>>, vector<8x512xbf16>
    tpu.vector_store %arg6[%c64, %c0_12], %18 {strides = array<i32>} : memref<216x512xbf16, #tpu.memory_space<vmem>>, vector<8x512xbf16>,
    %20 = vector.extract_strided_slice %1 {offsets = [0, 324], sizes = [8, 512], strides = [1, 1]} : vector<8x1198xbf16> to vector<8x512xbf16>
    %c72 = arith.constant 72 : index
    %c0_13 = arith.constant 0 : index
    %21 = vector.load %arg6[%c72, %c0_13] : memref<216x512xbf16, #tpu.memory_space<vmem>>, vector<8x512xbf16>
    tpu.vector_store %arg6[%c72, %c0_13], %20 {strides = array<i32>} : memref<216x512xbf16, #tpu.memory_space<vmem>>, vector<8x512xbf16>,
    %22 = vector.extract_strided_slice %1 {offsets = [0, 325], sizes = [8, 512], strides = [1, 1]} : vector<8x1198xbf16> to vector<8x512xbf16>
    %c80 = arith.constant 80 : index
    %c0_14 = arith.constant 0 : index
    %23 = vector.load %arg6[%c80, %c0_14] : memref<216x512xbf16, #tpu.memory_space<vmem>>, vector<8x512xbf16>
    tpu.vector_store %arg6[%c80, %c0_14], %22 {strides = array<i32>} : memref<216x512xbf16, #tpu.memory_space<vmem>>, vector<8x512xbf16>,
    %24 = vector.extract_strided_slice %1 {offsets = [0, 326], sizes = [8, 512], strides = [1, 1]} : vector<8x1198xbf16> to vector<8x512xbf16>
    %c88 = arith.constant 88 : index
    %c0_15 = arith.constant 0 : index
    %25 = vector.load %arg6[%c88, %c0_15] : memref<216x512xbf16, #tpu.memory_space<vmem>>, vector<8x512xbf16>
    tpu.vector_store %arg6[%c88, %c0_15], %24 {strides = array<i32>} : memref<216x512xbf16, #tpu.memory_space<vmem>>, vector<8x512xbf16>,
    %26 = vector.extract_strided_slice %1 {offsets = [0, 342], sizes = [8, 512], strides = [1, 1]} : vector<8x1198xbf16> to vector<8x512xbf16>
    %c96 = arith.constant 96 : index
    %c0_16 = arith.constant 0 : index
    %27 = vector.load %arg6[%c96, %c0_16] : memref<216x512xbf16, #tpu.memory_space<vmem>>, vector<8x512xbf16>
    tpu.vector_store %arg6[%c96, %c0_16], %26 {strides = array<i32>} : memref<216x512xbf16, #tpu.memory_space<vmem>>, vector<8x512xbf16>,
    %28 = vector.extract_strided_slice %1 {offsets = [0, 343], sizes = [8, 512], strides = [1, 1]} : vector<8x1198xbf16> to vector<8x512xbf16>
    %c104 = arith.constant 104 : index
    %c0_17 = arith.constant 0 : index
    %29 = vector.load %arg6[%c104, %c0_17] : memref<216x512xbf16, #tpu.memory_space<vmem>>, vector<8x512xbf16>
    tpu.vector_store %arg6[%c104, %c0_17], %28 {strides = array<i32>} : memref<216x512xbf16, #tpu.memory_space<vmem>>, vector<8x512xbf16>,
    %30 = vector.extract_strided_slice %1 {offsets = [0, 344], sizes = [8, 512], strides = [1, 1]} : vector<8x1198xbf16> to vector<8x512xbf16>
    %c112 = arith.constant 112 : index
    %c0_18 = arith.constant 0 : index
    %31 = vector.load %arg6[%c112, %c0_18] : memref<216x512xbf16, #tpu.memory_space<vmem>>, vector<8x512xbf16>
    tpu.vector_store %arg6[%c112, %c0_18], %30 {strides = array<i32>} : memref<216x512xbf16, #tpu.memory_space<vmem>>, vector<8x512xbf16>,
    %32 = vector.extract_strided_slice %1 {offsets = [0, 360], sizes = [8, 512], strides = [1, 1]} : vector<8x1198xbf16> to vector<8x512xbf16>
    %c120 = arith.constant 120 : index
    %c0_19 = arith.constant 0 : index
    %33 = vector.load %arg6[%c120, %c0_19] : memref<216x512xbf16, #tpu.memory_space<vmem>>, vector<8x512xbf16>
    tpu.vector_store %arg6[%c120, %c0_19], %32 {strides = array<i32>} : memref<216x512xbf16, #tpu.memory_space<vmem>>, vector<8x512xbf16>,
    %34 = vector.extract_strided_slice %1 {offsets = [0, 361], sizes = [8, 512], strides = [1, 1]} : vector<8x1198xbf16> to vector<8x512xbf16>
    %c128 = arith.constant 128 : index
    %c0_20 = arith.constant 0 : index
    %35 = vector.load %arg6[%c128, %c0_20] : memref<216x512xbf16, #tpu.memory_space<vmem>>, vector<8x512xbf16>
    tpu.vector_store %arg6[%c128, %c0_20], %34 {strides = array<i32>} : memref<216x512xbf16, #tpu.memory_space<vmem>>, vector<8x512xbf16>,
    %36 = vector.extract_strided_slice %1 {offsets = [0, 362], sizes = [8, 512], strides = [1, 1]} : vector<8x1198xbf16> to vector<8x512xbf16>
    %c136 = arith.constant 136 : index
    %c0_21 = arith.constant 0 : index
    %37 = vector.load %arg6[%c136, %c0_21] : memref<216x512xbf16, #tpu.memory_space<vmem>>, vector<8x512xbf16>
    tpu.vector_store %arg6[%c136, %c0_21], %36 {strides = array<i32>} : memref<216x512xbf16, #tpu.memory_space<vmem>>, vector<8x512xbf16>,
    %38 = vector.extract_strided_slice %1 {offsets = [0, 648], sizes = [8, 512], strides = [1, 1]} : vector<8x1198xbf16> to vector<8x512xbf16>
    %c144 = arith.constant 144 : index
    %c0_22 = arith.constant 0 : index
    %39 = vector.load %arg6[%c144, %c0_22] : memref<216x512xbf16, #tpu.memory_space<vmem>>, vector<8x512xbf16>
    tpu.vector_store %arg6[%c144, %c0_22], %38 {strides = array<i32>} : memref<216x512xbf16, #tpu.memory_space<vmem>>, vector<8x512xbf16>,
    %40 = vector.extract_strided_slice %1 {offsets = [0, 649], sizes = [8, 512], strides = [1, 1]} : vector<8x1198xbf16> to vector<8x512xbf16>
    %c152 = arith.constant 152 : index
    %c0_23 = arith.constant 0 : index
    %41 = vector.load %arg6[%c152, %c0_23] : memref<216x512xbf16, #tpu.memory_space<vmem>>, vector<8x512xbf16>
    tpu.vector_store %arg6[%c152, %c0_23], %40 {strides = array<i32>} : memref<216x512xbf16, #tpu.memory_space<vmem>>, vector<8x512xbf16>,
    %42 = vector.extract_strided_slice %1 {offsets = [0, 650], sizes = [8, 512], strides = [1, 1]} : vector<8x1198xbf16> to vector<8x512xbf16>
    %c160 = arith.constant 160 : index
    %c0_24 = arith.constant 0 : index
    %43 = vector.load %arg6[%c160, %c0_24] : memref<216x512xbf16, #tpu.memory_space<vmem>>, vector<8x512xbf16>
    tpu.vector_store %arg6[%c160, %c0_24], %42 {strides = array<i32>} : memref<216x512xbf16, #tpu.memory_space<vmem>>, vector<8x512xbf16>,
    %44 = vector.extract_strided_slice %1 {offsets = [0, 666], sizes = [8, 512], strides = [1, 1]} : vector<8x1198xbf16> to vector<8x512xbf16>
    %c168 = arith.constant 168 : index
    %c0_25 = arith.constant 0 : index
    %45 = vector.load %arg6[%c168, %c0_25] : memref<216x512xbf16, #tpu.memory_space<vmem>>, vector<8x512xbf16>
    tpu.vector_store %arg6[%c168, %c0_25], %44 {strides = array<i32>} : memref<216x512xbf16, #tpu.memory_space<vmem>>, vector<8x512xbf16>,
    %46 = vector.extract_strided_slice %1 {offsets = [0, 667], sizes = [8, 512], strides = [1, 1]} : vector<8x1198xbf16> to vector<8x512xbf16>
    %c176 = arith.constant 176 : index
    %c0_26 = arith.constant 0 : index
    %47 = vector.load %arg6[%c176, %c0_26] : memref<216x512xbf16, #tpu.memory_space<vmem>>, vector<8x512xbf16>
    tpu.vector_store %arg6[%c176, %c0_26], %46 {strides = array<i32>} : memref<216x512xbf16, #tpu.memory_space<vmem>>, vector<8x512xbf16>,
    %48 = vector.extract_strided_slice %1 {offsets = [0, 668], sizes = [8, 512], strides = [1, 1]} : vector<8x1198xbf16> to vector<8x512xbf16>
    %c184 = arith.constant 184 : index
    %c0_27 = arith.constant 0 : index
    %49 = vector.load %arg6[%c184, %c0_27] : memref<216x512xbf16, #tpu.memory_space<vmem>>, vector<8x512xbf16>
    tpu.vector_store %arg6[%c184, %c0_27], %48 {strides = array<i32>} : memref<216x512xbf16, #tpu.memory_space<vmem>>, vector<8x512xbf16>,
    %50 = vector.extract_strided_slice %1 {offsets = [0, 684], sizes = [8, 512], strides = [1, 1]} : vector<8x1198xbf16> to vector<8x512xbf16>
    %c192 = arith.constant 192 : index
    %c0_28 = arith.constant 0 : index
    %51 = vector.load %arg6[%c192, %c0_28] : memref<216x512xbf16, #tpu.memory_space<vmem>>, vector<8x512xbf16>
    tpu.vector_store %arg6[%c192, %c0_28], %50 {strides = array<i32>} : memref<216x512xbf16, #tpu.memory_space<vmem>>, vector<8x512xbf16>,
    %52 = vector.extract_strided_slice %1 {offsets = [0, 685], sizes = [8, 512], strides = [1, 1]} : vector<8x1198xbf16> to vector<8x512xbf16>
    %c200 = arith.constant 200 : index
    %c0_29 = arith.constant 0 : index
    %53 = vector.load %arg6[%c200, %c0_29] : memref<216x512xbf16, #tpu.memory_space<vmem>>, vector<8x512xbf16>
    tpu.vector_store %arg6[%c200, %c0_29], %52 {strides = array<i32>} : memref<216x512xbf16, #tpu.memory_space<vmem>>, vector<8x512xbf16>,
    %54 = vector.extract_strided_slice %1 {offsets = [0, 686], sizes = [8, 512], strides = [1, 1]} : vector<8x1198xbf16> to vector<8x512xbf16>
    %c208 = arith.constant 208 : index
    %c0_30 = arith.constant 0 : index
    %55 = vector.load %arg6[%c208, %c0_30] : memref<216x512xbf16, #tpu.memory_space<vmem>>, vector<8x512xbf16>
    tpu.vector_store %arg6[%c208, %c0_30], %54 {strides = array<i32>} : memref<216x512xbf16, #tpu.memory_space<vmem>>, vector<8x512xbf16>,
    %c0_31 = arith.constant 0 : index
    %c0_32 = arith.constant 0 : index
    %56 = vector.load %arg3[%c0_31, %c0_32] : memref<8x216xbf16, #tpu.memory_space<vmem>>, vector<8x216xbf16>
    %c0_33 = arith.constant 0 : index
    %c0_34 = arith.constant 0 : index
    %57 = vector.load %arg6[%c0_33, %c0_34] : memref<216x512xbf16, #tpu.memory_space<vmem>>, vector<216x512xbf16>
    %cst = arith.constant dense<0.000000e+00> : vector<8x512xf32>
    %58 = tpu.matmul %56, %57, %cst {dimension_numbers = #tpu.dot_dimension_numbers<[1], [0], [0], [1], [0, 0, 1, 1], [], []>} : vector<8x216xbf16>, vector<216x512xbf16>, vector<8x512xf32> -> vector<8x512xf32>
    %c0_35 = arith.constant 0 : index
    %c0_36 = arith.constant 0 : index
    %59 = vector.load %arg4[%c0_35, %c0_36] : memref<8x1xf32, #tpu.memory_space<vmem>>, vector<8x1xf32>
    %60 = vector.broadcast %59 : vector<8x1xf32> to vector<8x512xf32>
    %61 = arith.addf %58, %60 : vector<8x512xf32>
    %cst_37 = arith.constant 0.000000e+00 : f32
    %62 = vector.broadcast %cst_37 : f32 to vector<8x512xf32>
    %63 = arith.maximumf %61, %62 : vector<8x512xf32>
    %64 = arith.truncf %63 : vector<8x512xf32> to vector<8x512xbf16>
    %c0_38 = arith.constant 0 : index
    %c0_39 = arith.constant 0 : index
    %c0_40 = arith.constant 0 : index
    %65 = vector.load %arg5[%c0_38, %c0_39, %c0_40] : memref<1x8x512xbf16, #tpu.memory_space<vmem>>, vector<1x8x512xbf16>
    %66 = vector.shape_cast %65 : vector<1x8x512xbf16> to vector<8x512xbf16>
    %67 = vector.shape_cast %64 : vector<8x512xbf16> to vector<1x8x512xbf16>
    tpu.vector_store %arg5[%c0_38, %c0_39, %c0_40], %67 {strides = array<i32>} : memref<1x8x512xbf16, #tpu.memory_space<vmem>>, vector<1x8x512xbf16>,
    return
  }
  func.func @transform_0(%arg0: i32, %arg1: i32) -> (i32, i32, i32, i32) {
    %c0_i32 = arith.constant 0 : i32
    %c0_i32_0 = arith.constant 0 : i32
    %c0_i32_1 = arith.constant 0 : i32
    return %arg0, %arg1, %c0_i32, %c0_i32_0 : i32, i32, i32, i32
  }
  func.func @transform_1(%arg0: i32, %arg1: i32) -> (i32, i32) {
    %c0_i32 = arith.constant 0 : i32
    %c0_i32_0 = arith.constant 0 : i32
    %c0_i32_1 = arith.constant 0 : i32
    return %c0_i32, %c0_i32_0 : i32, i32
  }
  func.func @transform_2(%arg0: i32, %arg1: i32) -> (i32, i32) {
    %c0_i32 = arith.constant 0 : i32
    %c0_i32_0 = arith.constant 0 : i32
    %c0_i32_1 = arith.constant 0 : i32
    return %c0_i32, %c0_i32_0 : i32, i32
  }
  func.func @transform_3(%arg0: i32, %arg1: i32) -> (i32, i32, i32) {
    %c0_i32 = arith.constant 0 : i32
    %c0_i32_0 = arith.constant 0 : i32
    return %arg0, %c0_i32, %arg1 : i32, i32, i32
  }
}

module attributes {stable_mosaic.version = 11 : i64} {
  func.func @_conv3x3_kernel(%arg0: i32, %arg1: i32, %arg2: memref<1x1x8x1198xbf16, #tpu.memory_space<vmem>>, %arg3: memref<8x216xbf16, #tpu.memory_space<vmem>>, %arg4: memref<8x1xf32, #tpu.memory_space<vmem>>, %arg5: memref<1x8x512xf32, #tpu.memory_space<vmem>>, %arg6: memref<216x512xbf16, #tpu.memory_space<vmem>>) attributes {dimension_semantics = [#tpu.dimension_semantics<parallel>, #tpu.dimension_semantics<parallel>], iteration_bounds = array<i64: 2, 12>, scalar_prefetch = 0 : i64, scratch_operands = 1 : i64, tpu.core_type = #tpu.core_type<tc>, window_params = [{transform_indices = @transform_0, window_bounds = array<i64: 1, 1, 8, 1198>}, {pipeline_mode = #tpu.pipeline_mode<synchronous>, transform_indices = @transform_1, window_bounds = array<i64: 8, 216>}, {pipeline_mode = #tpu.pipeline_mode<synchronous>, transform_indices = @transform_2, window_bounds = array<i64: 8, 1>}, {transform_indices = @transform_3, window_bounds = array<i64: 1, 8, 512>}]} {
    %c0 = arith.constant 0 : index
    %c0_0 = arith.constant 0 : index
    %c0_1 = arith.constant 0 : index
    %c0_2 = arith.constant 0 : index
    %0 = vector.load %arg2[%c0, %c0_0, %c0_1, %c0_2] : memref<1x1x8x1198xbf16, #tpu.memory_space<vmem>>, vector<1x1x8x1198xbf16>
    %1 = vector.shape_cast %0 : vector<1x1x8x1198xbf16> to vector<8x1198xbf16>
    %2 = vector.extract_strided_slice %1 {offsets = [0, 0], sizes = [8, 512], strides = [1, 1]} : vector<8x1198xbf16> to vector<8x512xbf16>
    %c0_3 = arith.constant 0 : index
    %c0_4 = arith.constant 0 : index
    %3 = vector.load %arg6[%c0_3, %c0_4] : memref<216x512xbf16, #tpu.memory_space<vmem>>, vector<8x512xbf16>
    tpu.vector_store %arg6[%c0_3, %c0_4], %2 {strides = array<i32>} : memref<216x512xbf16, #tpu.memory_space<vmem>>, vector<8x512xbf16>,
    %4 = vector.extract_strided_slice %1 {offsets = [0, 1], sizes = [8, 512], strides = [1, 1]} : vector<8x1198xbf16> to vector<8x512xbf16>
    %c8 = arith.constant 8 : index
    %c0_5 = arith.constant 0 : index
    %5 = vector.load %arg6[%c8, %c0_5] : memref<216x512xbf16, #tpu.memory_space<vmem>>, vector<8x512xbf16>
    tpu.vector_store %arg6[%c8, %c0_5], %4 {strides = array<i32>} : memref<216x512xbf16, #tpu.memory_space<vmem>>, vector<8x512xbf16>,
    %6 = vector.extract_strided_slice %1 {offsets = [0, 2], sizes = [8, 512], strides = [1, 1]} : vector<8x1198xbf16> to vector<8x512xbf16>
    %c16 = arith.constant 16 : index
    %c0_6 = arith.constant 0 : index
    %7 = vector.load %arg6[%c16, %c0_6] : memref<216x512xbf16, #tpu.memory_space<vmem>>, vector<8x512xbf16>
    tpu.vector_store %arg6[%c16, %c0_6], %6 {strides = array<i32>} : memref<216x512xbf16, #tpu.memory_space<vmem>>, vector<8x512xbf16>,
    %8 = vector.extract_strided_slice %1 {offsets = [0, 18], sizes = [8, 512], strides = [1, 1]} : vector<8x1198xbf16> to vector<8x512xbf16>
    %c24 = arith.constant 24 : index
    %c0_7 = arith.constant 0 : index
    %9 = vector.load %arg6[%c24, %c0_7] : memref<216x512xbf16, #tpu.memory_space<vmem>>, vector<8x512xbf16>
    tpu.vector_store %arg6[%c24, %c0_7], %8 {strides = array<i32>} : memref<216x512xbf16, #tpu.memory_space<vmem>>, vector<8x512xbf16>,
    %10 = vector.extract_strided_slice %1 {offsets = [0, 19], sizes = [8, 512], strides = [1, 1]} : vector<8x1198xbf16> to vector<8x512xbf16>
    %c32 = arith.constant 32 : index
    %c0_8 = arith.constant 0 : index
    %11 = vector.load %arg6[%c32, %c0_8] : memref<216x512xbf16, #tpu.memory_space<vmem>>, vector<8x512xbf16>
    tpu.vector_store %arg6[%c32, %c0_8], %10 {strides = array<i32>} : memref<216x512xbf16, #tpu.memory_space<vmem>>, vector<8x512xbf16>,
    %12 = vector.extract_strided_slice %1 {offsets = [0, 20], sizes = [8, 512], strides = [1, 1]} : vector<8x1198xbf16> to vector<8x512xbf16>
    %c40 = arith.constant 40 : index
    %c0_9 = arith.constant 0 : index
    %13 = vector.load %arg6[%c40, %c0_9] : memref<216x512xbf16, #tpu.memory_space<vmem>>, vector<8x512xbf16>
    tpu.vector_store %arg6[%c40, %c0_9], %12 {strides = array<i32>} : memref<216x512xbf16, #tpu.memory_space<vmem>>, vector<8x512xbf16>,
    %14 = vector.extract_strided_slice %1 {offsets = [0, 36], sizes = [8, 512], strides = [1, 1]} : vector<8x1198xbf16> to vector<8x512xbf16>
    %c48 = arith.constant 48 : index
    %c0_10 = arith.constant 0 : index
    %15 = vector.load %arg6[%c48, %c0_10] : memref<216x512xbf16, #tpu.memory_space<vmem>>, vector<8x512xbf16>
    tpu.vector_store %arg6[%c48, %c0_10], %14 {strides = array<i32>} : memref<216x512xbf16, #tpu.memory_space<vmem>>, vector<8x512xbf16>,
    %16 = vector.extract_strided_slice %1 {offsets = [0, 37], sizes = [8, 512], strides = [1, 1]} : vector<8x1198xbf16> to vector<8x512xbf16>
    %c56 = arith.constant 56 : index
    %c0_11 = arith.constant 0 : index
    %17 = vector.load %arg6[%c56, %c0_11] : memref<216x512xbf16, #tpu.memory_space<vmem>>, vector<8x512xbf16>
    tpu.vector_store %arg6[%c56, %c0_11], %16 {strides = array<i32>} : memref<216x512xbf16, #tpu.memory_space<vmem>>, vector<8x512xbf16>,
    %18 = vector.extract_strided_slice %1 {offsets = [0, 38], sizes = [8, 512], strides = [1, 1]} : vector<8x1198xbf16> to vector<8x512xbf16>
    %c64 = arith.constant 64 : index
    %c0_12 = arith.constant 0 : index
    %19 = vector.load %arg6[%c64, %c0_12] : memref<216x512xbf16, #tpu.memory_space<vmem>>, vector<8x512xbf16>
    tpu.vector_store %arg6[%c64, %c0_12], %18 {strides = array<i32>} : memref<216x512xbf16, #tpu.memory_space<vmem>>, vector<8x512xbf16>,
    %20 = vector.extract_strided_slice %1 {offsets = [0, 324], sizes = [8, 512], strides = [1, 1]} : vector<8x1198xbf16> to vector<8x512xbf16>
    %c72 = arith.constant 72 : index
    %c0_13 = arith.constant 0 : index
    %21 = vector.load %arg6[%c72, %c0_13] : memref<216x512xbf16, #tpu.memory_space<vmem>>, vector<8x512xbf16>
    tpu.vector_store %arg6[%c72, %c0_13], %20 {strides = array<i32>} : memref<216x512xbf16, #tpu.memory_space<vmem>>, vector<8x512xbf16>,
    %22 = vector.extract_strided_slice %1 {offsets = [0, 325], sizes = [8, 512], strides = [1, 1]} : vector<8x1198xbf16> to vector<8x512xbf16>
    %c80 = arith.constant 80 : index
    %c0_14 = arith.constant 0 : index
    %23 = vector.load %arg6[%c80, %c0_14] : memref<216x512xbf16, #tpu.memory_space<vmem>>, vector<8x512xbf16>
    tpu.vector_store %arg6[%c80, %c0_14], %22 {strides = array<i32>} : memref<216x512xbf16, #tpu.memory_space<vmem>>, vector<8x512xbf16>,
    %24 = vector.extract_strided_slice %1 {offsets = [0, 326], sizes = [8, 512], strides = [1, 1]} : vector<8x1198xbf16> to vector<8x512xbf16>
    %c88 = arith.constant 88 : index
    %c0_15 = arith.constant 0 : index
    %25 = vector.load %arg6[%c88, %c0_15] : memref<216x512xbf16, #tpu.memory_space<vmem>>, vector<8x512xbf16>
    tpu.vector_store %arg6[%c88, %c0_15], %24 {strides = array<i32>} : memref<216x512xbf16, #tpu.memory_space<vmem>>, vector<8x512xbf16>,
    %26 = vector.extract_strided_slice %1 {offsets = [0, 342], sizes = [8, 512], strides = [1, 1]} : vector<8x1198xbf16> to vector<8x512xbf16>
    %c96 = arith.constant 96 : index
    %c0_16 = arith.constant 0 : index
    %27 = vector.load %arg6[%c96, %c0_16] : memref<216x512xbf16, #tpu.memory_space<vmem>>, vector<8x512xbf16>
    tpu.vector_store %arg6[%c96, %c0_16], %26 {strides = array<i32>} : memref<216x512xbf16, #tpu.memory_space<vmem>>, vector<8x512xbf16>,
    %28 = vector.extract_strided_slice %1 {offsets = [0, 343], sizes = [8, 512], strides = [1, 1]} : vector<8x1198xbf16> to vector<8x512xbf16>
    %c104 = arith.constant 104 : index
    %c0_17 = arith.constant 0 : index
    %29 = vector.load %arg6[%c104, %c0_17] : memref<216x512xbf16, #tpu.memory_space<vmem>>, vector<8x512xbf16>
    tpu.vector_store %arg6[%c104, %c0_17], %28 {strides = array<i32>} : memref<216x512xbf16, #tpu.memory_space<vmem>>, vector<8x512xbf16>,
    %30 = vector.extract_strided_slice %1 {offsets = [0, 344], sizes = [8, 512], strides = [1, 1]} : vector<8x1198xbf16> to vector<8x512xbf16>
    %c112 = arith.constant 112 : index
    %c0_18 = arith.constant 0 : index
    %31 = vector.load %arg6[%c112, %c0_18] : memref<216x512xbf16, #tpu.memory_space<vmem>>, vector<8x512xbf16>
    tpu.vector_store %arg6[%c112, %c0_18], %30 {strides = array<i32>} : memref<216x512xbf16, #tpu.memory_space<vmem>>, vector<8x512xbf16>,
    %32 = vector.extract_strided_slice %1 {offsets = [0, 360], sizes = [8, 512], strides = [1, 1]} : vector<8x1198xbf16> to vector<8x512xbf16>
    %c120 = arith.constant 120 : index
    %c0_19 = arith.constant 0 : index
    %33 = vector.load %arg6[%c120, %c0_19] : memref<216x512xbf16, #tpu.memory_space<vmem>>, vector<8x512xbf16>
    tpu.vector_store %arg6[%c120, %c0_19], %32 {strides = array<i32>} : memref<216x512xbf16, #tpu.memory_space<vmem>>, vector<8x512xbf16>,
    %34 = vector.extract_strided_slice %1 {offsets = [0, 361], sizes = [8, 512], strides = [1, 1]} : vector<8x1198xbf16> to vector<8x512xbf16>
    %c128 = arith.constant 128 : index
    %c0_20 = arith.constant 0 : index
    %35 = vector.load %arg6[%c128, %c0_20] : memref<216x512xbf16, #tpu.memory_space<vmem>>, vector<8x512xbf16>
    tpu.vector_store %arg6[%c128, %c0_20], %34 {strides = array<i32>} : memref<216x512xbf16, #tpu.memory_space<vmem>>, vector<8x512xbf16>,
    %36 = vector.extract_strided_slice %1 {offsets = [0, 362], sizes = [8, 512], strides = [1, 1]} : vector<8x1198xbf16> to vector<8x512xbf16>
    %c136 = arith.constant 136 : index
    %c0_21 = arith.constant 0 : index
    %37 = vector.load %arg6[%c136, %c0_21] : memref<216x512xbf16, #tpu.memory_space<vmem>>, vector<8x512xbf16>
    tpu.vector_store %arg6[%c136, %c0_21], %36 {strides = array<i32>} : memref<216x512xbf16, #tpu.memory_space<vmem>>, vector<8x512xbf16>,
    %38 = vector.extract_strided_slice %1 {offsets = [0, 648], sizes = [8, 512], strides = [1, 1]} : vector<8x1198xbf16> to vector<8x512xbf16>
    %c144 = arith.constant 144 : index
    %c0_22 = arith.constant 0 : index
    %39 = vector.load %arg6[%c144, %c0_22] : memref<216x512xbf16, #tpu.memory_space<vmem>>, vector<8x512xbf16>
    tpu.vector_store %arg6[%c144, %c0_22], %38 {strides = array<i32>} : memref<216x512xbf16, #tpu.memory_space<vmem>>, vector<8x512xbf16>,
    %40 = vector.extract_strided_slice %1 {offsets = [0, 649], sizes = [8, 512], strides = [1, 1]} : vector<8x1198xbf16> to vector<8x512xbf16>
    %c152 = arith.constant 152 : index
    %c0_23 = arith.constant 0 : index
    %41 = vector.load %arg6[%c152, %c0_23] : memref<216x512xbf16, #tpu.memory_space<vmem>>, vector<8x512xbf16>
    tpu.vector_store %arg6[%c152, %c0_23], %40 {strides = array<i32>} : memref<216x512xbf16, #tpu.memory_space<vmem>>, vector<8x512xbf16>,
    %42 = vector.extract_strided_slice %1 {offsets = [0, 650], sizes = [8, 512], strides = [1, 1]} : vector<8x1198xbf16> to vector<8x512xbf16>
    %c160 = arith.constant 160 : index
    %c0_24 = arith.constant 0 : index
    %43 = vector.load %arg6[%c160, %c0_24] : memref<216x512xbf16, #tpu.memory_space<vmem>>, vector<8x512xbf16>
    tpu.vector_store %arg6[%c160, %c0_24], %42 {strides = array<i32>} : memref<216x512xbf16, #tpu.memory_space<vmem>>, vector<8x512xbf16>,
    %44 = vector.extract_strided_slice %1 {offsets = [0, 666], sizes = [8, 512], strides = [1, 1]} : vector<8x1198xbf16> to vector<8x512xbf16>
    %c168 = arith.constant 168 : index
    %c0_25 = arith.constant 0 : index
    %45 = vector.load %arg6[%c168, %c0_25] : memref<216x512xbf16, #tpu.memory_space<vmem>>, vector<8x512xbf16>
    tpu.vector_store %arg6[%c168, %c0_25], %44 {strides = array<i32>} : memref<216x512xbf16, #tpu.memory_space<vmem>>, vector<8x512xbf16>,
    %46 = vector.extract_strided_slice %1 {offsets = [0, 667], sizes = [8, 512], strides = [1, 1]} : vector<8x1198xbf16> to vector<8x512xbf16>
    %c176 = arith.constant 176 : index
    %c0_26 = arith.constant 0 : index
    %47 = vector.load %arg6[%c176, %c0_26] : memref<216x512xbf16, #tpu.memory_space<vmem>>, vector<8x512xbf16>
    tpu.vector_store %arg6[%c176, %c0_26], %46 {strides = array<i32>} : memref<216x512xbf16, #tpu.memory_space<vmem>>, vector<8x512xbf16>,
    %48 = vector.extract_strided_slice %1 {offsets = [0, 668], sizes = [8, 512], strides = [1, 1]} : vector<8x1198xbf16> to vector<8x512xbf16>
    %c184 = arith.constant 184 : index
    %c0_27 = arith.constant 0 : index
    %49 = vector.load %arg6[%c184, %c0_27] : memref<216x512xbf16, #tpu.memory_space<vmem>>, vector<8x512xbf16>
    tpu.vector_store %arg6[%c184, %c0_27], %48 {strides = array<i32>} : memref<216x512xbf16, #tpu.memory_space<vmem>>, vector<8x512xbf16>,
    %50 = vector.extract_strided_slice %1 {offsets = [0, 684], sizes = [8, 512], strides = [1, 1]} : vector<8x1198xbf16> to vector<8x512xbf16>
    %c192 = arith.constant 192 : index
    %c0_28 = arith.constant 0 : index
    %51 = vector.load %arg6[%c192, %c0_28] : memref<216x512xbf16, #tpu.memory_space<vmem>>, vector<8x512xbf16>
    tpu.vector_store %arg6[%c192, %c0_28], %50 {strides = array<i32>} : memref<216x512xbf16, #tpu.memory_space<vmem>>, vector<8x512xbf16>,
    %52 = vector.extract_strided_slice %1 {offsets = [0, 685], sizes = [8, 512], strides = [1, 1]} : vector<8x1198xbf16> to vector<8x512xbf16>
    %c200 = arith.constant 200 : index
    %c0_29 = arith.constant 0 : index
    %53 = vector.load %arg6[%c200, %c0_29] : memref<216x512xbf16, #tpu.memory_space<vmem>>, vector<8x512xbf16>
    tpu.vector_store %arg6[%c200, %c0_29], %52 {strides = array<i32>} : memref<216x512xbf16, #tpu.memory_space<vmem>>, vector<8x512xbf16>,
    %54 = vector.extract_strided_slice %1 {offsets = [0, 686], sizes = [8, 512], strides = [1, 1]} : vector<8x1198xbf16> to vector<8x512xbf16>
    %c208 = arith.constant 208 : index
    %c0_30 = arith.constant 0 : index
    %55 = vector.load %arg6[%c208, %c0_30] : memref<216x512xbf16, #tpu.memory_space<vmem>>, vector<8x512xbf16>
    tpu.vector_store %arg6[%c208, %c0_30], %54 {strides = array<i32>} : memref<216x512xbf16, #tpu.memory_space<vmem>>, vector<8x512xbf16>,
    %c0_31 = arith.constant 0 : index
    %c0_32 = arith.constant 0 : index
    %56 = vector.load %arg3[%c0_31, %c0_32] : memref<8x216xbf16, #tpu.memory_space<vmem>>, vector<8x216xbf16>
    %c0_33 = arith.constant 0 : index
    %c0_34 = arith.constant 0 : index
    %57 = vector.load %arg6[%c0_33, %c0_34] : memref<216x512xbf16, #tpu.memory_space<vmem>>, vector<216x512xbf16>
    %cst = arith.constant dense<0.000000e+00> : vector<8x512xf32>
    %58 = tpu.matmul %56, %57, %cst {dimension_numbers = #tpu.dot_dimension_numbers<[1], [0], [0], [1], [0, 0, 1, 1], [], []>} : vector<8x216xbf16>, vector<216x512xbf16>, vector<8x512xf32> -> vector<8x512xf32>
    %c0_35 = arith.constant 0 : index
    %c0_36 = arith.constant 0 : index
    %59 = vector.load %arg4[%c0_35, %c0_36] : memref<8x1xf32, #tpu.memory_space<vmem>>, vector<8x1xf32>
    %60 = vector.broadcast %59 : vector<8x1xf32> to vector<8x512xf32>
    %61 = arith.addf %58, %60 : vector<8x512xf32>
    %c0_37 = arith.constant 0 : index
    %c0_38 = arith.constant 0 : index
    %c0_39 = arith.constant 0 : index
    %62 = vector.load %arg5[%c0_37, %c0_38, %c0_39] : memref<1x8x512xf32, #tpu.memory_space<vmem>>, vector<1x8x512xf32>
    %63 = vector.shape_cast %62 : vector<1x8x512xf32> to vector<8x512xf32>
    %64 = vector.shape_cast %61 : vector<8x512xf32> to vector<1x8x512xf32>
    tpu.vector_store %arg5[%c0_37, %c0_38, %c0_39], %64 {strides = array<i32>} : memref<1x8x512xf32, #tpu.memory_space<vmem>>, vector<1x8x512xf32>,
    return
  }
  func.func @transform_0(%arg0: i32, %arg1: i32) -> (i32, i32, i32, i32) {
    %c0_i32 = arith.constant 0 : i32
    %c0_i32_0 = arith.constant 0 : i32
    %c0_i32_1 = arith.constant 0 : i32
    return %arg0, %arg1, %c0_i32, %c0_i32_0 : i32, i32, i32, i32
  }
  func.func @transform_1(%arg0: i32, %arg1: i32) -> (i32, i32) {
    %c0_i32 = arith.constant 0 : i32
    %c0_i32_0 = arith.constant 0 : i32
    %c0_i32_1 = arith.constant 0 : i32
    return %c0_i32, %c0_i32_0 : i32, i32
  }
  func.func @transform_2(%arg0: i32, %arg1: i32) -> (i32, i32) {
    %c0_i32 = arith.constant 0 : i32
    %c0_i32_0 = arith.constant 0 : i32
    %c0_i32_1 = arith.constant 0 : i32
    return %c0_i32, %c0_i32_0 : i32, i32
  }
  func.func @transform_3(%arg0: i32, %arg1: i32) -> (i32, i32, i32) {
    %c0_i32 = arith.constant 0 : i32
    %c0_i32_0 = arith.constant 0 : i32
    return %arg0, %c0_i32, %arg1 : i32, i32, i32
  }
}

</mosaic_0001>

<llo_original>
// kernel: forward.4
$region0: #{forward.4}
  #allocation0 [shape = 'u32[]', space=smem, size = 0x4, offset = 0x4, fixed_abs, tag = 'smem constant byte address 0x4 - core index']
  #allocation1 [shape = 'u32[144,128]{1,0:T(1,128)}', space=vmem, size = 0x12000, scoped, tag = 'internal scratch']
  #allocation2 [shape = 'f32[2,256]{1,0:T(2,128)}', space=vmem, size = 0x800, scoped, tag = 'scratch operand']
  %s0 = inlined_call_operand.vmem [shape: bf16[2,2048], index: 0, kind: input, shape index: {}]
  %s1 = inlined_call_operand.hbm [shape: bf16[2048,2048], index: 1, kind: input, shape index: {}]
  %s2 = inlined_call_operand.vmem [shape: f32[2,1], index: 2, kind: input, shape index: {}]
  %s3 = inlined_call_operand.hbm [shape: f32[1,16], index: 3, kind: input, shape index: {}]
  %s4 = inlined_call_operand.hbm [shape: f32[1,16], index: 4, kind: input, shape index: {}]
  %s5 = inlined_call_operand.hbm [shape: f32[16,16], index: 5, kind: input, shape index: {}]
  %s6 = inlined_call_operand.hbm [shape: f32[1,16], index: 6, kind: input, shape index: {}]
  %s7 = inlined_call_operand.hbm [shape: f32[16,2048], index: 7, kind: input, shape index: {}]
  %s8 = inlined_call_operand.hbm [shape: f32[1,2048], index: 8, kind: input, shape index: {}]
  %s9 = inlined_call_operand.vmem [shape: bf16[2,2048], index: 9, kind: output, shape index: {}]
  %s10 = sld [smem:[#allocation0]]
  $region105: #{forward.4} parent=0
    _
  %s12 = ssub.s32 1, %s10
  %s13 = scalar_select 0, %s12, %s10
  $region1: #{forward.4} parent=0
    #allocation3 [shape = 'u8[524288]{0}', space=vmem, size = 0x80000, scoped, tag = 'input window, operand 1']
    #allocation4 [shape = 's32[2]{0}', space=sflag, size = 0x8, scoped, tag = 'scoped memory for forward.4']
    #allocation5 [shape = 'u8[512]{0}', space=vmem, size = 0x400, scoped, tag = 'input window, operand 3, single buffered']
    #allocation6 [shape = 's32[1]{0}', space=sflag, size = 0x4, scoped, tag = 'scoped memory for forward.4']
    #allocation7 [shape = 'u8[512]{0}', space=vmem, size = 0x400, scoped, tag = 'input window, operand 4, single buffered']
    #allocation8 [shape = 'u8[8192]{0}', space=vmem, size = 0x2000, scoped, tag = 'input window, operand 5, single buffered']
    #allocation9 [shape = 's32[1]{0}', space=sflag, size = 0x4, scoped, tag = 'scoped memory for forward.4']
    #allocation10 [shape = 'u8[512]{0}', space=vmem, size = 0x400, scoped, tag = 'input window, operand 6, single buffered']
    #allocation11 [shape = 'u8[32768]{0}', space=vmem, size = 0x8000, scoped, tag = 'input window, operand 7']
    #allocation12 [shape = 's32[2]{0}', space=sflag, size = 0x8, scoped, tag = 'scoped memory for forward.4']
    #allocation13 [shape = 'u8[2048]{0}', space=vmem, size = 0x800, scoped, tag = 'input window, operand 8']
    %14 = vsyncpa [#allocation4], 0
    %s15 = scalar_lea.sflag [#allocation4], 1
    %16 = vsyncpa %s15, 0
    %17 = vsyncpa [#allocation6], 0
    %18 = vsyncpa [#allocation9], 0
    %19 = vsyncpa [#allocation12], 0
    %s20 = scalar_lea.sflag [#allocation12], 1
    %21 = vsyncpa %s20, 0
    loop: start=0, step=1, limit=34
    $region2: #{forward.4} parent=1 // loop_pre_header
      _
    $region3: #{forward.4} parent=1 // loop_header
      %s23 = sphi 0, %s27
      %p24 = scmp.ge.s32.totalorder %s23, 34
      %s30 = sphi 0, %s42
      %s31 = sphi 0, %s38
      %s32 = sphi 0, %s30
      %s33 = sphi 0, %s31
      %s34 = sphi 0, %s32
      %s35 = sphi 0, %s33
      %s45 = sphi 0, %s47
      %s48 = sphi 0, %s45
      %s49 = sphi 0, %s48
      %s65 = sphi 0, %s49
      %s73 = sphi 0, %s75
      %s76 = sphi 0, %s73
      %s77 = sphi 0, %s76
      %s93 = sphi 0, %s77
      %s97 = sphi 0, %s97
      %s99 = sphi 0, %s97
      %s100 = sphi 0, %s99
      %s114 = sphi 0, %s100
      %s118 = sphi 0, %s118
      %s120 = sphi 0, %s118
      %s121 = sphi 0, %s120
      %s135 = sphi 0, %s121
      %s139 = sphi 0, %s139
      %s141 = sphi 0, %s139
      %s142 = sphi 0, %s141
      %s156 = sphi 0, %s142
      %s160 = sphi 0, %s160
      %s162 = sphi 0, %s160
      %s163 = sphi 0, %s162
      %s177 = sphi 0, %s163
      %s181 = sphi 0, %s181
      %s183 = sphi 0, %s181
      %s184 = sphi 0, %s183
      %s198 = sphi 0, %s184
      %s204 = sphi 0, %s206
      %s207 = sphi 0, %s204
      %s208 = sphi 0, %s207
      %s224 = sphi 0, %s208
      %s230 = sphi 0, %s232
      %s233 = sphi 0, %s230
      %s234 = sphi 0, %s233
      %s250 = sphi 0, %s234
      %s256 = sphi 0, %s258
      %s259 = sphi 0, %s256
      %s260 = sphi 0, %s259
      %s276 = sphi 0, %s260
    $region4: #{forward.4} parent=1 // loop_header_branch
      %26 = sbr.rel (%p24) target = $region8
    $region5: #{forward.4} parent=1 // loop_body
      %s28 = ssub.s32 %s23, 1
      %s29 = ssub.s32 %s23, 2
      %s36 = sadd.s32 1, %s31
      %p37 = scmp.ge.s32.totalorder %s36, 4
      %s38 = scalar_select %p37, 0, %s36
      %s39 = sadd.s32 1, %s30
      %s40 = scalar_select %p37, %s39, %s30
      %p41 = scmp.ge.s32.totalorder %s40, 8
      %s42 = scalar_select %p41, 0, %s40
      %s43 = ssub.s32 %s31, %s38
      %p44 = scmp.eq.s32.totalorder %s43, 0
      %s46 = sadd.s32 %s45, 1
      %s47 = scalar_select %p44, %s45, %s46
      %p50 = pneg %p44
      %p51 = scmp.eq.s32.totalorder %s23, 31
      %p52 = por %p50, %p51
      %p53 = scmp.ne.s32.totalorder %s45, %s48
      %p54 = scmp.eq.s32.totalorder %s23, 0
      %p55 = por %p53, %p54
      %p56 = scmp.ne.s32.totalorder %s45, %s48
      %p57 = scmp.eq.s32.totalorder %s28, 31
      %p58 = por %p56, %p57
      %p59 = scmp.ne.s32.totalorder %s48, %s49
      %p60 = scmp.eq.s32.totalorder %s28, 0
      %p61 = por %p59, %p60
      %p62 = scmp.ne.s32.totalorder %s48, %s49
      %p63 = scmp.eq.s32.totalorder %s29, 31
      %p64 = por %p62, %p63
      %p66 = scmp.ne.s32.totalorder %s49, %s65
      %p67 = scmp.eq.s32.totalorder %s29, 0
      %p68 = por %p66, %p67
      %s69 = ssub.s32 %s31, %s38
      %s70 = ssub.s32 %s30, %s42
      %s71 = sor.u32 %s69, %s70
      %p72 = scmp.eq.s32.totalorder %s71, 0
      %s74 = sadd.s32 %s73, 1
      %s75 = scalar_select %p72, %s73, %s74
      %p78 = pneg %p72
      %p79 = scmp.eq.s32.totalorder %s23, 31
      %p80 = por %p78, %p79
      %p81 = scmp.ne.s32.totalorder %s73, %s76
      %p82 = scmp.eq.s32.totalorder %s23, 0
      %p83 = por %p81, %p82
      %p84 = scmp.ne.s32.totalorder %s73, %s76
      %p85 = scmp.eq.s32.totalorder %s28, 31
      %p86 = por %p84, %p85
      %p87 = scmp.ne.s32.totalorder %s76, %s77
      %p88 = scmp.eq.s32.totalorder %s28, 0
      %p89 = por %p87, %p88
      %p90 = scmp.ne.s32.totalorder %s76, %s77
      %p91 = scmp.eq.s32.totalorder %s29, 31
      %p92 = por %p90, %p91
      %p94 = scmp.ne.s32.totalorder %s77, %s93
      %p95 = scmp.eq.s32.totalorder %s29, 0
      %p96 = por %p94, %p95
      %s98 = sadd.s32 %s97, 1
      %p101 = scmp.eq.s32.totalorder %s23, 31
      %p102 = scmp.ne.s32.totalorder %s97, %s99
      %p103 = scmp.eq.s32.totalorder %s23, 0
      %p104 = por %p102, %p103
      %p105 = scmp.ne.s32.totalorder %s97, %s99
      %p106 = scmp.eq.s32.totalorder %s28, 31
      %p107 = por %p105, %p106
      %p108 = scmp.ne.s32.totalorder %s99, %s100
      %p109 = scmp.eq.s32.totalorder %s28, 0
      %p110 = por %p108, %p109
      %p111 = scmp.ne.s32.totalorder %s99, %s100
      %p112 = scmp.eq.s32.totalorder %s29, 31
      %p113 = por %p111, %p112
      %p115 = scmp.ne.s32.totalorder %s100, %s114
      %p116 = scmp.eq.s32.totalorder %s29, 0
      %p117 = por %p115, %p116
      %s119 = sadd.s32 %s118, 1
      %p122 = scmp.eq.s32.totalorder %s23, 31
      %p123 = scmp.ne.s32.totalorder %s118, %s120
      %p124 = scmp.eq.s32.totalorder %s23, 0
      %p125 = por %p123, %p124
      %p126 = scmp.ne.s32.totalorder %s118, %s120
      %p127 = scmp.eq.s32.totalorder %s28, 31
      %p128 = por %p126, %p127
      %p129 = scmp.ne.s32.totalorder %s120, %s121
      %p130 = scmp.eq.s32.totalorder %s28, 0
      %p131 = por %p129, %p130
      %p132 = scmp.ne.s32.totalorder %s120, %s121
      %p133 = scmp.eq.s32.totalorder %s29, 31
      %p134 = por %p132, %p133
      %p136 = scmp.ne.s32.totalorder %s121, %s135
      %p137 = scmp.eq.s32.totalorder %s29, 0
      %p138 = por %p136, %p137
      %s140 = sadd.s32 %s139, 1
      %p143 = scmp.eq.s32.totalorder %s23, 31
      %p144 = scmp.ne.s32.totalorder %s139, %s141
      %p145 = scmp.eq.s32.totalorder %s23, 0
      %p146 = por %p144, %p145
      %p147 = scmp.ne.s32.totalorder %s139, %s141
      %p148 = scmp.eq.s32.totalorder %s28, 31
      %p149 = por %p147, %p148
      %p150 = scmp.ne.s32.totalorder %s141, %s142
      %p151 = scmp.eq.s32.totalorder %s28, 0
      %p152 = por %p150, %p151
      %p153 = scmp.ne.s32.totalorder %s141, %s142
      %p154 = scmp.eq.s32.totalorder %s29, 31
      %p155 = por %p153, %p154
      %p157 = scmp.ne.s32.totalorder %s142, %s156
      %p158 = scmp.eq.s32.totalorder %s29, 0
      %p159 = por %p157, %p158
      %s161 = sadd.s32 %s160, 1
      %p164 = scmp.eq.s32.totalorder %s23, 31
      %p165 = scmp.ne.s32.totalorder %s160, %s162
      %p166 = scmp.eq.s32.totalorder %s23, 0
      %p167 = por %p165, %p166
      %p168 = scmp.ne.s32.totalorder %s160, %s162
      %p169 = scmp.eq.s32.totalorder %s28, 31
      %p170 = por %p168, %p169
      %p171 = scmp.ne.s32.totalorder %s162, %s163
      %p172 = scmp.eq.s32.totalorder %s28, 0
      %p173 = por %p171, %p172
      %p174 = scmp.ne.s32.totalorder %s162, %s163
      %p175 = scmp.eq.s32.totalorder %s29, 31
      %p176 = por %p174, %p175
      %p178 = scmp.ne.s32.totalorder %s163, %s177
      %p179 = scmp.eq.s32.totalorder %s29, 0
      %p180 = por %p178, %p179
      %s182 = sadd.s32 %s181, 1
      %p185 = scmp.eq.s32.totalorder %s23, 31
      %p186 = scmp.ne.s32.totalorder %s181, %s183
      %p187 = scmp.eq.s32.totalorder %s23, 0
      %p188 = por %p186, %p187
      %p189 = scmp.ne.s32.totalorder %s181, %s183
      %p190 = scmp.eq.s32.totalorder %s28, 31
      %p191 = por %p189, %p190
      %p192 = scmp.ne.s32.totalorder %s183, %s184
      %p193 = scmp.eq.s32.totalorder %s28, 0
      %p194 = por %p192, %p193
      %p195 = scmp.ne.s32.totalorder %s183, %s184
      %p196 = scmp.eq.s32.totalorder %s29, 31
      %p197 = por %p195, %p196
      %p199 = scmp.ne.s32.totalorder %s184, %s198
      %p200 = scmp.eq.s32.totalorder %s29, 0
      %p201 = por %p199, %p200
      %s202 = ssub.s32 %s30, %s42
      %p203 = scmp.eq.s32.totalorder %s202, 0
      %s205 = sadd.s32 %s204, 1
      %s206 = scalar_select %p203, %s204, %s205
      %p209 = pneg %p203
      %p210 = scmp.eq.s32.totalorder %s23, 31
      %p211 = por %p209, %p210
      %p212 = scmp.ne.s32.totalorder %s204, %s207
      %p213 = scmp.eq.s32.totalorder %s23, 0
      %p214 = por %p212, %p213
      %p215 = scmp.ne.s32.totalorder %s204, %s207
      %p216 = scmp.eq.s32.totalorder %s28, 31
      %p217 = por %p215, %p216
      %p218 = scmp.ne.s32.totalorder %s207, %s208
      %p219 = scmp.eq.s32.totalorder %s28, 0
      %p220 = por %p218, %p219
      %p221 = scmp.ne.s32.totalorder %s207, %s208
      %p222 = scmp.eq.s32.totalorder %s29, 31
      %p223 = por %p221, %p222
      %p225 = scmp.ne.s32.totalorder %s208, %s224
      %p226 = scmp.eq.s32.totalorder %s29, 0
      %p227 = por %p225, %p226
      %s228 = ssub.s32 %s30, %s42
      %p229 = scmp.eq.s32.totalorder %s228, 0
      %s231 = sadd.s32 %s230, 1
      %s232 = scalar_select %p229, %s230, %s231
      %p235 = pneg %p229
      %p236 = scmp.eq.s32.totalorder %s23, 31
      %p237 = por %p235, %p236
      %p238 = scmp.ne.s32.totalorder %s230, %s233
      %p239 = scmp.eq.s32.totalorder %s23, 0
      %p240 = por %p238, %p239
      %p241 = scmp.ne.s32.totalorder %s230, %s233
      %p242 = scmp.eq.s32.totalorder %s28, 31
      %p243 = por %p241, %p242
      %p244 = scmp.ne.s32.totalorder %s233, %s234
      %p245 = scmp.eq.s32.totalorder %s28, 0
      %p246 = por %p244, %p245
      %p247 = scmp.ne.s32.totalorder %s233, %s234
      %p248 = scmp.eq.s32.totalorder %s29, 31
      %p249 = por %p247, %p248
      %p251 = scmp.ne.s32.totalorder %s234, %s250
      %p252 = scmp.eq.s32.totalorder %s29, 0
      %p253 = por %p251, %p252
      %s254 = ssub.s32 %s30, %s42
      %p255 = scmp.eq.s32.totalorder %s254, 0
      %s257 = sadd.s32 %s256, 1
      %s258 = scalar_select %p255, %s256, %s257
      %p261 = pneg %p255
      %p262 = scmp.eq.s32.totalorder %s23, 31
      %p263 = por %p261, %p262
      %p264 = scmp.ne.s32.totalorder %s256, %s259
      %p265 = scmp.eq.s32.totalorder %s23, 0
      %p266 = por %p264, %p265
      %p267 = scmp.ne.s32.totalorder %s256, %s259
      %p268 = scmp.eq.s32.totalorder %s28, 31
      %p269 = por %p267, %p268
      %p270 = scmp.ne.s32.totalorder %s259, %s260
      %p271 = scmp.eq.s32.totalorder %s28, 0
      %p272 = por %p270, %p271
      %p273 = scmp.ne.s32.totalorder %s259, %s260
      %p274 = scmp.eq.s32.totalorder %s29, 31
      %p275 = por %p273, %p274
      %p277 = scmp.ne.s32.totalorder %s260, %s276
      %p278 = scmp.eq.s32.totalorder %s29, 0
      %p279 = por %p277, %p278
      %p280 = scmp.le.s32.totalorder 1, %s23
      %p281 = scmp.lt.s32.totalorder %s23, 33
      %p282 = pnand %p280, %p281
      %p283 = pneg %p282
      // Predicated region
      $region9: #{forward.4} parent=5 // pred_check
        _
      $region10: #{forward.4} parent=5 // pred_check_branch
        %285 = sbr.rel (%p282) target = $region12
      $region11: #{forward.4} parent=5 // pred_region
        %s286 = ssub.s32 %s23, 1
        // Predicated region
        $region13: #{forward.4} parent=11 // pred_check
          %p287 = pneg %p110
        $region14: #{forward.4} parent=11 // pred_check_branch
          %289 = sbr.rel (%p287) target = $region16
        $region15: #{forward.4} parent=11 // pred_region
          _
        $region16: #{forward.4} parent=11 // pred_fallthru
          _
        // Predicated region
        $region17: #{forward.4} parent=11 // pred_check
          %p290 = pneg %p131
        $region18: #{forward.4} parent=11 // pred_check_branch
          %292 = sbr.rel (%p290) target = $region20
        $region19: #{forward.4} parent=11 // pred_region
          %s294 = ssub.s32 16, 16
          %295 = vsyncadd [#allocation6], %s294
          %s297 = sshll.u32 [#allocation5], 4
          %s298 = int_to_ptr.vmem [resolvable:$true] %s297
          %300 = dma.hbm_to_vmem [thread:$0]  %s3, 16, %s298, [#allocation6]
        $region20: #{forward.4} parent=11 // pred_fallthru
          _
        // Predicated region
        $region21: #{forward.4} parent=11 // pred_check
          %p301 = pneg %p152
        $region22: #{forward.4} parent=11 // pred_check_branch
          %303 = sbr.rel (%p301) target = $region24
        $region23: #{forward.4} parent=11 // pred_region
          %s305 = ssub.s32 16, 16
          %306 = vsyncadd [#allocation6], %s305
          %s308 = sshll.u32 [#allocation7], 4
          %s309 = int_to_ptr.vmem [resolvable:$true] %s308
          %311 = dma.hbm_to_vmem [thread:$0]  %s4, 16, %s309, [#allocation6]
        $region24: #{forward.4} parent=11 // pred_fallthru
          _
        // Predicated region
        $region25: #{forward.4} parent=11 // pred_check
          %p312 = pneg %p173
        $region26: #{forward.4} parent=11 // pred_check_branch
          %314 = sbr.rel (%p312) target = $region28
        $region27: #{forward.4} parent=11 // pred_region
          %s316 = ssub.s32 256, 256
          %317 = vsyncadd [#allocation9], %s316
          %s318 = sshll.u32 [#allocation8], 4
          %s319 = int_to_ptr.vmem [resolvable:$true] %s318
          %324 = dma.hbm_to_vmem [thread:$0]  %s5, 256, %s319, [#allocation9], 128, 128, 8
        $region28: #{forward.4} parent=11 // pred_fallthru
          _
        // Predicated region
        $region29: #{forward.4} parent=11 // pred_check
          %p325 = pneg %p194
        $region30: #{forward.4} parent=11 // pred_check_branch
          %327 = sbr.rel (%p325) target = $region32
        $region31: #{forward.4} parent=11 // pred_region
          %s329 = ssub.s32 16, 16
          %330 = vsyncadd [#allocation9], %s329
          %s332 = sshll.u32 [#allocation10], 4
          %s333 = int_to_ptr.vmem [resolvable:$true] %s332
          %335 = dma.hbm_to_vmem [thread:$0]  %s6, 16, %s333, [#allocation9]
        $region32: #{forward.4} parent=11 // pred_fallthru
          _
      $region12: #{forward.4} parent=5 // pred_fallthru
        _
      %p336 = scmp.lt.s32.totalorder %s23, 32
      // Predicated region
      $region33: #{forward.4} parent=5 // pred_check
        %p337 = pneg %p336
      $region34: #{forward.4} parent=5 // pred_check_branch
        %339 = sbr.rel (%p337) target = $region36
      $region35: #{forward.4} parent=5 // pred_region
        // Predicated region
        $region37: #{forward.4} parent=35 // pred_check
          %p340 = pneg %p55
        $region38: #{forward.4} parent=35 // pred_check_branch
          %342 = sbr.rel (%p340) target = $region40
        $region39: #{forward.4} parent=35 // pred_region
          %s343 = smul.u32 4, %s31
          %p344 = scmp.lt.s32.totalorder %s343, 15
          %s345 = scalar_select %p344, %s343, 15
          %s346 = scalar_lea.vmem %s0, %s345
          %s347 = smul.u32 4, %s31
        $region40: #{forward.4} parent=35 // pred_fallthru
          _
        // Predicated region
        $region41: #{forward.4} parent=35 // pred_check
          %p348 = pneg %p83
        $region42: #{forward.4} parent=35 // pred_check_branch
          %350 = sbr.rel (%p348) target = $region44
        $region43: #{forward.4} parent=35 // pred_region
          %s351 = sand.u32 %s73, 1
          %s352 = scalar_lea.sflag [#allocation4], %s351
          %s353 = sand.u32 %s73, 1
          %s354 = smul.addr %s353, 512
          %s355 = scalar_lea.vmem [#allocation3], %s354
          %s356 = smul.u32 64, %s31
          %s357 = smul.u32 2, %s30
          %s359 = ssub.s32 8192, 8192
          %360 = vsyncadd %s352, %s359
          %s361 = smul.addr %s356, 16
          %s362 = sadd.s32 %s357, %s361
          %s363 = smul.addr %s362, 64
          %s364 = scalar_lea.hbm %s1, %s363
          %s365 = sshll.u32 %s355, 4
          %s366 = int_to_ptr.vmem [resolvable:$true] %s365
          %371 = dma.hbm_to_vmem [thread:$0]  %s364, 8192, %s366, %s352, 1024, 128, 8
        $region44: #{forward.4} parent=35 // pred_fallthru
          _
        // Predicated region
        $region45: #{forward.4} parent=35 // pred_check
          %p372 = pneg %p214
        $region46: #{forward.4} parent=35 // pred_check_branch
          %374 = sbr.rel (%p372) target = $region48
        $region47: #{forward.4} parent=35 // pred_region
          %s375 = sand.u32 %s23, 1
          %s376 = scalar_lea.sflag [#allocation12], %s375
          %s377 = sand.u32 %s204, 1
          %s378 = smul.addr %s377, 32
          %s379 = scalar_lea.vmem [#allocation11], %s378
          %s380 = smul.u32 2, %s30
          %s382 = ssub.s32 512, 512
          %383 = vsyncadd %s376, %s382
          %s384 = smul.addr %s380, 128
          %s385 = scalar_lea.hbm %s7, %s384
          %s386 = sshll.u32 %s379, 4
          %s387 = int_to_ptr.vmem [resolvable:$true] %s386
          %392 = dma.hbm_to_vmem [thread:$0]  %s385, 512, %s387, %s376, 2048, 256, 16
        $region48: #{forward.4} parent=35 // pred_fallthru
          _
        // Predicated region
        $region49: #{forward.4} parent=35 // pred_check
          %p393 = pneg %p240
        $region50: #{forward.4} parent=35 // pred_check_branch
          %395 = sbr.rel (%p393) target = $region52
        $region51: #{forward.4} parent=35 // pred_region
          %s396 = sand.u32 %s23, 1
          %s397 = scalar_lea.sflag [#allocation12], %s396
          %s398 = sand.u32 %s230, 1
          %s399 = smul.addr %s398, 2
          %s400 = scalar_lea.vmem [#allocation13], %s399
          %s401 = smul.u32 2, %s30
          %s403 = ssub.s32 32, 32
          %404 = vsyncadd %s397, %s403
          %s405 = smul.addr %s401, 16
          %s406 = scalar_lea.hbm %s8, %s405
          %s408 = sshll.u32 %s400, 4
          %s409 = int_to_ptr.vmem [resolvable:$true] %s408
          %411 = dma.hbm_to_vmem [thread:$0]  %s406, 32, %s409, %s397
        $region52: #{forward.4} parent=35 // pred_fallthru
          _
      $region36: #{forward.4} parent=5 // pred_fallthru
        _
      %p412 = scmp.le.s32.totalorder 1, %s23
      %p413 = scmp.lt.s32.totalorder %s23, 33
      %p414 = pnand %p412, %p413
      %p415 = pneg %p414
      // Predicated region
      $region53: #{forward.4} parent=5 // pred_check
        _
      $region54: #{forward.4} parent=5 // pred_check_branch
        %417 = sbr.rel (%p414) target = $region56
      $region55: #{forward.4} parent=5 // pred_region
        %s418 = ssub.s32 %s23, 1
        %s419 = sand.u32 %s76, 1
        %s420 = scalar_lea.sflag [#allocation4], %s419
        %s421 = sand.u32 %s76, 1
        %s422 = smul.addr %s421, 512
        %s423 = scalar_lea.vmem [#allocation3], %s422
        // Predicated region
        $region57: #{forward.4} parent=55 // pred_check
          %p424 = pneg %p89
        $region58: #{forward.4} parent=55 // pred_check_branch
          %426 = sbr.rel (%p424) target = $region60
        $region59: #{forward.4} parent=55 // pred_region
          %427 = dma.done %s420, 8192
        $region60: #{forward.4} parent=55 // pred_fallthru
          _
        // Predicated region
        $region61: #{forward.4} parent=55 // pred_check
          %p428 = pneg %p131
        $region62: #{forward.4} parent=55 // pred_check_branch
          %430 = sbr.rel (%p428) target = $region64
        $region63: #{forward.4} parent=55 // pred_region
          %431 = dma.done [#allocation6], 16
        $region64: #{forward.4} parent=55 // pred_fallthru
          _
        // Predicated region
        $region65: #{forward.4} parent=55 // pred_check
          %p432 = pneg %p152
        $region66: #{forward.4} parent=55 // pred_check_branch
          %434 = sbr.rel (%p432) target = $region68
        $region67: #{forward.4} parent=55 // pred_region
          %435 = dma.done [#allocation6], 16
        $region68: #{forward.4} parent=55 // pred_fallthru
          _
        // Predicated region
        $region69: #{forward.4} parent=55 // pred_check
          %p436 = pneg %p173
        $region70: #{forward.4} parent=55 // pred_check_branch
          %438 = sbr.rel (%p436) target = $region72
        $region71: #{forward.4} parent=55 // pred_region
          %439 = dma.done [#allocation9], 256
        $region72: #{forward.4} parent=55 // pred_fallthru
          _
        // Predicated region
        $region73: #{forward.4} parent=55 // pred_check
          %p440 = pneg %p194
        $region74: #{forward.4} parent=55 // pred_check_branch
          %442 = sbr.rel (%p440) target = $region76
        $region75: #{forward.4} parent=55 // pred_region
          %443 = dma.done [#allocation9], 16
        $region76: #{forward.4} parent=55 // pred_fallthru
          _
        %s444 = sand.u32 %s28, 1
        %s445 = scalar_lea.sflag [#allocation12], %s444
        %s446 = sand.u32 %s207, 1
        %s447 = smul.addr %s446, 32
        %s448 = scalar_lea.vmem [#allocation11], %s447
        // Predicated region
        $region77: #{forward.4} parent=55 // pred_check
          %p449 = pneg %p220
        $region78: #{forward.4} parent=55 // pred_check_branch
          %451 = sbr.rel (%p449) target = $region80
        $region79: #{forward.4} parent=55 // pred_region
          %452 = dma.done %s445, 512
        $region80: #{forward.4} parent=55 // pred_fallthru
          _
        %s453 = sand.u32 %s28, 1
        %s454 = scalar_lea.sflag [#allocation12], %s453
        %s455 = sand.u32 %s233, 1
        %s456 = smul.addr %s455, 2
        %s457 = scalar_lea.vmem [#allocation13], %s456
        // Predicated region
        $region81: #{forward.4} parent=55 // pred_check
          %p458 = pneg %p246
        $region82: #{forward.4} parent=55 // pred_check_branch
          %460 = sbr.rel (%p458) target = $region84
        $region83: #{forward.4} parent=55 // pred_region
          %461 = dma.done %s454, 32
        $region84: #{forward.4} parent=55 // pred_fallthru
          _
        %s462 = smul.u32 4, %s33
        %p463 = scmp.lt.s32.totalorder %s462, 15
        %s464 = scalar_select %p463, %s462, 15
        %s465 = scalar_lea.vmem %s0, %s464
        %p466 = pneg %p61
        %p467 = pneg %p58
        %s468 = sand.u32 %s76, 1
        %s469 = scalar_lea.sflag [#allocation4], %s468
        %s470 = sand.u32 %s76, 1
        %s471 = smul.addr %s470, 512
        %s472 = scalar_lea.vmem [#allocation3], %s471
        %p473 = pneg %p89
        %p474 = pneg %p86
        %p475 = pneg %p110
        %p476 = pneg %p107
        %p477 = pneg %p131
        %p478 = pneg %p128
        %p479 = pneg %p152
        %p480 = pneg %p149
        %p481 = pneg %p173
        %p482 = pneg %p170
        %p483 = pneg %p194
        %p484 = pneg %p191
        %s485 = sand.u32 %s28, 1
        %s486 = scalar_lea.sflag [#allocation12], %s485
        %s487 = sand.u32 %s207, 1
        %s488 = smul.addr %s487, 32
        %s489 = scalar_lea.vmem [#allocation11], %s488
        %p490 = pneg %p220
        %p491 = pneg %p217
        %s492 = sand.u32 %s28, 1
        %s493 = scalar_lea.sflag [#allocation12], %s492
        %s494 = sand.u32 %s233, 1
        %s495 = smul.addr %s494, 2
        %s496 = scalar_lea.vmem [#allocation13], %s495
        %p497 = pneg %p246
        %p498 = pneg %p243
        %p499 = pneg %p272
        %p500 = pneg %p269
        %s501 = smul.u32 2, %s32
        %p502 = scmp.lt.s32.totalorder %s501, 15
        %s503 = scalar_select %p502, %s501, 15
        %s504 = scalar_lea.vmem %s9, %s503
        %s505 = smul.u32 4, %s33
        %p506 = scmp.lt.s32.totalorder %s505, 15
        %s507 = scalar_select %p506, %s505, 15
        %s508 = scalar_lea.vmem %s0, %s507
        %s509 = smul.u32 4, %s33
        %s510 = smul.u32 64, %s33
        %s511 = smul.u32 2, %s32
        %s512 = smul.u32 2, %s32
        %s513 = smul.u32 2, %s32
        %s514 = smul.u32 2, %s32
        %p515 = scmp.lt.s32.totalorder %s514, 15
        %s516 = scalar_select %p515, %s514, 15
        %s517 = scalar_lea.vmem %s9, %s516
        %s518 = smul.u32 2, %s32
        %p519 = scmp.eq.s32.totalorder %s33, 0
        // Predicated region
        $region85: #{forward.4} parent=55 // pred_check
          %p520 = pneg %p519
        $region86: #{forward.4} parent=55 // pred_check_branch
          %522 = sbr.rel (%p520) target = $region88
        $region87: #{forward.4} parent=55 // pred_region
          %523 = vst [vmem:[#allocation2] sm:$0xf] 0.0
        $region88: #{forward.4} parent=55 // pred_fallthru
          _
        %v524 = vld [vmem:[#allocation2] sm:$0xf]
        %v525 = vld [vmem:[%s508] sm:$0xf]
        %v526 = vld [vmem:[%s423] sm:$0xff]
        %v527 = vld [vmem:[%s423 + $0x8] sm:$0xff]
        %v528 = vld [vmem:[%s423 + $0x10] sm:$0xff]
        %v529 = vld [vmem:[%s423 + $0x18] sm:$0xff]
        %v530 = vld [vmem:[%s423 + $0x20] sm:$0xff]
        %v531 = vld [vmem:[%s423 + $0x28] sm:$0xff]
        %v532 = vld [vmem:[%s423 + $0x30] sm:$0xff]
        %v533 = vld [vmem:[%s423 + $0x38] sm:$0xff]
        %v534 = vld [vmem:[%s423 + $0x40] sm:$0xff]
        %v535 = vld [vmem:[%s423 + $0x48] sm:$0xff]
        %v536 = vld [vmem:[%s423 + $0x50] sm:$0xff]
        %v537 = vld [vmem:[%s423 + $0x58] sm:$0xff]
        %v538 = vld [vmem:[%s423 + $0x60] sm:$0xff]
        %v539 = vld [vmem:[%s423 + $0x68] sm:$0xff]
        %v540 = vld [vmem:[%s423 + $0x70] sm:$0xff]
        %v541 = vld [vmem:[%s423 + $0x78] sm:$0xff]
        %v542 = vld [vmem:[%s423 + $0x80] sm:$0xff]
        %v543 = vld [vmem:[%s423 + $0x88] sm:$0xff]
        %v544 = vld [vmem:[%s423 + $0x90] sm:$0xff]
        %v545 = vld [vmem:[%s423 + $0x98] sm:$0xff]
        %v546 = vld [vmem:[%s423 + $0xa0] sm:$0xff]
        %v547 = vld [vmem:[%s423 + $0xa8] sm:$0xff]
        %v548 = vld [vmem:[%s423 + $0xb0] sm:$0xff]
        %v549 = vld [vmem:[%s423 + $0xb8] sm:$0xff]
        %v550 = vld [vmem:[%s423 + $0xc0] sm:$0xff]
        %v551 = vld [vmem:[%s423 + $0xc8] sm:$0xff]
        %v552 = vld [vmem:[%s423 + $0xd0] sm:$0xff]
        %v553 = vld [vmem:[%s423 + $0xd8] sm:$0xff]
        %v554 = vld [vmem:[%s423 + $0xe0] sm:$0xff]
        %v555 = vld [vmem:[%s423 + $0xe8] sm:$0xff]
        %v556 = vld [vmem:[%s423 + $0xf0] sm:$0xff]
        %v557 = vld [vmem:[%s423 + $0xf8] sm:$0xff]
        %v558 = vld [vmem:[%s423 + $0x100] sm:$0xff]
        %v559 = vld [vmem:[%s423 + $0x108] sm:$0xff]
        %v560 = vld [vmem:[%s423 + $0x110] sm:$0xff]
        %v561 = vld [vmem:[%s423 + $0x118] sm:$0xff]
        %v562 = vld [vmem:[%s423 + $0x120] sm:$0xff]
        %v563 = vld [vmem:[%s423 + $0x128] sm:$0xff]
        %v564 = vld [vmem:[%s423 + $0x130] sm:$0xff]
        %v565 = vld [vmem:[%s423 + $0x138] sm:$0xff]
        %v566 = vld [vmem:[%s423 + $0x140] sm:$0xff]
        %v567 = vld [vmem:[%s423 + $0x148] sm:$0xff]
        %v568 = vld [vmem:[%s423 + $0x150] sm:$0xff]
        %v569 = vld [vmem:[%s423 + $0x158] sm:$0xff]
        %v570 = vld [vmem:[%s423 + $0x160] sm:$0xff]
        %v571 = vld [vmem:[%s423 + $0x168] sm:$0xff]
        %v572 = vld [vmem:[%s423 + $0x170] sm:$0xff]
        %v573 = vld [vmem:[%s423 + $0x178] sm:$0xff]
        %v574 = vld [vmem:[%s423 + $0x180] sm:$0xff]
        %v575 = vld [vmem:[%s423 + $0x188] sm:$0xff]
        %v576 = vld [vmem:[%s423 + $0x190] sm:$0xff]
        %v577 = vld [vmem:[%s423 + $0x198] sm:$0xff]
        %v578 = vld [vmem:[%s423 + $0x1a0] sm:$0xff]
        %v579 = vld [vmem:[%s423 + $0x1a8] sm:$0xff]
        %v580 = vld [vmem:[%s423 + $0x1b0] sm:$0xff]
        %v581 = vld [vmem:[%s423 + $0x1b8] sm:$0xff]
        %v582 = vld [vmem:[%s423 + $0x1c0] sm:$0xff]
        %v583 = vld [vmem:[%s423 + $0x1c8] sm:$0xff]
        %v584 = vld [vmem:[%s423 + $0x1d0] sm:$0xff]
        %v585 = vld [vmem:[%s423 + $0x1d8] sm:$0xff]
        %v586 = vld [vmem:[%s423 + $0x1e0] sm:$0xff]
        %v587 = vld [vmem:[%s423 + $0x1e8] sm:$0xff]
        %v588 = vld [vmem:[%s423 + $0x1f0] sm:$0xff]
        %v589 = vld [vmem:[%s423 + $0x1f8] sm:$0xff]
        %v592 = vunpack.c.l.s4 1966171168
        %v593 = vunpack.c.0.s8 %v592
        %v594 = vlaneseq
        %v595 = vshrl.u32 %v594, 7
        %v596 = vsub.s32 %v593, %v595
        %v597 = vrot.slane %v525, %v596
        %v598 = vcombine.high %v597, %v597
        %v600 = vunpack.c.l.s4 1966171168
        %v601 = vunpack.c.0.s8 %v600
        %v602 = vlaneseq
        %v603 = vshrl.u32 %v602, 7
        %v604 = vsub.s32 %v601, %v603
        %v605 = vrot.slane %v597, %v604
        %v607 = vunpack.c.l.s4 1966171168
        %v608 = vunpack.c.0.s8 %v607
        %v609 = vlaneseq
        %v610 = vshrl.u32 %v609, 7
        %v611 = vsub.s32 %v608, %v610
        %v612 = vrot.slane %v598, %v611
        %v613 = vcombine.high %v605, %v605
        %v614 = vcombine.high %v612, %v612
        %v683 = vunpack.c.l.b16 %v526
        %v684 = vunpack.c.h.b16 %v526
        %v685 = vunpack.c.l.b16 %v527
        %v686 = vunpack.c.h.b16 %v527
        %v687 = vunpack.c.l.b16 %v528
        %v688 = vunpack.c.h.b16 %v528
        %v689 = vunpack.c.l.b16 %v529
        %v690 = vunpack.c.h.b16 %v529
        %v691 = vunpack.c.l.b16 %v530
        %v692 = vunpack.c.h.b16 %v530
        %v693 = vunpack.c.l.b16 %v531
        %v694 = vunpack.c.h.b16 %v531
        %v695 = vunpack.c.l.b16 %v532
        %v696 = vunpack.c.h.b16 %v532
        %v697 = vunpack.c.l.b16 %v533
        %v698 = vunpack.c.h.b16 %v533
        %v699 = vunpack.c.l.b16 %v534
        %v700 = vunpack.c.h.b16 %v534
        %v701 = vunpack.c.l.b16 %v535
        %v702 = vunpack.c.h.b16 %v535
        %v703 = vunpack.c.l.b16 %v536
        %v704 = vunpack.c.h.b16 %v536
        %v705 = vunpack.c.l.b16 %v537
        %v706 = vunpack.c.h.b16 %v537
        %v707 = vunpack.c.l.b16 %v538
        %v708 = vunpack.c.h.b16 %v538
        %v709 = vunpack.c.l.b16 %v539
        %v710 = vunpack.c.h.b16 %v539
        %v711 = vunpack.c.l.b16 %v540
        %v712 = vunpack.c.h.b16 %v540
        %v713 = vunpack.c.l.b16 %v541
        %v714 = vunpack.c.h.b16 %v541
        %v715 = vunpack.c.l.b16 %v542
        %v716 = vunpack.c.h.b16 %v542
        %v717 = vunpack.c.l.b16 %v543
        %v718 = vunpack.c.h.b16 %v543
        %v719 = vunpack.c.l.b16 %v544
        %v720 = vunpack.c.h.b16 %v544
        %v721 = vunpack.c.l.b16 %v545
        %v722 = vunpack.c.h.b16 %v545
        %v723 = vunpack.c.l.b16 %v546
        %v724 = vunpack.c.h.b16 %v546
        %v725 = vunpack.c.l.b16 %v547
        %v726 = vunpack.c.h.b16 %v547
        %v727 = vunpack.c.l.b16 %v548
        %v728 = vunpack.c.h.b16 %v548
        %v729 = vunpack.c.l.b16 %v549
        %v730 = vunpack.c.h.b16 %v549
        %v731 = vunpack.c.l.b16 %v550
        %v732 = vunpack.c.h.b16 %v550
        %v733 = vunpack.c.l.b16 %v551
        %v734 = vunpack.c.h.b16 %v551
        %v735 = vunpack.c.l.b16 %v552
        %v736 = vunpack.c.h.b16 %v552
        %v737 = vunpack.c.l.b16 %v553
        %v738 = vunpack.c.h.b16 %v553
        %v739 = vunpack.c.l.b16 %v554
        %v740 = vunpack.c.h.b16 %v554
        %v741 = vunpack.c.l.b16 %v555
        %v742 = vunpack.c.h.b16 %v555
        %v743 = vunpack.c.l.b16 %v556
        %v744 = vunpack.c.h.b16 %v556
        %v745 = vunpack.c.l.b16 %v557
        %v746 = vunpack.c.h.b16 %v557
        %v747 = vunpack.c.l.b16 %v558
        %v748 = vunpack.c.h.b16 %v558
        %v749 = vunpack.c.l.b16 %v559
        %v750 = vunpack.c.h.b16 %v559
        %v751 = vunpack.c.l.b16 %v560
        %v752 = vunpack.c.h.b16 %v560
        %v753 = vunpack.c.l.b16 %v561
        %v754 = vunpack.c.h.b16 %v561
        %v755 = vunpack.c.l.b16 %v562
        %v756 = vunpack.c.h.b16 %v562
        %v757 = vunpack.c.l.b16 %v563
        %v758 = vunpack.c.h.b16 %v563
        %v759 = vunpack.c.l.b16 %v564
        %v760 = vunpack.c.h.b16 %v564
        %v761 = vunpack.c.l.b16 %v565
        %v762 = vunpack.c.h.b16 %v565
        %v763 = vunpack.c.l.b16 %v566
        %v764 = vunpack.c.h.b16 %v566
        %v765 = vunpack.c.l.b16 %v567
        %v766 = vunpack.c.h.b16 %v567
        %v767 = vunpack.c.l.b16 %v568
        %v768 = vunpack.c.h.b16 %v568
        %v769 = vunpack.c.l.b16 %v569
        %v770 = vunpack.c.h.b16 %v569
        %v771 = vunpack.c.l.b16 %v570
        %v772 = vunpack.c.h.b16 %v570
        %v773 = vunpack.c.l.b16 %v571
        %v774 = vunpack.c.h.b16 %v571
        %v775 = vunpack.c.l.b16 %v572
        %v776 = vunpack.c.h.b16 %v572
        %v777 = vunpack.c.l.b16 %v573
        %v778 = vunpack.c.h.b16 %v573
        %v779 = vunpack.c.l.b16 %v574
        %v780 = vunpack.c.h.b16 %v574
        %v781 = vunpack.c.l.b16 %v575
        %v782 = vunpack.c.h.b16 %v575
        %v783 = vunpack.c.l.b16 %v576
        %v784 = vunpack.c.h.b16 %v576
        %v785 = vunpack.c.l.b16 %v577
        %v786 = vunpack.c.h.b16 %v577
        %v787 = vunpack.c.l.b16 %v578
        %v788 = vunpack.c.h.b16 %v578
        %v789 = vunpack.c.l.b16 %v579
        %v790 = vunpack.c.h.b16 %v579
        %v791 = vunpack.c.l.b16 %v580
        %v792 = vunpack.c.h.b16 %v580
        %v793 = vunpack.c.l.b16 %v581
        %v794 = vunpack.c.h.b16 %v581
        %v795 = vunpack.c.l.b16 %v582
        %v796 = vunpack.c.h.b16 %v582
        %v797 = vunpack.c.l.b16 %v583
        %v798 = vunpack.c.h.b16 %v583
        %v799 = vunpack.c.l.b16 %v584
        %v800 = vunpack.c.h.b16 %v584
        %v801 = vunpack.c.l.b16 %v585
        %v802 = vunpack.c.h.b16 %v585
        %v803 = vunpack.c.l.b16 %v586
        %v804 = vunpack.c.h.b16 %v586
        %v805 = vunpack.c.l.b16 %v587
        %v806 = vunpack.c.h.b16 %v587
        %v807 = vunpack.c.l.b16 %v588
        %v808 = vunpack.c.h.b16 %v588
        %v809 = vunpack.c.l.b16 %v589
        %v810 = vunpack.c.h.b16 %v589
        %v811 = vpack.c.b16 %v685, %v683
        %v812 = vpack.c.b16 %v686, %v684
        %v813 = vpack.c.b16 %v689, %v687
        %v814 = vpack.c.b16 %v690, %v688
        %v815 = vpack.c.b16 %v693, %v691
        %v816 = vpack.c.b16 %v694, %v692
        %v817 = vpack.c.b16 %v697, %v695
        %v818 = vpack.c.b16 %v698, %v696
        %v819 = vpack.c.b16 %v701, %v699
        %v820 = vpack.c.b16 %v702, %v700
        %v821 = vpack.c.b16 %v705, %v703
        %v822 = vpack.c.b16 %v706, %v704
        %v823 = vpack.c.b16 %v709, %v707
        %v824 = vpack.c.b16 %v710, %v708
        %v825 = vpack.c.b16 %v713, %v711
        %v826 = vpack.c.b16 %v714, %v712
        %v827 = vpack.c.b16 %v717, %v715
        %v828 = vpack.c.b16 %v718, %v716
        %v829 = vpack.c.b16 %v721, %v719
        %v830 = vpack.c.b16 %v722, %v720
        %v831 = vpack.c.b16 %v725, %v723
        %v832 = vpack.c.b16 %v726, %v724
        %v833 = vpack.c.b16 %v729, %v727
        %v834 = vpack.c.b16 %v730, %v728
        %v835 = vpack.c.b16 %v733, %v731
        %v836 = vpack.c.b16 %v734, %v732
        %v837 = vpack.c.b16 %v737, %v735
        %v838 = vpack.c.b16 %v738, %v736
        %v839 = vpack.c.b16 %v741, %v739
        %v840 = vpack.c.b16 %v742, %v740
        %v841 = vpack.c.b16 %v745, %v743
        %v842 = vpack.c.b16 %v746, %v744
        %v843 = vpack.c.b16 %v749, %v747
        %v844 = vpack.c.b16 %v750, %v748
        %v845 = vpack.c.b16 %v753, %v751
        %v846 = vpack.c.b16 %v754, %v752
        %v847 = vpack.c.b16 %v757, %v755
        %v848 = vpack.c.b16 %v758, %v756
        %v849 = vpack.c.b16 %v761, %v759
        %v850 = vpack.c.b16 %v762, %v760
        %v851 = vpack.c.b16 %v765, %v763
        %v852 = vpack.c.b16 %v766, %v764
        %v853 = vpack.c.b16 %v769, %v767
        %v854 = vpack.c.b16 %v770, %v768
        %v855 = vpack.c.b16 %v773, %v771
        %v856 = vpack.c.b16 %v774, %v772
        %v857 = vpack.c.b16 %v777, %v775
        %v858 = vpack.c.b16 %v778, %v776
        %v859 = vpack.c.b16 %v781, %v779
        %v860 = vpack.c.b16 %v782, %v780
        %v861 = vpack.c.b16 %v785, %v783
        %v862 = vpack.c.b16 %v786, %v784
        %v863 = vpack.c.b16 %v789, %v787
        %v864 = vpack.c.b16 %v790, %v788
        %v865 = vpack.c.b16 %v793, %v791
        %v866 = vpack.c.b16 %v794, %v792
        %v867 = vpack.c.b16 %v797, %v795
        %v868 = vpack.c.b16 %v798, %v796
        %v869 = vpack.c.b16 %v801, %v799
        %v870 = vpack.c.b16 %v802, %v800
        %v871 = vpack.c.b16 %v805, %v803
        %v872 = vpack.c.b16 %v806, %v804
        %v873 = vpack.c.b16 %v809, %v807
        %v874 = vpack.c.b16 %v810, %v808
        %939 = vmatprep.subr.bf16.mxu0 %v826
        %940 = vmatpush1.bf16.msra.mxu0 %v825
        %941 = vmatprep.subr.bf16.mxu0 %v824
        %942 = vmatpush1.bf16.msra.mxu0 %v823
        %943 = vmatprep.subr.bf16.mxu0 %v822
        %944 = vmatpush1.bf16.msra.mxu0 %v821
        %945 = vmatprep.subr.bf16.mxu0 %v820
        %946 = vmatpush1.bf16.msra.mxu0 %v819
        %947 = vmatprep.subr.bf16.mxu0 %v818
        %948 = vmatpush1.bf16.msra.mxu0 %v817
        %949 = vmatprep.subr.bf16.mxu0 %v816
        %950 = vmatpush1.bf16.msra.mxu0 %v815
        %951 = vmatprep.subr.bf16.mxu0 %v814
        %952 = vmatpush1.bf16.msra.mxu0 %v813
        %953 = vmatprep.subr.bf16.mxu0 %v812
        %954 = vmatpush1.bf16.msra.mxu0 %v811
        %955 = vmatprep.subr.bf16.mxu0 %v842
        %956 = vmatpush2.bf16.msra.mxu0 %v841
        %957 = vmatprep.subr.bf16.mxu0 %v840
        %958 = vmatpush2.bf16.msra.mxu0 %v839
        %959 = vmatprep.subr.bf16.mxu0 %v838
        %960 = vmatpush2.bf16.msra.mxu0 %v837
        %961 = vmatprep.subr.bf16.mxu0 %v836
        %962 = vmatpush2.bf16.msra.mxu0 %v835
        %963 = vmatprep.subr.bf16.mxu0 %v834
        %964 = vmatpush2.bf16.msra.mxu0 %v833
        %965 = vmatprep.subr.bf16.mxu0 %v832
        %966 = vmatpush2.bf16.msra.mxu0 %v831
        %967 = vmatprep.subr.bf16.mxu0 %v830
        %968 = vmatpush2.bf16.msra.mxu0 %v829
        %969 = vmatprep.subr.bf16.mxu0 %v828
        %970 = vmatpush2.bf16.msra.mxu0 %v827
        %971 = vmatprep.mubr.bf16.mxu0 %v612
        %972 = vmatmul.mubr.bf16.gmra.mxu0 %v605
        %v973 = vpop.f32.mrf.mxu0
        %v974 = vadd.f32 0.0, %v973
        %v975 = vpop.f32.mrf.mxu0
        %v976 = vadd.f32 0.0, %v975
        %v977 = vpop.f32.mrf.mxu0
        %v978 = vpop.f32.mrf.mxu0
        %979 = vdwg.mxu0
        %980 = vmatprep.subr.bf16.mxu0 %v858
        %981 = vmatpush1.bf16.msra.mxu0 %v857
        %982 = vmatprep.subr.bf16.mxu0 %v856
        %983 = vmatpush1.bf16.msra.mxu0 %v855
        %984 = vmatprep.subr.bf16.mxu0 %v854
        %985 = vmatpush1.bf16.msra.mxu0 %v853
        %986 = vmatprep.subr.bf16.mxu0 %v852
        %987 = vmatpush1.bf16.msra.mxu0 %v851
        %988 = vmatprep.subr.bf16.mxu0 %v850
        %989 = vmatpush1.bf16.msra.mxu0 %v849
        %990 = vmatprep.subr.bf16.mxu0 %v848
        %991 = vmatpush1.bf16.msra.mxu0 %v847
        %992 = vmatprep.subr.bf16.mxu0 %v846
        %993 = vmatpush1.bf16.msra.mxu0 %v845
        %994 = vmatprep.subr.bf16.mxu0 %v844
        %995 = vmatpush1.bf16.msra.mxu0 %v843
        %996 = vmatprep.subr.bf16.mxu0 %v874
        %997 = vmatpush2.bf16.msra.mxu0 %v873
        %998 = vmatprep.subr.bf16.mxu0 %v872
        %999 = vmatpush2.bf16.msra.mxu0 %v871
        %1000 = vmatprep.subr.bf16.mxu0 %v870
        %1001 = vmatpush2.bf16.msra.mxu0 %v869
        %1002 = vmatprep.subr.bf16.mxu0 %v868
        %1003 = vmatpush2.bf16.msra.mxu0 %v867
        %1004 = vmatprep.subr.bf16.mxu0 %v866
        %1005 = vmatpush2.bf16.msra.mxu0 %v865
        %1006 = vmatprep.subr.bf16.mxu0 %v864
        %1007 = vmatpush2.bf16.msra.mxu0 %v863
        %1008 = vmatprep.subr.bf16.mxu0 %v862
        %1009 = vmatpush2.bf16.msra.mxu0 %v861
        %1010 = vmatprep.subr.bf16.mxu0 %v860
        %1011 = vmatpush2.bf16.msra.mxu0 %v859
        %1012 = vmatprep.mubr.bf16.mxu0 %v614
        %1013 = vmatmul.mubr.bf16.gmra.mxu0 %v613
        %v1014 = vpop.f32.mrf.mxu0
        %v1015 = vadd.f32 %v974, %v1014
        %v1016 = vpop.f32.mrf.mxu0
        %v1017 = vadd.f32 %v976, %v1016
        %v1018 = vpop.f32.mrf.mxu0
        %v1019 = vpop.f32.mrf.mxu0
        %1020 = vdwg.mxu0
        %v1023 = vcombine.low %v1015, %v1017
        %v1025 = vunpack.c.l.s4 1983009808
        %v1026 = vunpack.c.0.s8 %v1025
        %v1027 = vlaneseq
        %v1028 = vshrl.u32 %v1027, 7
        %v1029 = vsub.s32 %v1026, %v1028
        %v1030 = vrot.slane %v1023, %v1029
        %v1032 = vadd.f32 %v524, %v1030
        %1033 = vst [vmem:[#allocation2] sm:$0xf] %v1032
        %p1034 = scmp.eq.s32.totalorder %s33, 3
        // Predicated region
        $region89: #{forward.4} parent=55 // pred_check
          %p1035 = pneg %p1034
        $region90: #{forward.4} parent=55 // pred_check_branch
          %1037 = sbr.rel (%p1035) target = $region92
        $region91: #{forward.4} parent=55 // pred_region
          %v1038 = vld [vmem:[%s2] sm:$0x3]
          %v1039 = vld [vmem:[#allocation5] sm:$0x1]
          %1041 = vset.pattern.permute.xlu0 0
          %1042 = vperm.xlu0 %1041, %v1038
          %v1043 = vpop.permute.xlu0 %1042
          %v1046 = vlaneseq
          %v1047 = vshrl.u32 %v1046, 7
          %v1048 = vsub.s32 0, %v1047
          %v1049 = vrot.slane %v1039, %v1048
          %v1051 = vmul.f32 %v1043, %v1049
          %v1052 = vld [vmem:[#allocation7] sm:$0x1]
          %v1054 = vlaneseq
          %v1055 = vshrl.u32 %v1054, 7
          %v1056 = vsub.s32 0, %v1055
          %v1057 = vrot.slane %v1052, %v1056
          %v1059 = vadd.f32 %v1051, %v1057
          %v1060 = vmax.f32 %v1059, 0.0
          %v1061 = vld [vmem:[#allocation8] sm:$0xff]
          %v1062 = vld [vmem:[#allocation8 + $0x8] sm:$0xff]
          %v1063 = vld [vmem:[#allocation10] sm:$0x1]
          %v1065 = vlaneseq
          %v1066 = vshrl.u32 %v1065, 7
          %v1067 = vsub.s32 0, %v1066
          %v1068 = vrot.slane %v1063, %v1067
          %vm1070 = vcmask 130048
          %v1072 = vsel %vm1070, %v1060, 0
          %1074 = vmatprep.subr.mxu0 0.0
          %1075 = vmatpush1.msra.mxu0 0.0
          %1076 = vmatprep.subr.mxu0 0.0
          %1077 = vmatpush1.msra.mxu0 0.0
          %1078 = vmatprep.subr.mxu0 0.0
          %1079 = vmatpush1.msra.mxu0 0.0
          %1080 = vmatprep.subr.mxu0 0.0
          %1081 = vmatpush1.msra.mxu0 0.0
          %1082 = vmatprep.subr.mxu0 0.0
          %1083 = vmatpush1.msra.mxu0 0.0
          %1084 = vmatprep.subr.mxu0 0.0
          %1085 = vmatpush1.msra.mxu0 0.0
          %1086 = vmatprep.subr.mxu0 0.0
          %1087 = vmatpush1.msra.mxu0 0.0
          %1088 = vmatprep.subr.mxu0 0.0
          %1089 = vmatpush1.msra.mxu0 0.0
          %1090 = vmatprep.subr.mxu0 0.0
          %1091 = vmatpush1.msra.mxu0 0.0
          %1092 = vmatprep.subr.mxu0 0.0
          %1093 = vmatpush1.msra.mxu0 0.0
          %1094 = vmatprep.subr.mxu0 0.0
          %1095 = vmatpush1.msra.mxu0 0.0
          %1096 = vmatprep.subr.mxu0 0.0
          %1097 = vmatpush1.msra.mxu0 0.0
          %1098 = vmatprep.subr.mxu0 0.0
          %1099 = vmatpush1.msra.mxu0 0.0
          %1100 = vmatprep.subr.mxu0 0.0
          %1101 = vmatpush1.msra.mxu0 0.0
          %1102 = vmatprep.subr.mxu0 0.0
          %1103 = vmatpush1.msra.mxu0 %v1062
          %1104 = vmatprep.subr.mxu0 0.0
          %1105 = vmatpush1.msra.mxu0 %v1061
          %1106 = vmatprep.subr.mxu0 0.0
          %1107 = vmatpush2.msra.mxu0 0.0
          %1108 = vmatprep.subr.mxu0 0.0
          %1109 = vmatpush2.msra.mxu0 0.0
          %1110 = vmatprep.subr.mxu0 0.0
          %1111 = vmatpush2.msra.mxu0 0.0
          %1112 = vmatprep.subr.mxu0 0.0
          %1113 = vmatpush2.msra.mxu0 0.0
          %1114 = vmatprep.subr.mxu0 0.0
          %1115 = vmatpush2.msra.mxu0 0.0
          %1116 = vmatprep.subr.mxu0 0.0
          %1117 = vmatpush2.msra.mxu0 0.0
          %1118 = vmatprep.subr.mxu0 0.0
          %1119 = vmatpush2.msra.mxu0 0.0
          %1120 = vmatprep.subr.mxu0 0.0
          %1121 = vmatpush2.msra.mxu0 0.0
          %1122 = vmatprep.subr.mxu0 0.0
          %1123 = vmatpush2.msra.mxu0 0.0
          %1124 = vmatprep.subr.mxu0 0.0
          %1125 = vmatpush2.msra.mxu0 0.0
          %1126 = vmatprep.subr.mxu0 0.0
          %1127 = vmatpush2.msra.mxu0 0.0
          %1128 = vmatprep.subr.mxu0 0.0
          %1129 = vmatpush2.msra.mxu0 0.0
          %1130 = vmatprep.subr.mxu0 0.0
          %1131 = vmatpush2.msra.mxu0 0.0
          %1132 = vmatprep.subr.mxu0 0.0
          %1133 = vmatpush2.msra.mxu0 0.0
          %1134 = vmatprep.subr.mxu0 0.0
          %1135 = vmatpush2.msra.mxu0 0.0
          %1136 = vmatprep.subr.mxu0 0.0
          %1137 = vmatpush2.msra.mxu0 0.0
          %1138 = vmatprep.mubr.f32.mxu0 0.0
          %1139 = vmatmul.mubr.f32.gmra.mxu0 %v1072
          %v1140 = vpop.f32.mrf.mxu0
          %v1141 = vadd.f32 %v1068, %v1140
          %v1142 = vpop.f32.mrf.mxu0
          %1143 = vdwg.mxu0
          %v1144 = vmax.f32 %v1141, 0.0
          %v1145 = vld [vmem:[#allocation2] sm:$0xf]
          %v1146 = vld [vmem:[%s448] sm:$0xff]
          %v1147 = vld [vmem:[%s448 + $0x8] sm:$0xff]
          %v1148 = vld [vmem:[%s448 + $0x10] sm:$0xff]
          %v1149 = vld [vmem:[%s448 + $0x18] sm:$0xff]
          %v1151 = vsel %vm1070, %v1144, 0
          %1153 = vmatprep.subr.mxu0 0.0
          %1154 = vmatpush1.msra.mxu0 0.0
          %1155 = vmatprep.subr.mxu0 0.0
          %1156 = vmatpush1.msra.mxu0 0.0
          %1157 = vmatprep.subr.mxu0 0.0
          %1158 = vmatpush1.msra.mxu0 0.0
          %1159 = vmatprep.subr.mxu0 0.0
          %1160 = vmatpush1.msra.mxu0 0.0
          %1161 = vmatprep.subr.mxu0 0.0
          %1162 = vmatpush1.msra.mxu0 0.0
          %1163 = vmatprep.subr.mxu0 0.0
          %1164 = vmatpush1.msra.mxu0 0.0
          %1165 = vmatprep.subr.mxu0 0.0
          %1166 = vmatpush1.msra.mxu0 0.0
          %1167 = vmatprep.subr.mxu0 0.0
          %1168 = vmatpush1.msra.mxu0 0.0
          %1169 = vmatprep.subr.mxu0 0.0
          %1170 = vmatpush1.msra.mxu0 0.0
          %1171 = vmatprep.subr.mxu0 0.0
          %1172 = vmatpush1.msra.mxu0 0.0
          %1173 = vmatprep.subr.mxu0 0.0
          %1174 = vmatpush1.msra.mxu0 0.0
          %1175 = vmatprep.subr.mxu0 0.0
          %1176 = vmatpush1.msra.mxu0 0.0
          %1177 = vmatprep.subr.mxu0 0.0
          %1178 = vmatpush1.msra.mxu0 0.0
          %1179 = vmatprep.subr.mxu0 0.0
          %1180 = vmatpush1.msra.mxu0 0.0
          %1181 = vmatprep.subr.mxu0 %v1149
          %1182 = vmatpush1.msra.mxu0 %v1148
          %1183 = vmatprep.subr.mxu0 %v1147
          %1184 = vmatpush1.msra.mxu0 %v1146
          %1185 = vmatprep.subr.mxu0 0.0
          %1186 = vmatpush2.msra.mxu0 0.0
          %1187 = vmatprep.subr.mxu0 0.0
          %1188 = vmatpush2.msra.mxu0 0.0
          %1189 = vmatprep.subr.mxu0 0.0
          %1190 = vmatpush2.msra.mxu0 0.0
          %1191 = vmatprep.subr.mxu0 0.0
          %1192 = vmatpush2.msra.mxu0 0.0
          %1193 = vmatprep.subr.mxu0 0.0
          %1194 = vmatpush2.msra.mxu0 0.0
          %1195 = vmatprep.subr.mxu0 0.0
          %1196 = vmatpush2.msra.mxu0 0.0
          %1197 = vmatprep.subr.mxu0 0.0
          %1198 = vmatpush2.msra.mxu0 0.0
          %1199 = vmatprep.subr.mxu0 0.0
          %1200 = vmatpush2.msra.mxu0 0.0
          %1201 = vmatprep.subr.mxu0 0.0
          %1202 = vmatpush2.msra.mxu0 0.0
          %1203 = vmatprep.subr.mxu0 0.0
          %1204 = vmatpush2.msra.mxu0 0.0
          %1205 = vmatprep.subr.mxu0 0.0
          %1206 = vmatpush2.msra.mxu0 0.0
          %1207 = vmatprep.subr.mxu0 0.0
          %1208 = vmatpush2.msra.mxu0 0.0
          %1209 = vmatprep.subr.mxu0 0.0
          %1210 = vmatpush2.msra.mxu0 0.0
          %1211 = vmatprep.subr.mxu0 0.0
          %1212 = vmatpush2.msra.mxu0 0.0
          %1213 = vmatprep.subr.mxu0 0.0
          %1214 = vmatpush2.msra.mxu0 0.0
          %1215 = vmatprep.subr.mxu0 0.0
          %1216 = vmatpush2.msra.mxu0 0.0
          %1217 = vmatprep.mubr.f32.mxu0 0.0
          %1218 = vmatmul.mubr.f32.gmra.mxu0 %v1151
          %v1219 = vpop.f32.mrf.mxu0
          %v1220 = vadd.f32 0.0, %v1219
          %v1221 = vpop.f32.mrf.mxu0
          %v1222 = vadd.f32 0.0, %v1221
          %1223 = vdwg.mxu0
          %v1226 = vcombine.low %v1220, %v1222
          %v1228 = vunpack.c.l.s4 1983009808
          %v1229 = vunpack.c.0.s8 %v1228
          %v1230 = vlaneseq
          %v1231 = vshrl.u32 %v1230, 7
          %v1232 = vsub.s32 %v1229, %v1231
          %v1233 = vrot.slane %v1226, %v1232
          %v1235 = vadd.f32 %v1145, %v1233
          %v1236 = vld [vmem:[%s457] sm:$0x3]
          %v1238 = vlaneseq
          %v1239 = vshrl.u32 %v1238, 7
          %v1240 = vsub.s32 0, %v1239
          %v1241 = vrot.slane %v1236, %v1240
          %v1242 = vlaneseq
          %v1243 = vshrl.u32 %v1242, 7
          %v1244 = vsub.s32 1, %v1243
          %v1245 = vrot.slane %v1236, %v1244
          %v1246 = vcombine.low %v1241, %v1245
          %v1248 = vunpack.c.l.s4 1983009808
          %v1249 = vunpack.c.0.s8 %v1248
          %v1250 = vlaneseq
          %v1251 = vshrl.u32 %v1250, 7
          %v1252 = vsub.s32 %v1249, %v1251
          %v1253 = vrot.slane %v1246, %v1252
          %v1255 = vadd.f32 %v1235, %v1253
          %v1258 = vunpack.c.l.s4 1983009808
          %v1259 = vunpack.c.0.s8 %v1258
          %v1260 = vlaneseq
          %v1261 = vshrl.u32 %v1260, 7
          %v1262 = vsub.s32 %v1259, %v1261
          %v1263 = vrot.slane %v1255, %v1262
          %v1264 = vcombine.high %v1263, %v1263
          %v1267 = vpack.c.bf16 %v1263, %v1263
          %v1268 = vpack.c.bf16 %v1264, %v1264
          %v1271 = vcombine.low %v1267, %v1268
          %v1273 = vunpack.c.l.s4 1966171168
          %v1274 = vunpack.c.0.s8 %v1273
          %v1275 = vlaneseq
          %v1276 = vshrl.u32 %v1275, 7
          %v1277 = vsub.s32 %v1274, %v1276
          %v1278 = vrot.slane %v1271, %v1277
          %v1280 = vunpack.c.l.s4 1966171168
          %v1281 = vunpack.c.0.s8 %v1280
          %v1282 = vlaneseq
          %v1283 = vshrl.u32 %v1282, 7
          %v1284 = vsub.s32 %v1281, %v1283
          %v1285 = vrot.slane %v1278, %v1284
          %1287 = vst [vmem:[%s517] sm:$0x3] %v1285
        $region92: #{forward.4} parent=55 // pred_fallthru
          _
        %s1288 = smul.u32 2, %s32
        %p1289 = scmp.lt.s32.totalorder %s1288, 15
        %s1290 = scalar_select %p1289, %s1288, 15
        %s1291 = scalar_lea.vmem %s9, %s1290
        // Predicated region
        $region93: #{forward.4} parent=55 // pred_check
          %p1292 = pneg %p269
        $region94: #{forward.4} parent=55 // pred_check_branch
          %1294 = sbr.rel (%p1292) target = $region96
        $region95: #{forward.4} parent=55 // pred_region
          %s1295 = smul.u32 2, %s32
        $region96: #{forward.4} parent=55 // pred_fallthru
          _
      $region56: #{forward.4} parent=5 // pred_fallthru
        _
      %p1296 = scmp.le.s32.totalorder 2, %s23
      // Predicated region
      $region97: #{forward.4} parent=5 // pred_check
        %p1297 = pneg %p1296
      $region98: #{forward.4} parent=5 // pred_check_branch
        %1299 = sbr.rel (%p1297) target = $region100
      $region99: #{forward.4} parent=5 // pred_region
        %s1300 = ssub.s32 %s23, 2
        // Predicated region
        $region101: #{forward.4} parent=99 // pred_check
          %p1301 = pneg %p275
        $region102: #{forward.4} parent=99 // pred_check_branch
          %1303 = sbr.rel (%p1301) target = $region104
        $region103: #{forward.4} parent=99 // pred_region
          %s1304 = smul.u32 2, %s34
          %p1305 = scmp.lt.s32.totalorder %s1304, 15
          %s1306 = scalar_select %p1305, %s1304, 15
          %s1307 = scalar_lea.vmem %s9, %s1306
        $region104: #{forward.4} parent=99 // pred_fallthru
          _
      $region100: #{forward.4} parent=5 // pred_fallthru
        _
    $region6: #{forward.4} parent=1 // loop_footer
      %s27 = sadd.s32 1, %s23
    $region7: #{forward.4} parent=1 // loop_footer_branch
      %22 = sbr.rel target = $region3
    $region8: #{forward.4} parent=1 // loop_exit
      _
    %1308 = vsyncpa [#allocation4], 1
    %s1309 = scalar_lea.sflag [#allocation4], 1
    %1310 = vsyncpa %s1309, 1
    %1311 = vsyncpa [#allocation6], 1
    %1312 = vsyncpa [#allocation9], 1
    %1313 = vsyncpa [#allocation12], 1
    %s1314 = scalar_lea.sflag [#allocation12], 1
    %1315 = vsyncpa %s1314, 1

// kernel: forward.5
$region0: #{forward.5}
  #allocation0 [shape = 'u32[]', space=smem, size = 0x4, offset = 0x4, fixed_abs, tag = 'smem constant byte address 0x4 - core index']
  #allocation1 [shape = 'u32[144,128]{1,0:T(1,128)}', space=vmem, size = 0x12000, scoped, tag = 'internal scratch']
  #allocation2 [shape = 'bf16[216,512]{1,0:T(8,128)(2,1)}', space=vmem, size = 0x36000, scoped, tag = 'scratch operand']
  %s0 = inlined_call_operand.vmem [shape: bf16[2,2,8,734], index: 0, kind: input, shape index: {}]
  %s1 = inlined_call_operand.vmem [shape: bf16[8,216], index: 1, kind: input, shape index: {}]
  %s2 = inlined_call_operand.vmem [shape: f32[8,1], index: 2, kind: input, shape index: {}]
  %s3 = inlined_call_operand.vmem [shape: bf16[2,8,1024], index: 3, kind: output, shape index: {}]
  %s4 = sld [smem:[#allocation0]]
  $region45: #{forward.5} parent=0
    _
  %s6 = ssub.s32 1, %s4
  %s7 = scalar_select 0, %s6, %s4
  loop: start=0, step=1, limit=6
  $region2: #{forward.5} parent=0 // loop_pre_header
    _
  $region3: #{forward.5} parent=0 // loop_header
    %s9 = sphi 0, %s13
    %p10 = scmp.ge.s32.totalorder %s9, 6
    %s16 = sphi 0, %s28
    %s17 = sphi 0, %s24
    %s18 = sphi 0, %s16
    %s19 = sphi 0, %s17
    %s20 = sphi 0, %s18
    %s21 = sphi 0, %s19
    %s33 = sphi 0, %s35
    %s36 = sphi 0, %s33
    %s37 = sphi 0, %s36
    %s53 = sphi 0, %s37
    %s57 = sphi 0, %s57
    %s59 = sphi 0, %s57
    %s60 = sphi 0, %s59
    %s74 = sphi 0, %s60
    %s78 = sphi 0, %s78
    %s80 = sphi 0, %s78
    %s81 = sphi 0, %s80
    %s95 = sphi 0, %s81
    %s103 = sphi 0, %s105
    %s106 = sphi 0, %s103
    %s107 = sphi 0, %s106
    %s123 = sphi 0, %s107
  $region4: #{forward.5} parent=0 // loop_header_branch
    %12 = sbr.rel (%p10) target = $region8
  $region5: #{forward.5} parent=0 // loop_body
    %s14 = ssub.s32 %s9, 1
    %s15 = ssub.s32 %s9, 2
    %s22 = sadd.s32 1, %s17
    %p23 = scmp.ge.s32.totalorder %s22, 2
    %s24 = scalar_select %p23, 0, %s22
    %s25 = sadd.s32 1, %s16
    %s26 = scalar_select %p23, %s25, %s16
    %p27 = scmp.ge.s32.totalorder %s26, 2
    %s28 = scalar_select %p27, 0, %s26
    %s29 = ssub.s32 %s16, %s28
    %s30 = ssub.s32 %s17, %s24
    %s31 = sor.u32 %s29, %s30
    %p32 = scmp.eq.s32.totalorder %s31, 0
    %s34 = sadd.s32 %s33, 1
    %s35 = scalar_select %p32, %s33, %s34
    %p38 = pneg %p32
    %p39 = scmp.eq.s32.totalorder %s9, 3
    %p40 = por %p38, %p39
    %p41 = scmp.ne.s32.totalorder %s33, %s36
    %p42 = scmp.eq.s32.totalorder %s9, 0
    %p43 = por %p41, %p42
    %p44 = scmp.ne.s32.totalorder %s33, %s36
    %p45 = scmp.eq.s32.totalorder %s14, 3
    %p46 = por %p44, %p45
    %p47 = scmp.ne.s32.totalorder %s36, %s37
    %p48 = scmp.eq.s32.totalorder %s14, 0
    %p49 = por %p47, %p48
    %p50 = scmp.ne.s32.totalorder %s36, %s37
    %p51 = scmp.eq.s32.totalorder %s15, 3
    %p52 = por %p50, %p51
    %p54 = scmp.ne.s32.totalorder %s37, %s53
    %p55 = scmp.eq.s32.totalorder %s15, 0
    %p56 = por %p54, %p55
    %s58 = sadd.s32 %s57, 1
    %p61 = scmp.eq.s32.totalorder %s9, 3
    %p62 = scmp.ne.s32.totalorder %s57, %s59
    %p63 = scmp.eq.s32.totalorder %s9, 0
    %p64 = por %p62, %p63
    %p65 = scmp.ne.s32.totalorder %s57, %s59
    %p66 = scmp.eq.s32.totalorder %s14, 3
    %p67 = por %p65, %p66
    %p68 = scmp.ne.s32.totalorder %s59, %s60
    %p69 = scmp.eq.s32.totalorder %s14, 0
    %p70 = por %p68, %p69
    %p71 = scmp.ne.s32.totalorder %s59, %s60
    %p72 = scmp.eq.s32.totalorder %s15, 3
    %p73 = por %p71, %p72
    %p75 = scmp.ne.s32.totalorder %s60, %s74
    %p76 = scmp.eq.s32.totalorder %s15, 0
    %p77 = por %p75, %p76
    %s79 = sadd.s32 %s78, 1
    %p82 = scmp.eq.s32.totalorder %s9, 3
    %p83 = scmp.ne.s32.totalorder %s78, %s80
    %p84 = scmp.eq.s32.totalorder %s9, 0
    %p85 = por %p83, %p84
    %p86 = scmp.ne.s32.totalorder %s78, %s80
    %p87 = scmp.eq.s32.totalorder %s14, 3
    %p88 = por %p86, %p87
    %p89 = scmp.ne.s32.totalorder %s80, %s81
    %p90 = scmp.eq.s32.totalorder %s14, 0
    %p91 = por %p89, %p90
    %p92 = scmp.ne.s32.totalorder %s80, %s81
    %p93 = scmp.eq.s32.totalorder %s15, 3
    %p94 = por %p92, %p93
    %p96 = scmp.ne.s32.totalorder %s81, %s95
    %p97 = scmp.eq.s32.totalorder %s15, 0
    %p98 = por %p96, %p97
    %s99 = ssub.s32 %s16, %s28
    %s100 = ssub.s32 %s17, %s24
    %s101 = sor.u32 %s99, %s100
    %p102 = scmp.eq.s32.totalorder %s101, 0
    %s104 = sadd.s32 %s103, 1
    %s105 = scalar_select %p102, %s103, %s104
    %p108 = pneg %p102
    %p109 = scmp.eq.s32.totalorder %s9, 3
    %p110 = por %p108, %p109
    %p111 = scmp.ne.s32.totalorder %s103, %s106
    %p112 = scmp.eq.s32.totalorder %s9, 0
    %p113 = por %p111, %p112
    %p114 = scmp.ne.s32.totalorder %s103, %s106
    %p115 = scmp.eq.s32.totalorder %s14, 3
    %p116 = por %p114, %p115
    %p117 = scmp.ne.s32.totalorder %s106, %s107
    %p118 = scmp.eq.s32.totalorder %s14, 0
    %p119 = por %p117, %p118
    %p120 = scmp.ne.s32.totalorder %s106, %s107
    %p121 = scmp.eq.s32.totalorder %s15, 3
    %p122 = por %p120, %p121
    %p124 = scmp.ne.s32.totalorder %s107, %s123
    %p125 = scmp.eq.s32.totalorder %s15, 0
    %p126 = por %p124, %p125
    %p127 = scmp.le.s32.totalorder 1, %s9
    %p128 = scmp.lt.s32.totalorder %s9, 5
    %p129 = pnand %p127, %p128
    %p130 = pneg %p129
    // Predicated region
    $region9: #{forward.5} parent=5 // pred_check
      _
    $region10: #{forward.5} parent=5 // pred_check_branch
      %132 = sbr.rel (%p129) target = $region12
    $region11: #{forward.5} parent=5 // pred_region
      %s133 = ssub.s32 %s9, 1
      // Predicated region
      $region13: #{forward.5} parent=11 // pred_check
        %p134 = pneg %p70
      $region14: #{forward.5} parent=11 // pred_check_branch
        %136 = sbr.rel (%p134) target = $region16
      $region15: #{forward.5} parent=11 // pred_region
        _
      $region16: #{forward.5} parent=11 // pred_fallthru
        _
      // Predicated region
      $region17: #{forward.5} parent=11 // pred_check
        %p137 = pneg %p91
      $region18: #{forward.5} parent=11 // pred_check_branch
        %139 = sbr.rel (%p137) target = $region20
      $region19: #{forward.5} parent=11 // pred_region
        _
      $region20: #{forward.5} parent=11 // pred_fallthru
        _
    $region12: #{forward.5} parent=5 // pred_fallthru
      _
    %p140 = scmp.lt.s32.totalorder %s9, 4
    // Predicated region
    $region21: #{forward.5} parent=5 // pred_check
      %p141 = pneg %p140
    $region22: #{forward.5} parent=5 // pred_check_branch
      %143 = sbr.rel (%p141) target = $region24
    $region23: #{forward.5} parent=5 // pred_region
      // Predicated region
      $region25: #{forward.5} parent=23 // pred_check
        %p144 = pneg %p43
      $region26: #{forward.5} parent=23 // pred_check_branch
        %146 = sbr.rel (%p144) target = $region28
      $region27: #{forward.5} parent=23 // pred_region
        %p147 = scmp.lt.s32.totalorder %s16, 1
        %s148 = scalar_select %p147, %s16, 1
        %p149 = scmp.lt.s32.totalorder %s17, 1
        %s150 = scalar_select %p149, %s17, 1
        %s151 = smul.addr %s150, 6
        %s152 = smul.addr %s148, 12
        %s153 = sadd.s32 %s151, %s152
        %s154 = smul.addr %s153, 4
        %s155 = scalar_lea.vmem %s0, %s154
      $region28: #{forward.5} parent=23 // pred_fallthru
        _
    $region24: #{forward.5} parent=5 // pred_fallthru
      _
    %p156 = scmp.le.s32.totalorder 1, %s9
    %p157 = scmp.lt.s32.totalorder %s9, 5
    %p158 = pnand %p156, %p157
    %p159 = pneg %p158
    // Predicated region
    $region29: #{forward.5} parent=5 // pred_check
      _
    $region30: #{forward.5} parent=5 // pred_check_branch
      %161 = sbr.rel (%p158) target = $region32
    $region31: #{forward.5} parent=5 // pred_region
      %s162 = ssub.s32 %s9, 1
      %p163 = scmp.lt.s32.totalorder %s18, 1
      %s164 = scalar_select %p163, %s18, 1
      %p165 = scmp.lt.s32.totalorder %s19, 1
      %s166 = scalar_select %p165, %s19, 1
      %s167 = smul.addr %s166, 6
      %s168 = smul.addr %s164, 12
      %s169 = sadd.s32 %s167, %s168
      %s170 = smul.addr %s169, 4
      %s171 = scalar_lea.vmem %s0, %s170
      %p172 = pneg %p49
      %p173 = pneg %p46
      %p174 = pneg %p70
      %p175 = pneg %p67
      %p176 = pneg %p91
      %p177 = pneg %p88
      %p178 = pneg %p119
      %p179 = pneg %p116
      %s180 = smul.u32 4, %s19
      %p181 = scmp.lt.s32.totalorder %s18, 1
      %s182 = scalar_select %p181, %s18, 1
      %p183 = scmp.lt.s32.totalorder %s180, 7
      %s184 = scalar_select %p183, %s180, 7
      %s185 = smul.addr %s182, 8
      %s186 = sadd.s32 %s184, %s185
      %s187 = smul.addr %s186, 4
      %s188 = scalar_lea.vmem %s3, %s187
      %p189 = scmp.lt.s32.totalorder %s18, 1
      %s190 = scalar_select %p189, %s18, 1
      %p191 = scmp.lt.s32.totalorder %s19, 1
      %s192 = scalar_select %p191, %s19, 1
      %s193 = smul.addr %s192, 6
      %s194 = smul.addr %s190, 12
      %s195 = sadd.s32 %s193, %s194
      %s196 = smul.addr %s195, 4
      %s197 = scalar_lea.vmem %s0, %s196
      %s198 = smul.u32 4, %s19
      %p199 = scmp.lt.s32.totalorder %s18, 1
      %s200 = scalar_select %p199, %s18, 1
      %p201 = scmp.lt.s32.totalorder %s198, 7
      %s202 = scalar_select %p201, %s198, 7
      %s203 = smul.addr %s200, 8
      %s204 = sadd.s32 %s202, %s203
      %s205 = smul.addr %s204, 4
      %s206 = scalar_lea.vmem %s3, %s205
      %s207 = smul.u32 4, %s19
      %v209 = vld [vmem:[%s197] sm:$0xff]
      %v210 = vld [vmem:[%s197 + $0x8] sm:$0xff]
      %v211 = vld [vmem:[%s197 + $0x10] sm:$0xff]
      %212 = vst [vmem:[#allocation2] sm:$0xff] %v209
      %213 = vst [vmem:[#allocation2 + $0x8] sm:$0xff] %v210
      %217 = vrot.lane.b32.xlu0 %v209, 127
      %v218 = vpop.permute.xlu0 %217
      %219 = vrot.lane.b32.xlu0 %v210, 127
      %v220 = vpop.permute.xlu0 %219
      %221 = vrot.lane.b32.xlu0 %v211, 127
      %v222 = vpop.permute.xlu0 %221
      %v223 = vrot.slane %v218, 4
      %v224 = vrot.slane %v220, 4
      %v225 = vrot.slane %v222, 4
      %vm226 = vcmask 1043456
      %v227 = vsel %vm226, %v223, %v224
      %vm228 = vcmask 1039360
      %v229 = vsel %vm228, %v218, %v227
      %v230 = vsel %vm226, %v224, %v225
      %v231 = vsel %vm228, %v220, %v230
      %234 = vst [vmem:[#allocation2 + $0x10] sm:$0xff] %v229
      %235 = vst [vmem:[#allocation2 + $0x18] sm:$0xff] %v231
      %236 = vrot.lane.b32.xlu0 %v209, 126
      %v237 = vpop.permute.xlu0 %236
      %238 = vrot.lane.b32.xlu0 %v210, 126
      %v239 = vpop.permute.xlu0 %238
      %240 = vrot.lane.b32.xlu0 %v211, 126
      %v241 = vpop.permute.xlu0 %240
      %v242 = vrot.slane %v237, 4
      %v243 = vrot.slane %v239, 4
      %v244 = vrot.slane %v241, 4
      %v245 = vsel %vm226, %v242, %v243
      %vm246 = vcmask 1031168
      %v247 = vsel %vm246, %v237, %v245
      %v248 = vsel %vm226, %v243, %v244
      %v249 = vsel %vm246, %v239, %v248
      %252 = vst [vmem:[#allocation2 + $0x20] sm:$0xff] %v247
      %253 = vst [vmem:[#allocation2 + $0x28] sm:$0xff] %v249
      %254 = vrot.lane.b32.xlu0 %v209, 118
      %v255 = vpop.permute.xlu0 %254
      %256 = vrot.lane.b32.xlu0 %v210, 118
      %v257 = vpop.permute.xlu0 %256
      %258 = vrot.lane.b32.xlu0 %v211, 118
      %v259 = vpop.permute.xlu0 %258
      %v260 = vrot.slane %v255, 4
      %v261 = vrot.slane %v257, 4
      %v262 = vrot.slane %v259, 4
      %v263 = vsel %vm226, %v260, %v261
      %vm264 = vcmask 965632
      %v265 = vsel %vm264, %v255, %v263
      %v266 = vsel %vm226, %v261, %v262
      %v267 = vsel %vm264, %v257, %v266
      %270 = vst [vmem:[#allocation2 + $0x30] sm:$0xff] %v265
      %271 = vst [vmem:[#allocation2 + $0x38] sm:$0xff] %v267
      %272 = vrot.lane.b32.xlu0 %v209, 117
      %v273 = vpop.permute.xlu0 %272
      %274 = vrot.lane.b32.xlu0 %v210, 117
      %v275 = vpop.permute.xlu0 %274
      %276 = vrot.lane.b32.xlu0 %v211, 117
      %v277 = vpop.permute.xlu0 %276
      %v278 = vrot.slane %v273, 4
      %v279 = vrot.slane %v275, 4
      %v280 = vrot.slane %v277, 4
      %v281 = vsel %vm226, %v278, %v279
      %vm282 = vcmask 957440
      %v283 = vsel %vm282, %v273, %v281
      %v284 = vsel %vm226, %v279, %v280
      %v285 = vsel %vm282, %v275, %v284
      %288 = vst [vmem:[#allocation2 + $0x40] sm:$0xff] %v283
      %289 = vst [vmem:[#allocation2 + $0x48] sm:$0xff] %v285
      %290 = vrot.lane.b32.xlu0 %v209, 116
      %v291 = vpop.permute.xlu0 %290
      %292 = vrot.lane.b32.xlu0 %v210, 116
      %v293 = vpop.permute.xlu0 %292
      %294 = vrot.lane.b32.xlu0 %v211, 116
      %v295 = vpop.permute.xlu0 %294
      %v296 = vrot.slane %v291, 4
      %v297 = vrot.slane %v293, 4
      %v298 = vrot.slane %v295, 4
      %v299 = vsel %vm226, %v296, %v297
      %vm300 = vcmask 949248
      %v301 = vsel %vm300, %v291, %v299
      %v302 = vsel %vm226, %v297, %v298
      %v303 = vsel %vm300, %v293, %v302
      %306 = vst [vmem:[#allocation2 + $0x50] sm:$0xff] %v301
      %307 = vst [vmem:[#allocation2 + $0x58] sm:$0xff] %v303
      %308 = vrot.lane.b32.xlu0 %v209, 108
      %v309 = vpop.permute.xlu0 %308
      %310 = vrot.lane.b32.xlu0 %v210, 108
      %v311 = vpop.permute.xlu0 %310
      %312 = vrot.lane.b32.xlu0 %v211, 108
      %v313 = vpop.permute.xlu0 %312
      %v314 = vrot.slane %v309, 4
      %v315 = vrot.slane %v311, 4
      %v316 = vrot.slane %v313, 4
      %v317 = vsel %vm226, %v314, %v315
      %vm318 = vcmask 883712
      %v319 = vsel %vm318, %v309, %v317
      %v320 = vsel %vm226, %v315, %v316
      %v321 = vsel %vm318, %v311, %v320
      %324 = vst [vmem:[#allocation2 + $0x60] sm:$0xff] %v319
      %325 = vst [vmem:[#allocation2 + $0x68] sm:$0xff] %v321
      %326 = vrot.lane.b32.xlu0 %v209, 107
      %v327 = vpop.permute.xlu0 %326
      %328 = vrot.lane.b32.xlu0 %v210, 107
      %v329 = vpop.permute.xlu0 %328
      %330 = vrot.lane.b32.xlu0 %v211, 107
      %v331 = vpop.permute.xlu0 %330
      %v332 = vrot.slane %v327, 4
      %v333 = vrot.slane %v329, 4
      %v334 = vrot.slane %v331, 4
      %v335 = vsel %vm226, %v332, %v333
      %vm336 = vcmask 875520
      %v337 = vsel %vm336, %v327, %v335
      %v338 = vsel %vm226, %v333, %v334
      %v339 = vsel %vm336, %v329, %v338
      %342 = vst [vmem:[#allocation2 + $0x70] sm:$0xff] %v337
      %343 = vst [vmem:[#allocation2 + $0x78] sm:$0xff] %v339
      %344 = vrot.lane.b32.xlu0 %v209, 106
      %v345 = vpop.permute.xlu0 %344
      %346 = vrot.lane.b32.xlu0 %v210, 106
      %v347 = vpop.permute.xlu0 %346
      %348 = vrot.lane.b32.xlu0 %v211, 106
      %v349 = vpop.permute.xlu0 %348
      %v350 = vrot.slane %v345, 4
      %v351 = vrot.slane %v347, 4
      %v352 = vrot.slane %v349, 4
      %v353 = vsel %vm226, %v350, %v351
      %vm354 = vcmask 867328
      %v355 = vsel %vm354, %v345, %v353
      %v356 = vsel %vm226, %v351, %v352
      %v357 = vsel %vm354, %v347, %v356
      %360 = vst [vmem:[#allocation2 + $0x80] sm:$0xff] %v355
      %361 = vst [vmem:[#allocation2 + $0x88] sm:$0xff] %v357
      %362 = vrot.lane.b32.xlu0 %v209, 28
      %v363 = vpop.permute.xlu0 %362
      %364 = vrot.lane.b32.xlu0 %v210, 28
      %v365 = vpop.permute.xlu0 %364
      %366 = vrot.lane.b32.xlu0 %v211, 28
      %v367 = vpop.permute.xlu0 %366
      %v368 = vrot.slane %v363, 4
      %v369 = vrot.slane %v365, 4
      %v370 = vrot.slane %v367, 4
      %v371 = vsel %vm226, %v368, %v369
      %vm372 = vcmask 228352
      %v373 = vsel %vm372, %v363, %v371
      %v374 = vsel %vm226, %v369, %v370
      %v375 = vsel %vm372, %v365, %v374
      %378 = vst [vmem:[#allocation2 + $0x90] sm:$0xff] %v373
      %379 = vst [vmem:[#allocation2 + $0x98] sm:$0xff] %v375
      %380 = vrot.lane.b32.xlu0 %v209, 27
      %v381 = vpop.permute.xlu0 %380
      %382 = vrot.lane.b32.xlu0 %v210, 27
      %v383 = vpop.permute.xlu0 %382
      %384 = vrot.lane.b32.xlu0 %v211, 27
      %v385 = vpop.permute.xlu0 %384
      %v386 = vrot.slane %v381, 4
      %v387 = vrot.slane %v383, 4
      %v388 = vrot.slane %v385, 4
      %v389 = vsel %vm226, %v386, %v387
      %vm390 = vcmask 220160
      %v391 = vsel %vm390, %v381, %v389
      %v392 = vsel %vm226, %v387, %v388
      %v393 = vsel %vm390, %v383, %v392
      %396 = vst [vmem:[#allocation2 + $0xa0] sm:$0xff] %v391
      %397 = vst [vmem:[#allocation2 + $0xa8] sm:$0xff] %v393
      %398 = vrot.lane.b32.xlu0 %v209, 26
      %v399 = vpop.permute.xlu0 %398
      %400 = vrot.lane.b32.xlu0 %v210, 26
      %v401 = vpop.permute.xlu0 %400
      %402 = vrot.lane.b32.xlu0 %v211, 26
      %v403 = vpop.permute.xlu0 %402
      %v404 = vrot.slane %v399, 4
      %v405 = vrot.slane %v401, 4
      %v406 = vrot.slane %v403, 4
      %v407 = vsel %vm226, %v404, %v405
      %vm408 = vcmask 211968
      %v409 = vsel %vm408, %v399, %v407
      %v410 = vsel %vm226, %v405, %v406
      %v411 = vsel %vm408, %v401, %v410
      %414 = vst [vmem:[#allocation2 + $0xb0] sm:$0xff] %v409
      %415 = vst [vmem:[#allocation2 + $0xb8] sm:$0xff] %v411
      %416 = vrot.lane.b32.xlu0 %v209, 18
      %v417 = vpop.permute.xlu0 %416
      %418 = vrot.lane.b32.xlu0 %v210, 18
      %v419 = vpop.permute.xlu0 %418
      %420 = vrot.lane.b32.xlu0 %v211, 18
      %v421 = vpop.permute.xlu0 %420
      %v422 = vrot.slane %v417, 4
      %v423 = vrot.slane %v419, 4
      %v424 = vrot.slane %v421, 4
      %v425 = vsel %vm226, %v422, %v423
      %vm426 = vcmask 146432
      %v427 = vsel %vm426, %v417, %v425
      %v428 = vsel %vm226, %v423, %v424
      %v429 = vsel %vm426, %v419, %v428
      %432 = vst [vmem:[#allocation2 + $0xc0] sm:$0xff] %v427
      %433 = vst [vmem:[#allocation2 + $0xc8] sm:$0xff] %v429
      %434 = vrot.lane.b32.xlu0 %v209, 17
      %v435 = vpop.permute.xlu0 %434
      %436 = vrot.lane.b32.xlu0 %v210, 17
      %v437 = vpop.permute.xlu0 %436
      %438 = vrot.lane.b32.xlu0 %v211, 17
      %v439 = vpop.permute.xlu0 %438
      %v440 = vrot.slane %v435, 4
      %v441 = vrot.slane %v437, 4
      %v442 = vrot.slane %v439, 4
      %v443 = vsel %vm226, %v440, %v441
      %vm444 = vcmask 138240
      %v445 = vsel %vm444, %v435, %v443
      %v446 = vsel %vm226, %v441, %v442
      %v447 = vsel %vm444, %v437, %v446
      %450 = vst [vmem:[#allocation2 + $0xd0] sm:$0xff] %v445
      %451 = vst [vmem:[#allocation2 + $0xd8] sm:$0xff] %v447
      %452 = vrot.lane.b32.xlu0 %v209, 16
      %v453 = vpop.permute.xlu0 %452
      %454 = vrot.lane.b32.xlu0 %v210, 16
      %v455 = vpop.permute.xlu0 %454
      %456 = vrot.lane.b32.xlu0 %v211, 16
      %v457 = vpop.permute.xlu0 %456
      %v458 = vrot.slane %v453, 4
      %v459 = vrot.slane %v455, 4
      %v460 = vrot.slane %v457, 4
      %v461 = vsel %vm226, %v458, %v459
      %vm462 = vcmask 130048
      %v463 = vsel %vm462, %v453, %v461
      %v464 = vsel %vm226, %v459, %v460
      %v465 = vsel %vm462, %v455, %v464
      %468 = vst [vmem:[#allocation2 + $0xe0] sm:$0xff] %v463
      %469 = vst [vmem:[#allocation2 + $0xe8] sm:$0xff] %v465
      %470 = vrot.lane.b32.xlu0 %v209, 8
      %v471 = vpop.permute.xlu0 %470
      %472 = vrot.lane.b32.xlu0 %v210, 8
      %v473 = vpop.permute.xlu0 %472
      %474 = vrot.lane.b32.xlu0 %v211, 8
      %v475 = vpop.permute.xlu0 %474
      %v476 = vrot.slane %v471, 4
      %v477 = vrot.slane %v473, 4
      %v478 = vrot.slane %v475, 4
      %v479 = vsel %vm226, %v476, %v477
      %vm480 = vcmask 64512
      %v481 = vsel %vm480, %v471, %v479
      %v482 = vsel %vm226, %v477, %v478
      %v483 = vsel %vm480, %v473, %v482
      %486 = vst [vmem:[#allocation2 + $0xf0] sm:$0xff] %v481
      %487 = vst [vmem:[#allocation2 + $0xf8] sm:$0xff] %v483
      %488 = vrot.lane.b32.xlu0 %v209, 7
      %v489 = vpop.permute.xlu0 %488
      %490 = vrot.lane.b32.xlu0 %v210, 7
      %v491 = vpop.permute.xlu0 %490
      %492 = vrot.lane.b32.xlu0 %v211, 7
      %v493 = vpop.permute.xlu0 %492
      %v494 = vrot.slane %v489, 4
      %v495 = vrot.slane %v491, 4
      %v496 = vrot.slane %v493, 4
      %v497 = vsel %vm226, %v494, %v495
      %vm498 = vcmask 56320
      %v499 = vsel %vm498, %v489, %v497
      %v500 = vsel %vm226, %v495, %v496
      %v501 = vsel %vm498, %v491, %v500
      %504 = vst [vmem:[#allocation2 + $0x100] sm:$0xff] %v499
      %505 = vst [vmem:[#allocation2 + $0x108] sm:$0xff] %v501
      %506 = vrot.lane.b32.xlu0 %v209, 6
      %v507 = vpop.permute.xlu0 %506
      %508 = vrot.lane.b32.xlu0 %v210, 6
      %v509 = vpop.permute.xlu0 %508
      %510 = vrot.lane.b32.xlu0 %v211, 6
      %v511 = vpop.permute.xlu0 %510
      %v512 = vrot.slane %v507, 4
      %v513 = vrot.slane %v509, 4
      %v514 = vrot.slane %v511, 4
      %v515 = vsel %vm226, %v512, %v513
      %vm516 = vcmask 48128
      %v517 = vsel %vm516, %v507, %v515
      %v518 = vsel %vm226, %v513, %v514
      %v519 = vsel %vm516, %v509, %v518
      %522 = vst [vmem:[#allocation2 + $0x110] sm:$0xff] %v517
      %523 = vst [vmem:[#allocation2 + $0x118] sm:$0xff] %v519
      %524 = vrot.lane.b32.xlu0 %v209, 56
      %v525 = vpop.permute.xlu0 %524
      %526 = vrot.lane.b32.xlu0 %v210, 56
      %v527 = vpop.permute.xlu0 %526
      %528 = vrot.lane.b32.xlu0 %v211, 56
      %v529 = vpop.permute.xlu0 %528
      %v530 = vrot.slane %v525, 4
      %v531 = vrot.slane %v527, 4
      %v532 = vrot.slane %v529, 4
      %v533 = vsel %vm226, %v530, %v531
      %vm534 = vcmask 457728
      %v535 = vsel %vm534, %v533, %v527
      %v536 = vsel %vm226, %v531, %v532
      %v537 = vsel %vm534, %v536, %v529
      %540 = vst [vmem:[#allocation2 + $0x120] sm:$0xff] %v535
      %541 = vst [vmem:[#allocation2 + $0x128] sm:$0xff] %v537
      %542 = vrot.lane.b32.xlu0 %v209, 55
      %v543 = vpop.permute.xlu0 %542
      %544 = vrot.lane.b32.xlu0 %v210, 55
      %v545 = vpop.permute.xlu0 %544
      %546 = vrot.lane.b32.xlu0 %v211, 55
      %v547 = vpop.permute.xlu0 %546
      %v548 = vrot.slane %v543, 4
      %v549 = vrot.slane %v545, 4
      %v550 = vrot.slane %v547, 4
      %v551 = vsel %vm226, %v548, %v549
      %vm552 = vcmask 449536
      %v553 = vsel %vm552, %v551, %v545
      %v554 = vsel %vm226, %v549, %v550
      %v555 = vsel %vm552, %v554, %v547
      %558 = vst [vmem:[#allocation2 + $0x130] sm:$0xff] %v553
      %559 = vst [vmem:[#allocation2 + $0x138] sm:$0xff] %v555
      %560 = vrot.lane.b32.xlu0 %v209, 54
      %v561 = vpop.permute.xlu0 %560
      %562 = vrot.lane.b32.xlu0 %v210, 54
      %v563 = vpop.permute.xlu0 %562
      %564 = vrot.lane.b32.xlu0 %v211, 54
      %v565 = vpop.permute.xlu0 %564
      %v566 = vrot.slane %v561, 4
      %v567 = vrot.slane %v563, 4
      %v568 = vrot.slane %v565, 4
      %v569 = vsel %vm226, %v566, %v567
      %vm570 = vcmask 441344
      %v571 = vsel %vm570, %v569, %v563
      %v572 = vsel %vm226, %v567, %v568
      %v573 = vsel %vm570, %v572, %v565
      %576 = vst [vmem:[#allocation2 + $0x140] sm:$0xff] %v571
      %577 = vst [vmem:[#allocation2 + $0x148] sm:$0xff] %v573
      %578 = vrot.lane.b32.xlu0 %v209, 46
      %v579 = vpop.permute.xlu0 %578
      %580 = vrot.lane.b32.xlu0 %v210, 46
      %v581 = vpop.permute.xlu0 %580
      %582 = vrot.lane.b32.xlu0 %v211, 46
      %v583 = vpop.permute.xlu0 %582
      %v584 = vrot.slane %v579, 4
      %v585 = vrot.slane %v581, 4
      %v586 = vrot.slane %v583, 4
      %v587 = vsel %vm226, %v584, %v585
      %vm588 = vcmask 375808
      %v589 = vsel %vm588, %v587, %v581
      %v590 = vsel %vm226, %v585, %v586
      %v591 = vsel %vm588, %v590, %v583
      %594 = vst [vmem:[#allocation2 + $0x150] sm:$0xff] %v589
      %595 = vst [vmem:[#allocation2 + $0x158] sm:$0xff] %v591
      %596 = vrot.lane.b32.xlu0 %v209, 45
      %v597 = vpop.permute.xlu0 %596
      %598 = vrot.lane.b32.xlu0 %v210, 45
      %v599 = vpop.permute.xlu0 %598
      %600 = vrot.lane.b32.xlu0 %v211, 45
      %v601 = vpop.permute.xlu0 %600
      %v602 = vrot.slane %v597, 4
      %v603 = vrot.slane %v599, 4
      %v604 = vrot.slane %v601, 4
      %v605 = vsel %vm226, %v602, %v603
      %vm606 = vcmask 367616
      %v607 = vsel %vm606, %v605, %v599
      %v608 = vsel %vm226, %v603, %v604
      %v609 = vsel %vm606, %v608, %v601
      %612 = vst [vmem:[#allocation2 + $0x160] sm:$0xff] %v607
      %613 = vst [vmem:[#allocation2 + $0x168] sm:$0xff] %v609
      %614 = vrot.lane.b32.xlu0 %v209, 44
      %v615 = vpop.permute.xlu0 %614
      %616 = vrot.lane.b32.xlu0 %v210, 44
      %v617 = vpop.permute.xlu0 %616
      %618 = vrot.lane.b32.xlu0 %v211, 44
      %v619 = vpop.permute.xlu0 %618
      %v620 = vrot.slane %v615, 4
      %v621 = vrot.slane %v617, 4
      %v622 = vrot.slane %v619, 4
      %v623 = vsel %vm226, %v620, %v621
      %vm624 = vcmask 359424
      %v625 = vsel %vm624, %v623, %v617
      %v626 = vsel %vm226, %v621, %v622
      %v627 = vsel %vm624, %v626, %v619
      %630 = vst [vmem:[#allocation2 + $0x170] sm:$0xff] %v625
      %631 = vst [vmem:[#allocation2 + $0x178] sm:$0xff] %v627
      %632 = vrot.lane.b32.xlu0 %v209, 36
      %v633 = vpop.permute.xlu0 %632
      %634 = vrot.lane.b32.xlu0 %v210, 36
      %v635 = vpop.permute.xlu0 %634
      %636 = vrot.lane.b32.xlu0 %v211, 36
      %v637 = vpop.permute.xlu0 %636
      %v638 = vrot.slane %v633, 4
      %v639 = vrot.slane %v635, 4
      %v640 = vrot.slane %v637, 4
      %v641 = vsel %vm226, %v638, %v639
      %vm642 = vcmask 293888
      %v643 = vsel %vm642, %v641, %v635
      %v644 = vsel %vm226, %v639, %v640
      %v645 = vsel %vm642, %v644, %v637
      %648 = vst [vmem:[#allocation2 + $0x180] sm:$0xff] %v643
      %649 = vst [vmem:[#allocation2 + $0x188] sm:$0xff] %v645
      %650 = vrot.lane.b32.xlu0 %v209, 35
      %v651 = vpop.permute.xlu0 %650
      %652 = vrot.lane.b32.xlu0 %v210, 35
      %v653 = vpop.permute.xlu0 %652
      %654 = vrot.lane.b32.xlu0 %v211, 35
      %v655 = vpop.permute.xlu0 %654
      %v656 = vrot.slane %v651, 4
      %v657 = vrot.slane %v653, 4
      %v658 = vrot.slane %v655, 4
      %v659 = vsel %vm226, %v656, %v657
      %vm660 = vcmask 285696
      %v661 = vsel %vm660, %v659, %v653
      %v662 = vsel %vm226, %v657, %v658
      %v663 = vsel %vm660, %v662, %v655
      %666 = vst [vmem:[#allocation2 + $0x190] sm:$0xff] %v661
      %667 = vst [vmem:[#allocation2 + $0x198] sm:$0xff] %v663
      %668 = vrot.lane.b32.xlu0 %v209, 34
      %v669 = vpop.permute.xlu0 %668
      %670 = vrot.lane.b32.xlu0 %v210, 34
      %v671 = vpop.permute.xlu0 %670
      %672 = vrot.lane.b32.xlu0 %v211, 34
      %v673 = vpop.permute.xlu0 %672
      %v674 = vrot.slane %v669, 4
      %v675 = vrot.slane %v671, 4
      %v676 = vrot.slane %v673, 4
      %v677 = vsel %vm226, %v674, %v675
      %vm678 = vcmask 277504
      %v679 = vsel %vm678, %v677, %v671
      %v680 = vsel %vm226, %v675, %v676
      %v681 = vsel %vm678, %v680, %v673
      %684 = vst [vmem:[#allocation2 + $0x1a0] sm:$0xff] %v679
      %685 = vst [vmem:[#allocation2 + $0x1a8] sm:$0xff] %v681
      %v686 = vld [vmem:[%s1] sm:$0xff]
      %v687 = vld [vmem:[#allocation2] sm:$0xff]
      %v688 = vld [vmem:[#allocation2 + $0x8] sm:$0xff]
      %v689 = vld [vmem:[#allocation2 + $0x10] sm:$0xff]
      %v690 = vld [vmem:[#allocation2 + $0x18] sm:$0xff]
      %v691 = vld [vmem:[#allocation2 + $0x20] sm:$0xff]
      %v692 = vld [vmem:[#allocation2 + $0x28] sm:$0xff]
      %v693 = vld [vmem:[#allocation2 + $0x30] sm:$0xff]
      %v694 = vld [vmem:[#allocation2 + $0x38] sm:$0xff]
      %v695 = vld [vmem:[#allocation2 + $0x40] sm:$0xff]
      %v696 = vld [vmem:[#allocation2 + $0x48] sm:$0xff]
      %v697 = vld [vmem:[#allocation2 + $0x50] sm:$0xff]
      %v698 = vld [vmem:[#allocation2 + $0x58] sm:$0xff]
      %v699 = vld [vmem:[#allocation2 + $0x60] sm:$0xff]
      %v700 = vld [vmem:[#allocation2 + $0x68] sm:$0xff]
      %v701 = vld [vmem:[#allocation2 + $0x70] sm:$0xff]
      %v702 = vld [vmem:[#allocation2 + $0x78] sm:$0xff]
      %v703 = vld [vmem:[#allocation2 + $0x80] sm:$0xff]
      %v704 = vld [vmem:[#allocation2 + $0x88] sm:$0xff]
      %v705 = vld [vmem:[#allocation2 + $0x90] sm:$0xff]
      %v706 = vld [vmem:[#allocation2 + $0x98] sm:$0xff]
      %v707 = vld [vmem:[#allocation2 + $0xa0] sm:$0xff]
      %v708 = vld [vmem:[#allocation2 + $0xa8] sm:$0xff]
      %v709 = vld [vmem:[#allocation2 + $0xb0] sm:$0xff]
      %v710 = vld [vmem:[#allocation2 + $0xb8] sm:$0xff]
      %v711 = vld [vmem:[#allocation2 + $0xc0] sm:$0xff]
      %v712 = vld [vmem:[#allocation2 + $0xc8] sm:$0xff]
      %v713 = vld [vmem:[#allocation2 + $0xd0] sm:$0xff]
      %v714 = vld [vmem:[#allocation2 + $0xd8] sm:$0xff]
      %v715 = vld [vmem:[#allocation2 + $0xe0] sm:$0xff]
      %v716 = vld [vmem:[#allocation2 + $0xe8] sm:$0xff]
      %v717 = vld [vmem:[#allocation2 + $0xf0] sm:$0xff]
      %v718 = vld [vmem:[#allocation2 + $0xf8] sm:$0xff]
      %v719 = vld [vmem:[#allocation2 + $0x100] sm:$0xff]
      %v720 = vld [vmem:[#allocation2 + $0x108] sm:$0xff]
      %v721 = vld [vmem:[#allocation2 + $0x110] sm:$0xff]
      %v722 = vld [vmem:[#allocation2 + $0x118] sm:$0xff]
      %v723 = vld [vmem:[#allocation2 + $0x120] sm:$0xff]
      %v724 = vld [vmem:[#allocation2 + $0x128] sm:$0xff]
      %v725 = vld [vmem:[#allocation2 + $0x130] sm:$0xff]
      %v726 = vld [vmem:[#allocation2 + $0x138] sm:$0xff]
      %v727 = vld [vmem:[#allocation2 + $0x140] sm:$0xff]
      %v728 = vld [vmem:[#allocation2 + $0x148] sm:$0xff]
      %v729 = vld [vmem:[#allocation2 + $0x150] sm:$0xff]
      %v730 = vld [vmem:[#allocation2 + $0x158] sm:$0xff]
      %v731 = vld [vmem:[#allocation2 + $0x160] sm:$0xff]
      %v732 = vld [vmem:[#allocation2 + $0x168] sm:$0xff]
      %v733 = vld [vmem:[#allocation2 + $0x170] sm:$0xff]
      %v734 = vld [vmem:[#allocation2 + $0x178] sm:$0xff]
      %v735 = vld [vmem:[#allocation2 + $0x180] sm:$0xff]
      %v736 = vld [vmem:[#allocation2 + $0x188] sm:$0xff]
      %v737 = vld [vmem:[#allocation2 + $0x190] sm:$0xff]
      %v738 = vld [vmem:[#allocation2 + $0x198] sm:$0xff]
      %v739 = vld [vmem:[#allocation2 + $0x1a0] sm:$0xff]
      %v740 = vld [vmem:[#allocation2 + $0x1a8] sm:$0xff]
      %v741 = vld [vmem:[%s2] sm:$0xff]
      %743 = vset.pattern.permute.xlu0 0
      %744 = vperm.xlu0 %743, %v741
      %v745 = vpop.permute.xlu0 %744
      %v748 = vunpack.c.l.b16 %v686
      %v749 = vunpack.c.h.b16 %v686
      %v750 = vpack.c.b16 %v748, %v748
      %v751 = vpack.c.b16 %v749, %v749
      %v807 = vunpack.c.l.b16 %v687
      %v808 = vunpack.c.h.b16 %v687
      %v809 = vunpack.c.l.b16 %v688
      %v810 = vunpack.c.h.b16 %v688
      %v811 = vunpack.c.l.b16 %v689
      %v812 = vunpack.c.h.b16 %v689
      %v813 = vunpack.c.l.b16 %v690
      %v814 = vunpack.c.h.b16 %v690
      %v815 = vunpack.c.l.b16 %v691
      %v816 = vunpack.c.h.b16 %v691
      %v817 = vunpack.c.l.b16 %v692
      %v818 = vunpack.c.h.b16 %v692
      %v819 = vunpack.c.l.b16 %v693
      %v820 = vunpack.c.h.b16 %v693
      %v821 = vunpack.c.l.b16 %v694
      %v822 = vunpack.c.h.b16 %v694
      %v823 = vunpack.c.l.b16 %v695
      %v824 = vunpack.c.h.b16 %v695
      %v825 = vunpack.c.l.b16 %v696
      %v826 = vunpack.c.h.b16 %v696
      %v827 = vunpack.c.l.b16 %v697
      %v828 = vunpack.c.h.b16 %v697
      %v829 = vunpack.c.l.b16 %v698
      %v830 = vunpack.c.h.b16 %v698
      %v831 = vunpack.c.l.b16 %v699
      %v832 = vunpack.c.h.b16 %v699
      %v833 = vunpack.c.l.b16 %v700
      %v834 = vunpack.c.h.b16 %v700
      %v835 = vunpack.c.l.b16 %v701
      %v836 = vunpack.c.h.b16 %v701
      %v837 = vunpack.c.l.b16 %v702
      %v838 = vunpack.c.h.b16 %v702
      %v839 = vunpack.c.l.b16 %v703
      %v840 = vunpack.c.h.b16 %v703
      %v841 = vunpack.c.l.b16 %v704
      %v842 = vunpack.c.h.b16 %v704
      %v843 = vunpack.c.l.b16 %v705
      %v844 = vunpack.c.h.b16 %v705
      %v845 = vunpack.c.l.b16 %v706
      %v846 = vunpack.c.h.b16 %v706
      %v847 = vunpack.c.l.b16 %v707
      %v848 = vunpack.c.h.b16 %v707
      %v849 = vunpack.c.l.b16 %v708
      %v850 = vunpack.c.h.b16 %v708
      %v851 = vunpack.c.l.b16 %v709
      %v852 = vunpack.c.h.b16 %v709
      %v853 = vunpack.c.l.b16 %v710
      %v854 = vunpack.c.h.b16 %v710
      %v855 = vunpack.c.l.b16 %v711
      %v856 = vunpack.c.h.b16 %v711
      %v857 = vunpack.c.l.b16 %v712
      %v858 = vunpack.c.h.b16 %v712
      %v859 = vunpack.c.l.b16 %v713
      %v860 = vunpack.c.h.b16 %v713
      %v861 = vunpack.c.l.b16 %v714
      %v862 = vunpack.c.h.b16 %v714
      %v863 = vunpack.c.l.b16 %v715
      %v864 = vunpack.c.h.b16 %v715
      %v865 = vunpack.c.l.b16 %v716
      %v866 = vunpack.c.h.b16 %v716
      %v867 = vunpack.c.l.b16 %v717
      %v868 = vunpack.c.h.b16 %v717
      %v869 = vunpack.c.l.b16 %v718
      %v870 = vunpack.c.h.b16 %v718
      %v871 = vunpack.c.l.b16 %v719
      %v872 = vunpack.c.h.b16 %v719
      %v873 = vunpack.c.l.b16 %v720
      %v874 = vunpack.c.h.b16 %v720
      %v875 = vunpack.c.l.b16 %v721
      %v876 = vunpack.c.h.b16 %v721
      %v877 = vunpack.c.l.b16 %v722
      %v878 = vunpack.c.h.b16 %v722
      %v879 = vunpack.c.l.b16 %v723
      %v880 = vunpack.c.h.b16 %v723
      %v881 = vunpack.c.l.b16 %v724
      %v882 = vunpack.c.h.b16 %v724
      %v883 = vunpack.c.l.b16 %v725
      %v884 = vunpack.c.h.b16 %v725
      %v885 = vunpack.c.l.b16 %v726
      %v886 = vunpack.c.h.b16 %v726
      %v887 = vunpack.c.l.b16 %v727
      %v888 = vunpack.c.h.b16 %v727
      %v889 = vunpack.c.l.b16 %v728
      %v890 = vunpack.c.h.b16 %v728
      %v891 = vunpack.c.l.b16 %v729
      %v892 = vunpack.c.h.b16 %v729
      %v893 = vunpack.c.l.b16 %v730
      %v894 = vunpack.c.h.b16 %v730
      %v895 = vunpack.c.l.b16 %v731
      %v896 = vunpack.c.h.b16 %v731
      %v897 = vunpack.c.l.b16 %v732
      %v898 = vunpack.c.h.b16 %v732
      %v899 = vunpack.c.l.b16 %v733
      %v900 = vunpack.c.h.b16 %v733
      %v901 = vunpack.c.l.b16 %v734
      %v902 = vunpack.c.h.b16 %v734
      %v903 = vunpack.c.l.b16 %v735
      %v904 = vunpack.c.h.b16 %v735
      %v905 = vunpack.c.l.b16 %v736
      %v906 = vunpack.c.h.b16 %v736
      %v907 = vunpack.c.l.b16 %v737
      %v908 = vunpack.c.h.b16 %v737
      %v909 = vunpack.c.l.b16 %v738
      %v910 = vunpack.c.h.b16 %v738
      %v911 = vunpack.c.l.b16 %v739
      %v912 = vunpack.c.h.b16 %v739
      %v913 = vunpack.c.l.b16 %v740
      %v914 = vunpack.c.h.b16 %v740
      %v915 = vpack.c.b16 %v811, %v807
      %v916 = vpack.c.b16 %v812, %v808
      %v917 = vpack.c.b16 %v813, %v809
      %v918 = vpack.c.b16 %v814, %v810
      %v919 = vpack.c.b16 %v819, %v815
      %v920 = vpack.c.b16 %v820, %v816
      %v921 = vpack.c.b16 %v821, %v817
      %v922 = vpack.c.b16 %v822, %v818
      %v923 = vpack.c.b16 %v827, %v823
      %v924 = vpack.c.b16 %v828, %v824
      %v925 = vpack.c.b16 %v829, %v825
      %v926 = vpack.c.b16 %v830, %v826
      %v927 = vpack.c.b16 %v835, %v831
      %v928 = vpack.c.b16 %v836, %v832
      %v929 = vpack.c.b16 %v837, %v833
      %v930 = vpack.c.b16 %v838, %v834
      %v931 = vpack.c.b16 %v843, %v839
      %v932 = vpack.c.b16 %v844, %v840
      %v933 = vpack.c.b16 %v845, %v841
      %v934 = vpack.c.b16 %v846, %v842
      %v935 = vpack.c.b16 %v851, %v847
      %v936 = vpack.c.b16 %v852, %v848
      %v937 = vpack.c.b16 %v853, %v849
      %v938 = vpack.c.b16 %v854, %v850
      %v939 = vpack.c.b16 %v859, %v855
      %v940 = vpack.c.b16 %v860, %v856
      %v941 = vpack.c.b16 %v861, %v857
      %v942 = vpack.c.b16 %v862, %v858
      %v943 = vpack.c.b16 %v867, %v863
      %v944 = vpack.c.b16 %v868, %v864
      %v945 = vpack.c.b16 %v869, %v865
      %v946 = vpack.c.b16 %v870, %v866
      %v947 = vpack.c.b16 %v875, %v871
      %v948 = vpack.c.b16 %v876, %v872
      %v949 = vpack.c.b16 %v877, %v873
      %v950 = vpack.c.b16 %v878, %v874
      %v951 = vpack.c.b16 %v883, %v879
      %v952 = vpack.c.b16 %v884, %v880
      %v953 = vpack.c.b16 %v885, %v881
      %v954 = vpack.c.b16 %v886, %v882
      %v955 = vpack.c.b16 %v891, %v887
      %v956 = vpack.c.b16 %v892, %v888
      %v957 = vpack.c.b16 %v893, %v889
      %v958 = vpack.c.b16 %v894, %v890
      %v959 = vpack.c.b16 %v899, %v895
      %v960 = vpack.c.b16 %v900, %v896
      %v961 = vpack.c.b16 %v901, %v897
      %v962 = vpack.c.b16 %v902, %v898
      %v963 = vpack.c.b16 %v907, %v903
      %v964 = vpack.c.b16 %v908, %v904
      %v965 = vpack.c.b16 %v909, %v905
      %v966 = vpack.c.b16 %v910, %v906
      %v967 = vpack.c.b16 %v911, %v911
      %v968 = vpack.c.b16 %v912, %v912
      %v969 = vpack.c.b16 %v913, %v913
      %v970 = vpack.c.b16 %v914, %v914
      %vm1023 = vcmask 719872
      %v1025 = vsel %vm1023, %v751, 0
      %vm1027 = vcmask 1043456
      %v1029 = vsel %vm1027, %v967, 0
      %v1032 = vsel %vm1027, %v968, 0
      %v1035 = vsel %vm1027, %v969, 0
      %v1038 = vsel %vm1027, %v970, 0
      %1040 = vmatprep.subr.bf16.mxu0 %v944
      %1041 = vmatpush1.bf16.msra.mxu0 %v943
      %1042 = vmatprep.subr.bf16.mxu0 %v940
      %1043 = vmatpush1.bf16.msra.mxu0 %v939
      %1044 = vmatprep.subr.bf16.mxu0 %v936
      %1045 = vmatpush1.bf16.msra.mxu0 %v935
      %1046 = vmatprep.subr.bf16.mxu0 %v932
      %1047 = vmatpush1.bf16.msra.mxu0 %v931
      %1048 = vmatprep.subr.bf16.mxu0 %v928
      %1049 = vmatpush1.bf16.msra.mxu0 %v927
      %1050 = vmatprep.subr.bf16.mxu0 %v924
      %1051 = vmatpush1.bf16.msra.mxu0 %v923
      %1052 = vmatprep.subr.bf16.mxu0 %v920
      %1053 = vmatpush1.bf16.msra.mxu0 %v919
      %1054 = vmatprep.subr.bf16.mxu0 %v916
      %1055 = vmatpush1.bf16.msra.mxu0 %v915
      %1056 = vmatprep.subr.bf16.mxu0 0
      %1057 = vmatpush2.bf16.msra.mxu0 0
      %1058 = vmatprep.subr.bf16.mxu0 0
      %1059 = vmatpush2.bf16.msra.mxu0 0
      %1060 = vmatprep.subr.bf16.mxu0 %v1032
      %1061 = vmatpush2.bf16.msra.mxu0 %v1029
      %1062 = vmatprep.subr.bf16.mxu0 %v964
      %1063 = vmatpush2.bf16.msra.mxu0 %v963
      %1064 = vmatprep.subr.bf16.mxu0 %v960
      %1065 = vmatpush2.bf16.msra.mxu0 %v959
      %1066 = vmatprep.subr.bf16.mxu0 %v956
      %1067 = vmatpush2.bf16.msra.mxu0 %v955
      %1068 = vmatprep.subr.bf16.mxu0 %v952
      %1069 = vmatpush2.bf16.msra.mxu0 %v951
      %1070 = vmatprep.subr.bf16.mxu0 %v948
      %1071 = vmatpush2.bf16.msra.mxu0 %v947
      %1072 = vmatprep.mubr.bf16.mxu0 %v1025
      %1073 = vmatmul.mubr.bf16.gmra.mxu0 %v750
      %v1074 = vpop.f32.mrf.mxu0
      %v1075 = vadd.f32 %v745, %v1074
      %v1076 = vpop.f32.mrf.mxu0
      %v1077 = vadd.f32 %v745, %v1076
      %v1078 = vpop.f32.mrf.mxu0
      %v1079 = vpop.f32.mrf.mxu0
      %1080 = vdwg.mxu0
      %1081 = vmatprep.subr.bf16.mxu0 %v946
      %1082 = vmatpush1.bf16.msra.mxu0 %v945
      %1083 = vmatprep.subr.bf16.mxu0 %v942
      %1084 = vmatpush1.bf16.msra.mxu0 %v941
      %1085 = vmatprep.subr.bf16.mxu0 %v938
      %1086 = vmatpush1.bf16.msra.mxu0 %v937
      %1087 = vmatprep.subr.bf16.mxu0 %v934
      %1088 = vmatpush1.bf16.msra.mxu0 %v933
      %1089 = vmatprep.subr.bf16.mxu0 %v930
      %1090 = vmatpush1.bf16.msra.mxu0 %v929
      %1091 = vmatprep.subr.bf16.mxu0 %v926
      %1092 = vmatpush1.bf16.msra.mxu0 %v925
      %1093 = vmatprep.subr.bf16.mxu0 %v922
      %1094 = vmatpush1.bf16.msra.mxu0 %v921
      %1095 = vmatprep.subr.bf16.mxu0 %v918
      %1096 = vmatpush1.bf16.msra.mxu0 %v917
      %1097 = vmatprep.subr.bf16.mxu0 0
      %1098 = vmatpush2.bf16.msra.mxu0 0
      %1099 = vmatprep.subr.bf16.mxu0 0
      %1100 = vmatpush2.bf16.msra.mxu0 0
      %1101 = vmatprep.subr.bf16.mxu0 %v1038
      %1102 = vmatpush2.bf16.msra.mxu0 %v1035
      %1103 = vmatprep.subr.bf16.mxu0 %v966
      %1104 = vmatpush2.bf16.msra.mxu0 %v965
      %1105 = vmatprep.subr.bf16.mxu0 %v962
      %1106 = vmatpush2.bf16.msra.mxu0 %v961
      %1107 = vmatprep.subr.bf16.mxu0 %v958
      %1108 = vmatpush2.bf16.msra.mxu0 %v957
      %1109 = vmatprep.subr.bf16.mxu0 %v954
      %1110 = vmatpush2.bf16.msra.mxu0 %v953
      %1111 = vmatprep.subr.bf16.mxu0 %v950
      %1112 = vmatpush2.bf16.msra.mxu0 %v949
      %1113 = vmatprep.mubr.bf16.mxu0 %v1025
      %1114 = vmatmul.mubr.bf16.gmra.mxu0 %v750
      %v1115 = vpop.f32.mrf.mxu0
      %v1116 = vadd.f32 %v745, %v1115
      %v1117 = vpop.f32.mrf.mxu0
      %v1118 = vadd.f32 %v745, %v1117
      %v1119 = vpop.f32.mrf.mxu0
      %v1120 = vpop.f32.mrf.mxu0
      %1121 = vdwg.mxu0
      %v1122 = vmax.f32 %v1075, 0.0
      %v1123 = vmax.f32 %v1077, 0.0
      %v1124 = vmax.f32 %v1116, 0.0
      %v1125 = vmax.f32 %v1118, 0.0
      %v1126 = vpack.c.bf16 %v1122, %v1122
      %v1127 = vpack.c.bf16 %v1123, %v1123
      %v1128 = vpack.c.bf16 %v1124, %v1124
      %v1129 = vpack.c.bf16 %v1125, %v1125
      %v1134 = vunpack.c.l.b16 %v1126
      %v1135 = vunpack.c.l.b16 %v1127
      %v1136 = vunpack.c.l.b16 %v1128
      %v1137 = vunpack.c.l.b16 %v1129
      %v1138 = vpack.c.b16 %v1135, %v1134
      %v1139 = vpack.c.b16 %v1137, %v1136
      %1142 = vst [vmem:[%s206] sm:$0xff] %v1138
      %1143 = vst [vmem:[%s206 + $0x8] sm:$0xff] %v1139
      %s1144 = smul.u32 4, %s19
      %p1145 = scmp.lt.s32.totalorder %s18, 1
      %s1146 = scalar_select %p1145, %s18, 1
      %p1147 = scmp.lt.s32.totalorder %s1144, 7
      %s1148 = scalar_select %p1147, %s1144, 7
      %s1149 = smul.addr %s1146, 8
      %s1150 = sadd.s32 %s1148, %s1149
      %s1151 = smul.addr %s1150, 4
      %s1152 = scalar_lea.vmem %s3, %s1151
      // Predicated region
      $region33: #{forward.5} parent=31 // pred_check
        %p1153 = pneg %p116
      $region34: #{forward.5} parent=31 // pred_check_branch
        %1155 = sbr.rel (%p1153) target = $region36
      $region35: #{forward.5} parent=31 // pred_region
        %s1156 = smul.u32 4, %s19
      $region36: #{forward.5} parent=31 // pred_fallthru
        _
    $region32: #{forward.5} parent=5 // pred_fallthru
      _
    %p1157 = scmp.le.s32.totalorder 2, %s9
    // Predicated region
    $region37: #{forward.5} parent=5 // pred_check
      %p1158 = pneg %p1157
    $region38: #{forward.5} parent=5 // pred_check_branch
      %1160 = sbr.rel (%p1158) target = $region40
    $region39: #{forward.5} parent=5 // pred_region
      %s1161 = ssub.s32 %s9, 2
      // Predicated region
      $region41: #{forward.5} parent=39 // pred_check
        %p1162 = pneg %p122
      $region42: #{forward.5} parent=39 // pred_check_branch
        %1164 = sbr.rel (%p1162) target = $region44
      $region43: #{forward.5} parent=39 // pred_region
        %s1165 = smul.u32 4, %s21
        %p1166 = scmp.lt.s32.totalorder %s20, 1
        %s1167 = scalar_select %p1166, %s20, 1
        %p1168 = scmp.lt.s32.totalorder %s1165, 7
        %s1169 = scalar_select %p1168, %s1165, 7
        %s1170 = smul.addr %s1167, 8
        %s1171 = sadd.s32 %s1169, %s1170
        %s1172 = smul.addr %s1171, 4
        %s1173 = scalar_lea.vmem %s3, %s1172
      $region44: #{forward.5} parent=39 // pred_fallthru
        _
    $region40: #{forward.5} parent=5 // pred_fallthru
      _
  $region6: #{forward.5} parent=0 // loop_footer
    %s13 = sadd.s32 1, %s9
  $region7: #{forward.5} parent=0 // loop_footer_branch
    %8 = sbr.rel target = $region3
  $region8: #{forward.5} parent=0 // loop_exit
    _

// kernel: forward.6
$region0: #{forward.6}
  #allocation0 [shape = 'u32[]', space=smem, size = 0x4, offset = 0x4, fixed_abs, tag = 'smem constant byte address 0x4 - core index']
  #allocation1 [shape = 'u32[144,128]{1,0:T(1,128)}', space=vmem, size = 0x12000, scoped, tag = 'internal scratch']
  #allocation2 [shape = 'bf16[216,512]{1,0:T(8,128)(2,1)}', space=vmem, size = 0x36000, scoped, tag = 'scratch operand']
  %s0 = inlined_call_operand.vmem [shape: bf16[2,12,8,1198], index: 0, kind: input, shape index: {}]
  %s1 = inlined_call_operand.vmem [shape: bf16[8,216], index: 1, kind: input, shape index: {}]
  %s2 = inlined_call_operand.vmem [shape: f32[8,1], index: 2, kind: input, shape index: {}]
  %s3 = inlined_call_operand.vmem [shape: bf16[2,8,6144], index: 3, kind: output, shape index: {}]
  %s4 = sld [smem:[#allocation0]]
  $region45: #{forward.6} parent=0
    _
  %s6 = ssub.s32 1, %s4
  %s7 = scalar_select 0, %s6, %s4
  loop: start=0, step=1, limit=26
  $region2: #{forward.6} parent=0 // loop_pre_header
    _
  $region3: #{forward.6} parent=0 // loop_header
    %s9 = sphi 0, %s13
    %p10 = scmp.ge.s32.totalorder %s9, 26
    %s16 = sphi 0, %s28
    %s17 = sphi 0, %s24
    %s18 = sphi 0, %s16
    %s19 = sphi 0, %s17
    %s20 = sphi 0, %s18
    %s21 = sphi 0, %s19
    %s33 = sphi 0, %s35
    %s36 = sphi 0, %s33
    %s37 = sphi 0, %s36
    %s53 = sphi 0, %s37
    %s57 = sphi 0, %s57
    %s59 = sphi 0, %s57
    %s60 = sphi 0, %s59
    %s74 = sphi 0, %s60
    %s78 = sphi 0, %s78
    %s80 = sphi 0, %s78
    %s81 = sphi 0, %s80
    %s95 = sphi 0, %s81
    %s103 = sphi 0, %s105
    %s106 = sphi 0, %s103
    %s107 = sphi 0, %s106
    %s123 = sphi 0, %s107
  $region4: #{forward.6} parent=0 // loop_header_branch
    %12 = sbr.rel (%p10) target = $region8
  $region5: #{forward.6} parent=0 // loop_body
    %s14 = ssub.s32 %s9, 1
    %s15 = ssub.s32 %s9, 2
    %s22 = sadd.s32 1, %s17
    %p23 = scmp.ge.s32.totalorder %s22, 12
    %s24 = scalar_select %p23, 0, %s22
    %s25 = sadd.s32 1, %s16
    %s26 = scalar_select %p23, %s25, %s16
    %p27 = scmp.ge.s32.totalorder %s26, 2
    %s28 = scalar_select %p27, 0, %s26
    %s29 = ssub.s32 %s16, %s28
    %s30 = ssub.s32 %s17, %s24
    %s31 = sor.u32 %s29, %s30
    %p32 = scmp.eq.s32.totalorder %s31, 0
    %s34 = sadd.s32 %s33, 1
    %s35 = scalar_select %p32, %s33, %s34
    %p38 = pneg %p32
    %p39 = scmp.eq.s32.totalorder %s9, 23
    %p40 = por %p38, %p39
    %p41 = scmp.ne.s32.totalorder %s33, %s36
    %p42 = scmp.eq.s32.totalorder %s9, 0
    %p43 = por %p41, %p42
    %p44 = scmp.ne.s32.totalorder %s33, %s36
    %p45 = scmp.eq.s32.totalorder %s14, 23
    %p46 = por %p44, %p45
    %p47 = scmp.ne.s32.totalorder %s36, %s37
    %p48 = scmp.eq.s32.totalorder %s14, 0
    %p49 = por %p47, %p48
    %p50 = scmp.ne.s32.totalorder %s36, %s37
    %p51 = scmp.eq.s32.totalorder %s15, 23
    %p52 = por %p50, %p51
    %p54 = scmp.ne.s32.totalorder %s37, %s53
    %p55 = scmp.eq.s32.totalorder %s15, 0
    %p56 = por %p54, %p55
    %s58 = sadd.s32 %s57, 1
    %p61 = scmp.eq.s32.totalorder %s9, 23
    %p62 = scmp.ne.s32.totalorder %s57, %s59
    %p63 = scmp.eq.s32.totalorder %s9, 0
    %p64 = por %p62, %p63
    %p65 = scmp.ne.s32.totalorder %s57, %s59
    %p66 = scmp.eq.s32.totalorder %s14, 23
    %p67 = por %p65, %p66
    %p68 = scmp.ne.s32.totalorder %s59, %s60
    %p69 = scmp.eq.s32.totalorder %s14, 0
    %p70 = por %p68, %p69
    %p71 = scmp.ne.s32.totalorder %s59, %s60
    %p72 = scmp.eq.s32.totalorder %s15, 23
    %p73 = por %p71, %p72
    %p75 = scmp.ne.s32.totalorder %s60, %s74
    %p76 = scmp.eq.s32.totalorder %s15, 0
    %p77 = por %p75, %p76
    %s79 = sadd.s32 %s78, 1
    %p82 = scmp.eq.s32.totalorder %s9, 23
    %p83 = scmp.ne.s32.totalorder %s78, %s80
    %p84 = scmp.eq.s32.totalorder %s9, 0
    %p85 = por %p83, %p84
    %p86 = scmp.ne.s32.totalorder %s78, %s80
    %p87 = scmp.eq.s32.totalorder %s14, 23
    %p88 = por %p86, %p87
    %p89 = scmp.ne.s32.totalorder %s80, %s81
    %p90 = scmp.eq.s32.totalorder %s14, 0
    %p91 = por %p89, %p90
    %p92 = scmp.ne.s32.totalorder %s80, %s81
    %p93 = scmp.eq.s32.totalorder %s15, 23
    %p94 = por %p92, %p93
    %p96 = scmp.ne.s32.totalorder %s81, %s95
    %p97 = scmp.eq.s32.totalorder %s15, 0
    %p98 = por %p96, %p97
    %s99 = ssub.s32 %s16, %s28
    %s100 = ssub.s32 %s17, %s24
    %s101 = sor.u32 %s99, %s100
    %p102 = scmp.eq.s32.totalorder %s101, 0
    %s104 = sadd.s32 %s103, 1
    %s105 = scalar_select %p102, %s103, %s104
    %p108 = pneg %p102
    %p109 = scmp.eq.s32.totalorder %s9, 23
    %p110 = por %p108, %p109
    %p111 = scmp.ne.s32.totalorder %s103, %s106
    %p112 = scmp.eq.s32.totalorder %s9, 0
    %p113 = por %p111, %p112
    %p114 = scmp.ne.s32.totalorder %s103, %s106
    %p115 = scmp.eq.s32.totalorder %s14, 23
    %p116 = por %p114, %p115
    %p117 = scmp.ne.s32.totalorder %s106, %s107
    %p118 = scmp.eq.s32.totalorder %s14, 0
    %p119 = por %p117, %p118
    %p120 = scmp.ne.s32.totalorder %s106, %s107
    %p121 = scmp.eq.s32.totalorder %s15, 23
    %p122 = por %p120, %p121
    %p124 = scmp.ne.s32.totalorder %s107, %s123
    %p125 = scmp.eq.s32.totalorder %s15, 0
    %p126 = por %p124, %p125
    %p127 = scmp.le.s32.totalorder 1, %s9
    %p128 = scmp.lt.s32.totalorder %s9, 25
    %p129 = pnand %p127, %p128
    %p130 = pneg %p129
    // Predicated region
    $region9: #{forward.6} parent=5 // pred_check
      _
    $region10: #{forward.6} parent=5 // pred_check_branch
      %132 = sbr.rel (%p129) target = $region12
    $region11: #{forward.6} parent=5 // pred_region
      %s133 = ssub.s32 %s9, 1
      // Predicated region
      $region13: #{forward.6} parent=11 // pred_check
        %p134 = pneg %p70
      $region14: #{forward.6} parent=11 // pred_check_branch
        %136 = sbr.rel (%p134) target = $region16
      $region15: #{forward.6} parent=11 // pred_region
        _
      $region16: #{forward.6} parent=11 // pred_fallthru
        _
      // Predicated region
      $region17: #{forward.6} parent=11 // pred_check
        %p137 = pneg %p91
      $region18: #{forward.6} parent=11 // pred_check_branch
        %139 = sbr.rel (%p137) target = $region20
      $region19: #{forward.6} parent=11 // pred_region
        _
      $region20: #{forward.6} parent=11 // pred_fallthru
        _
    $region12: #{forward.6} parent=5 // pred_fallthru
      _
    %p140 = scmp.lt.s32.totalorder %s9, 24
    // Predicated region
    $region21: #{forward.6} parent=5 // pred_check
      %p141 = pneg %p140
    $region22: #{forward.6} parent=5 // pred_check_branch
      %143 = sbr.rel (%p141) target = $region24
    $region23: #{forward.6} parent=5 // pred_region
      // Predicated region
      $region25: #{forward.6} parent=23 // pred_check
        %p144 = pneg %p43
      $region26: #{forward.6} parent=23 // pred_check_branch
        %146 = sbr.rel (%p144) target = $region28
      $region27: #{forward.6} parent=23 // pred_region
        %p147 = scmp.lt.s32.totalorder %s16, 1
        %s148 = scalar_select %p147, %s16, 1
        %p149 = scmp.lt.s32.totalorder %s17, 11
        %s150 = scalar_select %p149, %s17, 11
        %s151 = smul.addr %s150, 10
        %s152 = smul.addr %s148, 120
        %s153 = sadd.s32 %s151, %s152
        %s154 = smul.addr %s153, 4
        %s155 = scalar_lea.vmem %s0, %s154
      $region28: #{forward.6} parent=23 // pred_fallthru
        _
    $region24: #{forward.6} parent=5 // pred_fallthru
      _
    %p156 = scmp.le.s32.totalorder 1, %s9
    %p157 = scmp.lt.s32.totalorder %s9, 25
    %p158 = pnand %p156, %p157
    %p159 = pneg %p158
    // Predicated region
    $region29: #{forward.6} parent=5 // pred_check
      _
    $region30: #{forward.6} parent=5 // pred_check_branch
      %161 = sbr.rel (%p158) target = $region32
    $region31: #{forward.6} parent=5 // pred_region
      %s162 = ssub.s32 %s9, 1
      %p163 = scmp.lt.s32.totalorder %s18, 1
      %s164 = scalar_select %p163, %s18, 1
      %p165 = scmp.lt.s32.totalorder %s19, 11
      %s166 = scalar_select %p165, %s19, 11
      %s167 = smul.addr %s166, 10
      %s168 = smul.addr %s164, 120
      %s169 = sadd.s32 %s167, %s168
      %s170 = smul.addr %s169, 4
      %s171 = scalar_lea.vmem %s0, %s170
      %p172 = pneg %p49
      %p173 = pneg %p46
      %p174 = pneg %p70
      %p175 = pneg %p67
      %p176 = pneg %p91
      %p177 = pneg %p88
      %p178 = pneg %p119
      %p179 = pneg %p116
      %s180 = smul.u32 4, %s19
      %p181 = scmp.lt.s32.totalorder %s18, 1
      %s182 = scalar_select %p181, %s18, 1
      %p183 = scmp.lt.s32.totalorder %s180, 47
      %s184 = scalar_select %p183, %s180, 47
      %s185 = smul.addr %s182, 48
      %s186 = sadd.s32 %s184, %s185
      %s187 = smul.addr %s186, 4
      %s188 = scalar_lea.vmem %s3, %s187
      %p189 = scmp.lt.s32.totalorder %s18, 1
      %s190 = scalar_select %p189, %s18, 1
      %p191 = scmp.lt.s32.totalorder %s19, 11
      %s192 = scalar_select %p191, %s19, 11
      %s193 = smul.addr %s192, 10
      %s194 = smul.addr %s190, 120
      %s195 = sadd.s32 %s193, %s194
      %s196 = smul.addr %s195, 4
      %s197 = scalar_lea.vmem %s0, %s196
      %s198 = smul.u32 4, %s19
      %p199 = scmp.lt.s32.totalorder %s18, 1
      %s200 = scalar_select %p199, %s18, 1
      %p201 = scmp.lt.s32.totalorder %s198, 47
      %s202 = scalar_select %p201, %s198, 47
      %s203 = smul.addr %s200, 48
      %s204 = sadd.s32 %s202, %s203
      %s205 = smul.addr %s204, 4
      %s206 = scalar_lea.vmem %s3, %s205
      %s207 = smul.u32 4, %s19
      %v209 = vld [vmem:[%s197] sm:$0xff]
      %v210 = vld [vmem:[%s197 + $0x8] sm:$0xff]
      %v211 = vld [vmem:[%s197 + $0x10] sm:$0xff]
      %v212 = vld [vmem:[%s197 + $0x18] sm:$0xff]
      %v213 = vld [vmem:[%s197 + $0x20] sm:$0xff]
      %214 = vst [vmem:[#allocation2] sm:$0xff] %v209
      %215 = vst [vmem:[#allocation2 + $0x8] sm:$0xff] %v210
      %219 = vrot.lane.b32.xlu0 %v209, 127
      %v220 = vpop.permute.xlu0 %219
      %221 = vrot.lane.b32.xlu0 %v210, 127
      %v222 = vpop.permute.xlu0 %221
      %223 = vrot.lane.b32.xlu0 %v211, 127
      %v224 = vpop.permute.xlu0 %223
      %v225 = vrot.slane %v220, 4
      %v226 = vrot.slane %v222, 4
      %v227 = vrot.slane %v224, 4
      %vm228 = vcmask 1043456
      %v229 = vsel %vm228, %v225, %v226
      %vm230 = vcmask 1039360
      %v231 = vsel %vm230, %v220, %v229
      %v232 = vsel %vm228, %v226, %v227
      %v233 = vsel %vm230, %v222, %v232
      %236 = vst [vmem:[#allocation2 + $0x10] sm:$0xff] %v231
      %237 = vst [vmem:[#allocation2 + $0x18] sm:$0xff] %v233
      %238 = vrot.lane.b32.xlu0 %v209, 126
      %v239 = vpop.permute.xlu0 %238
      %240 = vrot.lane.b32.xlu0 %v210, 126
      %v241 = vpop.permute.xlu0 %240
      %242 = vrot.lane.b32.xlu0 %v211, 126
      %v243 = vpop.permute.xlu0 %242
      %v244 = vrot.slane %v239, 4
      %v245 = vrot.slane %v241, 4
      %v246 = vrot.slane %v243, 4
      %v247 = vsel %vm228, %v244, %v245
      %vm248 = vcmask 1031168
      %v249 = vsel %vm248, %v239, %v247
      %v250 = vsel %vm228, %v245, %v246
      %v251 = vsel %vm248, %v241, %v250
      %254 = vst [vmem:[#allocation2 + $0x20] sm:$0xff] %v249
      %255 = vst [vmem:[#allocation2 + $0x28] sm:$0xff] %v251
      %256 = vrot.lane.b32.xlu0 %v209, 110
      %v257 = vpop.permute.xlu0 %256
      %258 = vrot.lane.b32.xlu0 %v210, 110
      %v259 = vpop.permute.xlu0 %258
      %260 = vrot.lane.b32.xlu0 %v211, 110
      %v261 = vpop.permute.xlu0 %260
      %v262 = vrot.slane %v257, 4
      %v263 = vrot.slane %v259, 4
      %v264 = vrot.slane %v261, 4
      %v265 = vsel %vm228, %v262, %v263
      %vm266 = vcmask 900096
      %v267 = vsel %vm266, %v257, %v265
      %v268 = vsel %vm228, %v263, %v264
      %v269 = vsel %vm266, %v259, %v268
      %272 = vst [vmem:[#allocation2 + $0x30] sm:$0xff] %v267
      %273 = vst [vmem:[#allocation2 + $0x38] sm:$0xff] %v269
      %274 = vrot.lane.b32.xlu0 %v209, 109
      %v275 = vpop.permute.xlu0 %274
      %276 = vrot.lane.b32.xlu0 %v210, 109
      %v277 = vpop.permute.xlu0 %276
      %278 = vrot.lane.b32.xlu0 %v211, 109
      %v279 = vpop.permute.xlu0 %278
      %v280 = vrot.slane %v275, 4
      %v281 = vrot.slane %v277, 4
      %v282 = vrot.slane %v279, 4
      %v283 = vsel %vm228, %v280, %v281
      %vm284 = vcmask 891904
      %v285 = vsel %vm284, %v275, %v283
      %v286 = vsel %vm228, %v281, %v282
      %v287 = vsel %vm284, %v277, %v286
      %290 = vst [vmem:[#allocation2 + $0x40] sm:$0xff] %v285
      %291 = vst [vmem:[#allocation2 + $0x48] sm:$0xff] %v287
      %292 = vrot.lane.b32.xlu0 %v209, 108
      %v293 = vpop.permute.xlu0 %292
      %294 = vrot.lane.b32.xlu0 %v210, 108
      %v295 = vpop.permute.xlu0 %294
      %296 = vrot.lane.b32.xlu0 %v211, 108
      %v297 = vpop.permute.xlu0 %296
      %v298 = vrot.slane %v293, 4
      %v299 = vrot.slane %v295, 4
      %v300 = vrot.slane %v297, 4
      %v301 = vsel %vm228, %v298, %v299
      %vm302 = vcmask 883712
      %v303 = vsel %vm302, %v293, %v301
      %v304 = vsel %vm228, %v299, %v300
      %v305 = vsel %vm302, %v295, %v304
      %308 = vst [vmem:[#allocation2 + $0x50] sm:$0xff] %v303
      %309 = vst [vmem:[#allocation2 + $0x58] sm:$0xff] %v305
      %310 = vrot.lane.b32.xlu0 %v209, 92
      %v311 = vpop.permute.xlu0 %310
      %312 = vrot.lane.b32.xlu0 %v210, 92
      %v313 = vpop.permute.xlu0 %312
      %314 = vrot.lane.b32.xlu0 %v211, 92
      %v315 = vpop.permute.xlu0 %314
      %v316 = vrot.slane %v311, 4
      %v317 = vrot.slane %v313, 4
      %v318 = vrot.slane %v315, 4
      %v319 = vsel %vm228, %v316, %v317
      %vm320 = vcmask 752640
      %v321 = vsel %vm320, %v311, %v319
      %v322 = vsel %vm228, %v317, %v318
      %v323 = vsel %vm320, %v313, %v322
      %326 = vst [vmem:[#allocation2 + $0x60] sm:$0xff] %v321
      %327 = vst [vmem:[#allocation2 + $0x68] sm:$0xff] %v323
      %328 = vrot.lane.b32.xlu0 %v209, 91
      %v329 = vpop.permute.xlu0 %328
      %330 = vrot.lane.b32.xlu0 %v210, 91
      %v331 = vpop.permute.xlu0 %330
      %332 = vrot.lane.b32.xlu0 %v211, 91
      %v333 = vpop.permute.xlu0 %332
      %v334 = vrot.slane %v329, 4
      %v335 = vrot.slane %v331, 4
      %v336 = vrot.slane %v333, 4
      %v337 = vsel %vm228, %v334, %v335
      %vm338 = vcmask 744448
      %v339 = vsel %vm338, %v329, %v337
      %v340 = vsel %vm228, %v335, %v336
      %v341 = vsel %vm338, %v331, %v340
      %344 = vst [vmem:[#allocation2 + $0x70] sm:$0xff] %v339
      %345 = vst [vmem:[#allocation2 + $0x78] sm:$0xff] %v341
      %346 = vrot.lane.b32.xlu0 %v209, 90
      %v347 = vpop.permute.xlu0 %346
      %348 = vrot.lane.b32.xlu0 %v210, 90
      %v349 = vpop.permute.xlu0 %348
      %350 = vrot.lane.b32.xlu0 %v211, 90
      %v351 = vpop.permute.xlu0 %350
      %v352 = vrot.slane %v347, 4
      %v353 = vrot.slane %v349, 4
      %v354 = vrot.slane %v351, 4
      %v355 = vsel %vm228, %v352, %v353
      %vm356 = vcmask 736256
      %v357 = vsel %vm356, %v347, %v355
      %v358 = vsel %vm228, %v353, %v354
      %v359 = vsel %vm356, %v349, %v358
      %362 = vst [vmem:[#allocation2 + $0x80] sm:$0xff] %v357
      %363 = vst [vmem:[#allocation2 + $0x88] sm:$0xff] %v359
      %365 = vrot.lane.b32.xlu0 %v210, 60
      %v366 = vpop.permute.xlu0 %365
      %367 = vrot.lane.b32.xlu0 %v211, 60
      %v368 = vpop.permute.xlu0 %367
      %369 = vrot.lane.b32.xlu0 %v212, 60
      %v370 = vpop.permute.xlu0 %369
      %v371 = vrot.slane %v366, 4
      %v372 = vrot.slane %v368, 4
      %v373 = vrot.slane %v370, 4
      %v374 = vsel %vm228, %v371, %v372
      %vm375 = vcmask 490496
      %v376 = vsel %vm375, %v366, %v374
      %v377 = vsel %vm228, %v372, %v373
      %v378 = vsel %vm375, %v368, %v377
      %381 = vst [vmem:[#allocation2 + $0x90] sm:$0xff] %v376
      %382 = vst [vmem:[#allocation2 + $0x98] sm:$0xff] %v378
      %383 = vrot.lane.b32.xlu0 %v210, 59
      %v384 = vpop.permute.xlu0 %383
      %385 = vrot.lane.b32.xlu0 %v211, 59
      %v386 = vpop.permute.xlu0 %385
      %387 = vrot.lane.b32.xlu0 %v212, 59
      %v388 = vpop.permute.xlu0 %387
      %v389 = vrot.slane %v384, 4
      %v390 = vrot.slane %v386, 4
      %v391 = vrot.slane %v388, 4
      %v392 = vsel %vm228, %v389, %v390
      %vm393 = vcmask 482304
      %v394 = vsel %vm393, %v384, %v392
      %v395 = vsel %vm228, %v390, %v391
      %v396 = vsel %vm393, %v386, %v395
      %399 = vst [vmem:[#allocation2 + $0xa0] sm:$0xff] %v394
      %400 = vst [vmem:[#allocation2 + $0xa8] sm:$0xff] %v396
      %401 = vrot.lane.b32.xlu0 %v210, 58
      %v402 = vpop.permute.xlu0 %401
      %403 = vrot.lane.b32.xlu0 %v211, 58
      %v404 = vpop.permute.xlu0 %403
      %405 = vrot.lane.b32.xlu0 %v212, 58
      %v406 = vpop.permute.xlu0 %405
      %v407 = vrot.slane %v402, 4
      %v408 = vrot.slane %v404, 4
      %v409 = vrot.slane %v406, 4
      %v410 = vsel %vm228, %v407, %v408
      %vm411 = vcmask 474112
      %v412 = vsel %vm411, %v402, %v410
      %v413 = vsel %vm228, %v408, %v409
      %v414 = vsel %vm411, %v404, %v413
      %417 = vst [vmem:[#allocation2 + $0xb0] sm:$0xff] %v412
      %418 = vst [vmem:[#allocation2 + $0xb8] sm:$0xff] %v414
      %419 = vrot.lane.b32.xlu0 %v210, 42
      %v420 = vpop.permute.xlu0 %419
      %421 = vrot.lane.b32.xlu0 %v211, 42
      %v422 = vpop.permute.xlu0 %421
      %423 = vrot.lane.b32.xlu0 %v212, 42
      %v424 = vpop.permute.xlu0 %423
      %v425 = vrot.slane %v420, 4
      %v426 = vrot.slane %v422, 4
      %v427 = vrot.slane %v424, 4
      %v428 = vsel %vm228, %v425, %v426
      %vm429 = vcmask 343040
      %v430 = vsel %vm429, %v420, %v428
      %v431 = vsel %vm228, %v426, %v427
      %v432 = vsel %vm429, %v422, %v431
      %435 = vst [vmem:[#allocation2 + $0xc0] sm:$0xff] %v430
      %436 = vst [vmem:[#allocation2 + $0xc8] sm:$0xff] %v432
      %437 = vrot.lane.b32.xlu0 %v210, 41
      %v438 = vpop.permute.xlu0 %437
      %439 = vrot.lane.b32.xlu0 %v211, 41
      %v440 = vpop.permute.xlu0 %439
      %441 = vrot.lane.b32.xlu0 %v212, 41
      %v442 = vpop.permute.xlu0 %441
      %v443 = vrot.slane %v438, 4
      %v444 = vrot.slane %v440, 4
      %v445 = vrot.slane %v442, 4
      %v446 = vsel %vm228, %v443, %v444
      %vm447 = vcmask 334848
      %v448 = vsel %vm447, %v438, %v446
      %v449 = vsel %vm228, %v444, %v445
      %v450 = vsel %vm447, %v440, %v449
      %453 = vst [vmem:[#allocation2 + $0xd0] sm:$0xff] %v448
      %454 = vst [vmem:[#allocation2 + $0xd8] sm:$0xff] %v450
      %455 = vrot.lane.b32.xlu0 %v210, 40
      %v456 = vpop.permute.xlu0 %455
      %457 = vrot.lane.b32.xlu0 %v211, 40
      %v458 = vpop.permute.xlu0 %457
      %459 = vrot.lane.b32.xlu0 %v212, 40
      %v460 = vpop.permute.xlu0 %459
      %v461 = vrot.slane %v456, 4
      %v462 = vrot.slane %v458, 4
      %v463 = vrot.slane %v460, 4
      %v464 = vsel %vm228, %v461, %v462
      %vm465 = vcmask 326656
      %v466 = vsel %vm465, %v456, %v464
      %v467 = vsel %vm228, %v462, %v463
      %v468 = vsel %vm465, %v458, %v467
      %471 = vst [vmem:[#allocation2 + $0xe0] sm:$0xff] %v466
      %472 = vst [vmem:[#allocation2 + $0xe8] sm:$0xff] %v468
      %473 = vrot.lane.b32.xlu0 %v210, 24
      %v474 = vpop.permute.xlu0 %473
      %475 = vrot.lane.b32.xlu0 %v211, 24
      %v476 = vpop.permute.xlu0 %475
      %477 = vrot.lane.b32.xlu0 %v212, 24
      %v478 = vpop.permute.xlu0 %477
      %v479 = vrot.slane %v474, 4
      %v480 = vrot.slane %v476, 4
      %v481 = vrot.slane %v478, 4
      %v482 = vsel %vm228, %v479, %v480
      %vm483 = vcmask 195584
      %v484 = vsel %vm483, %v474, %v482
      %v485 = vsel %vm228, %v480, %v481
      %v486 = vsel %vm483, %v476, %v485
      %489 = vst [vmem:[#allocation2 + $0xf0] sm:$0xff] %v484
      %490 = vst [vmem:[#allocation2 + $0xf8] sm:$0xff] %v486
      %491 = vrot.lane.b32.xlu0 %v210, 23
      %v492 = vpop.permute.xlu0 %491
      %493 = vrot.lane.b32.xlu0 %v211, 23
      %v494 = vpop.permute.xlu0 %493
      %495 = vrot.lane.b32.xlu0 %v212, 23
      %v496 = vpop.permute.xlu0 %495
      %v497 = vrot.slane %v492, 4
      %v498 = vrot.slane %v494, 4
      %v499 = vrot.slane %v496, 4
      %v500 = vsel %vm228, %v497, %v498
      %vm501 = vcmask 187392
      %v502 = vsel %vm501, %v492, %v500
      %v503 = vsel %vm228, %v498, %v499
      %v504 = vsel %vm501, %v494, %v503
      %507 = vst [vmem:[#allocation2 + $0x100] sm:$0xff] %v502
      %508 = vst [vmem:[#allocation2 + $0x108] sm:$0xff] %v504
      %509 = vrot.lane.b32.xlu0 %v210, 22
      %v510 = vpop.permute.xlu0 %509
      %511 = vrot.lane.b32.xlu0 %v211, 22
      %v512 = vpop.permute.xlu0 %511
      %513 = vrot.lane.b32.xlu0 %v212, 22
      %v514 = vpop.permute.xlu0 %513
      %v515 = vrot.slane %v510, 4
      %v516 = vrot.slane %v512, 4
      %v517 = vrot.slane %v514, 4
      %v518 = vsel %vm228, %v515, %v516
      %vm519 = vcmask 179200
      %v520 = vsel %vm519, %v510, %v518
      %v521 = vsel %vm228, %v516, %v517
      %v522 = vsel %vm519, %v512, %v521
      %525 = vst [vmem:[#allocation2 + $0x110] sm:$0xff] %v520
      %526 = vst [vmem:[#allocation2 + $0x118] sm:$0xff] %v522
      %528 = vrot.lane.b32.xlu0 %v211, 120
      %v529 = vpop.permute.xlu0 %528
      %530 = vrot.lane.b32.xlu0 %v212, 120
      %v531 = vpop.permute.xlu0 %530
      %532 = vrot.lane.b32.xlu0 %v213, 120
      %v533 = vpop.permute.xlu0 %532
      %v534 = vrot.slane %v529, 4
      %v535 = vrot.slane %v531, 4
      %v536 = vrot.slane %v533, 4
      %v537 = vsel %vm228, %v534, %v535
      %vm538 = vcmask 982016
      %v539 = vsel %vm538, %v537, %v531
      %v540 = vsel %vm228, %v535, %v536
      %v541 = vsel %vm538, %v540, %v533
      %544 = vst [vmem:[#allocation2 + $0x120] sm:$0xff] %v539
      %545 = vst [vmem:[#allocation2 + $0x128] sm:$0xff] %v541
      %546 = vrot.lane.b32.xlu0 %v211, 119
      %v547 = vpop.permute.xlu0 %546
      %548 = vrot.lane.b32.xlu0 %v212, 119
      %v549 = vpop.permute.xlu0 %548
      %550 = vrot.lane.b32.xlu0 %v213, 119
      %v551 = vpop.permute.xlu0 %550
      %v552 = vrot.slane %v547, 4
      %v553 = vrot.slane %v549, 4
      %v554 = vrot.slane %v551, 4
      %v555 = vsel %vm228, %v552, %v553
      %vm556 = vcmask 973824
      %v557 = vsel %vm556, %v555, %v549
      %v558 = vsel %vm228, %v553, %v554
      %v559 = vsel %vm556, %v558, %v551
      %562 = vst [vmem:[#allocation2 + $0x130] sm:$0xff] %v557
      %563 = vst [vmem:[#allocation2 + $0x138] sm:$0xff] %v559
      %564 = vrot.lane.b32.xlu0 %v211, 118
      %v565 = vpop.permute.xlu0 %564
      %566 = vrot.lane.b32.xlu0 %v212, 118
      %v567 = vpop.permute.xlu0 %566
      %568 = vrot.lane.b32.xlu0 %v213, 118
      %v569 = vpop.permute.xlu0 %568
      %v570 = vrot.slane %v565, 4
      %v571 = vrot.slane %v567, 4
      %v572 = vrot.slane %v569, 4
      %v573 = vsel %vm228, %v570, %v571
      %vm574 = vcmask 965632
      %v575 = vsel %vm574, %v573, %v567
      %v576 = vsel %vm228, %v571, %v572
      %v577 = vsel %vm574, %v576, %v569
      %580 = vst [vmem:[#allocation2 + $0x140] sm:$0xff] %v575
      %581 = vst [vmem:[#allocation2 + $0x148] sm:$0xff] %v577
      %582 = vrot.lane.b32.xlu0 %v211, 102
      %v583 = vpop.permute.xlu0 %582
      %584 = vrot.lane.b32.xlu0 %v212, 102
      %v585 = vpop.permute.xlu0 %584
      %586 = vrot.lane.b32.xlu0 %v213, 102
      %v587 = vpop.permute.xlu0 %586
      %v588 = vrot.slane %v583, 4
      %v589 = vrot.slane %v585, 4
      %v590 = vrot.slane %v587, 4
      %v591 = vsel %vm228, %v588, %v589
      %vm592 = vcmask 834560
      %v593 = vsel %vm592, %v591, %v585
      %v594 = vsel %vm228, %v589, %v590
      %v595 = vsel %vm592, %v594, %v587
      %598 = vst [vmem:[#allocation2 + $0x150] sm:$0xff] %v593
      %599 = vst [vmem:[#allocation2 + $0x158] sm:$0xff] %v595
      %600 = vrot.lane.b32.xlu0 %v211, 101
      %v601 = vpop.permute.xlu0 %600
      %602 = vrot.lane.b32.xlu0 %v212, 101
      %v603 = vpop.permute.xlu0 %602
      %604 = vrot.lane.b32.xlu0 %v213, 101
      %v605 = vpop.permute.xlu0 %604
      %v606 = vrot.slane %v601, 4
      %v607 = vrot.slane %v603, 4
      %v608 = vrot.slane %v605, 4
      %v609 = vsel %vm228, %v606, %v607
      %vm610 = vcmask 826368
      %v611 = vsel %vm610, %v609, %v603
      %v612 = vsel %vm228, %v607, %v608
      %v613 = vsel %vm610, %v612, %v605
      %616 = vst [vmem:[#allocation2 + $0x160] sm:$0xff] %v611
      %617 = vst [vmem:[#allocation2 + $0x168] sm:$0xff] %v613
      %618 = vrot.lane.b32.xlu0 %v211, 100
      %v619 = vpop.permute.xlu0 %618
      %620 = vrot.lane.b32.xlu0 %v212, 100
      %v621 = vpop.permute.xlu0 %620
      %622 = vrot.lane.b32.xlu0 %v213, 100
      %v623 = vpop.permute.xlu0 %622
      %v624 = vrot.slane %v619, 4
      %v625 = vrot.slane %v621, 4
      %v626 = vrot.slane %v623, 4
      %v627 = vsel %vm228, %v624, %v625
      %vm628 = vcmask 818176
      %v629 = vsel %vm628, %v627, %v621
      %v630 = vsel %vm228, %v625, %v626
      %v631 = vsel %vm628, %v630, %v623
      %634 = vst [vmem:[#allocation2 + $0x170] sm:$0xff] %v629
      %635 = vst [vmem:[#allocation2 + $0x178] sm:$0xff] %v631
      %636 = vrot.lane.b32.xlu0 %v211, 84
      %v637 = vpop.permute.xlu0 %636
      %638 = vrot.lane.b32.xlu0 %v212, 84
      %v639 = vpop.permute.xlu0 %638
      %640 = vrot.lane.b32.xlu0 %v213, 84
      %v641 = vpop.permute.xlu0 %640
      %v642 = vrot.slane %v637, 4
      %v643 = vrot.slane %v639, 4
      %v644 = vrot.slane %v641, 4
      %v645 = vsel %vm228, %v642, %v643
      %vm646 = vcmask 687104
      %v647 = vsel %vm646, %v645, %v639
      %v648 = vsel %vm228, %v643, %v644
      %v649 = vsel %vm646, %v648, %v641
      %652 = vst [vmem:[#allocation2 + $0x180] sm:$0xff] %v647
      %653 = vst [vmem:[#allocation2 + $0x188] sm:$0xff] %v649
      %654 = vrot.lane.b32.xlu0 %v211, 83
      %v655 = vpop.permute.xlu0 %654
      %656 = vrot.lane.b32.xlu0 %v212, 83
      %v657 = vpop.permute.xlu0 %656
      %658 = vrot.lane.b32.xlu0 %v213, 83
      %v659 = vpop.permute.xlu0 %658
      %v660 = vrot.slane %v655, 4
      %v661 = vrot.slane %v657, 4
      %v662 = vrot.slane %v659, 4
      %v663 = vsel %vm228, %v660, %v661
      %vm664 = vcmask 678912
      %v665 = vsel %vm664, %v663, %v657
      %v666 = vsel %vm228, %v661, %v662
      %v667 = vsel %vm664, %v666, %v659
      %670 = vst [vmem:[#allocation2 + $0x190] sm:$0xff] %v665
      %671 = vst [vmem:[#allocation2 + $0x198] sm:$0xff] %v667
      %672 = vrot.lane.b32.xlu0 %v211, 82
      %v673 = vpop.permute.xlu0 %672
      %674 = vrot.lane.b32.xlu0 %v212, 82
      %v675 = vpop.permute.xlu0 %674
      %676 = vrot.lane.b32.xlu0 %v213, 82
      %v677 = vpop.permute.xlu0 %676
      %v678 = vrot.slane %v673, 4
      %v679 = vrot.slane %v675, 4
      %v680 = vrot.slane %v677, 4
      %v681 = vsel %vm228, %v678, %v679
      %vm682 = vcmask 670720
      %v683 = vsel %vm682, %v681, %v675
      %v684 = vsel %vm228, %v679, %v680
      %v685 = vsel %vm682, %v684, %v677
      %688 = vst [vmem:[#allocation2 + $0x1a0] sm:$0xff] %v683
      %689 = vst [vmem:[#allocation2 + $0x1a8] sm:$0xff] %v685
      %v690 = vld [vmem:[%s1] sm:$0xff]
      %v691 = vld [vmem:[#allocation2] sm:$0xff]
      %v692 = vld [vmem:[#allocation2 + $0x8] sm:$0xff]
      %v693 = vld [vmem:[#allocation2 + $0x10] sm:$0xff]
      %v694 = vld [vmem:[#allocation2 + $0x18] sm:$0xff]
      %v695 = vld [vmem:[#allocation2 + $0x20] sm:$0xff]
      %v696 = vld [vmem:[#allocation2 + $0x28] sm:$0xff]
      %v697 = vld [vmem:[#allocation2 + $0x30] sm:$0xff]
      %v698 = vld [vmem:[#allocation2 + $0x38] sm:$0xff]
      %v699 = vld [vmem:[#allocation2 + $0x40] sm:$0xff]
      %v700 = vld [vmem:[#allocation2 + $0x48] sm:$0xff]
      %v701 = vld [vmem:[#allocation2 + $0x50] sm:$0xff]
      %v702 = vld [vmem:[#allocation2 + $0x58] sm:$0xff]
      %v703 = vld [vmem:[#allocation2 + $0x60] sm:$0xff]
      %v704 = vld [vmem:[#allocation2 + $0x68] sm:$0xff]
      %v705 = vld [vmem:[#allocation2 + $0x70] sm:$0xff]
      %v706 = vld [vmem:[#allocation2 + $0x78] sm:$0xff]
      %v707 = vld [vmem:[#allocation2 + $0x80] sm:$0xff]
      %v708 = vld [vmem:[#allocation2 + $0x88] sm:$0xff]
      %v709 = vld [vmem:[#allocation2 + $0x90] sm:$0xff]
      %v710 = vld [vmem:[#allocation2 + $0x98] sm:$0xff]
      %v711 = vld [vmem:[#allocation2 + $0xa0] sm:$0xff]
      %v712 = vld [vmem:[#allocation2 + $0xa8] sm:$0xff]
      %v713 = vld [vmem:[#allocation2 + $0xb0] sm:$0xff]
      %v714 = vld [vmem:[#allocation2 + $0xb8] sm:$0xff]
      %v715 = vld [vmem:[#allocation2 + $0xc0] sm:$0xff]
      %v716 = vld [vmem:[#allocation2 + $0xc8] sm:$0xff]
      %v717 = vld [vmem:[#allocation2 + $0xd0] sm:$0xff]
      %v718 = vld [vmem:[#allocation2 + $0xd8] sm:$0xff]
      %v719 = vld [vmem:[#allocation2 + $0xe0] sm:$0xff]
      %v720 = vld [vmem:[#allocation2 + $0xe8] sm:$0xff]
      %v721 = vld [vmem:[#allocation2 + $0xf0] sm:$0xff]
      %v722 = vld [vmem:[#allocation2 + $0xf8] sm:$0xff]
      %v723 = vld [vmem:[#allocation2 + $0x100] sm:$0xff]
      %v724 = vld [vmem:[#allocation2 + $0x108] sm:$0xff]
      %v725 = vld [vmem:[#allocation2 + $0x110] sm:$0xff]
      %v726 = vld [vmem:[#allocation2 + $0x118] sm:$0xff]
      %v727 = vld [vmem:[#allocation2 + $0x120] sm:$0xff]
      %v728 = vld [vmem:[#allocation2 + $0x128] sm:$0xff]
      %v729 = vld [vmem:[#allocation2 + $0x130] sm:$0xff]
      %v730 = vld [vmem:[#allocation2 + $0x138] sm:$0xff]
      %v731 = vld [vmem:[#allocation2 + $0x140] sm:$0xff]
      %v732 = vld [vmem:[#allocation2 + $0x148] sm:$0xff]
      %v733 = vld [vmem:[#allocation2 + $0x150] sm:$0xff]
      %v734 = vld [vmem:[#allocation2 + $0x158] sm:$0xff]
      %v735 = vld [vmem:[#allocation2 + $0x160] sm:$0xff]
      %v736 = vld [vmem:[#allocation2 + $0x168] sm:$0xff]
      %v737 = vld [vmem:[#allocation2 + $0x170] sm:$0xff]
      %v738 = vld [vmem:[#allocation2 + $0x178] sm:$0xff]
      %v739 = vld [vmem:[#allocation2 + $0x180] sm:$0xff]
      %v740 = vld [vmem:[#allocation2 + $0x188] sm:$0xff]
      %v741 = vld [vmem:[#allocation2 + $0x190] sm:$0xff]
      %v742 = vld [vmem:[#allocation2 + $0x198] sm:$0xff]
      %v743 = vld [vmem:[#allocation2 + $0x1a0] sm:$0xff]
      %v744 = vld [vmem:[#allocation2 + $0x1a8] sm:$0xff]
      %v745 = vld [vmem:[%s2] sm:$0xff]
      %747 = vset.pattern.permute.xlu0 0
      %748 = vperm.xlu0 %747, %v745
      %v749 = vpop.permute.xlu0 %748
      %v752 = vunpack.c.l.b16 %v690
      %v753 = vunpack.c.h.b16 %v690
      %v754 = vpack.c.b16 %v752, %v752
      %v755 = vpack.c.b16 %v753, %v753
      %v811 = vunpack.c.l.b16 %v691
      %v812 = vunpack.c.h.b16 %v691
      %v813 = vunpack.c.l.b16 %v692
      %v814 = vunpack.c.h.b16 %v692
      %v815 = vunpack.c.l.b16 %v693
      %v816 = vunpack.c.h.b16 %v693
      %v817 = vunpack.c.l.b16 %v694
      %v818 = vunpack.c.h.b16 %v694
      %v819 = vunpack.c.l.b16 %v695
      %v820 = vunpack.c.h.b16 %v695
      %v821 = vunpack.c.l.b16 %v696
      %v822 = vunpack.c.h.b16 %v696
      %v823 = vunpack.c.l.b16 %v697
      %v824 = vunpack.c.h.b16 %v697
      %v825 = vunpack.c.l.b16 %v698
      %v826 = vunpack.c.h.b16 %v698
      %v827 = vunpack.c.l.b16 %v699
      %v828 = vunpack.c.h.b16 %v699
      %v829 = vunpack.c.l.b16 %v700
      %v830 = vunpack.c.h.b16 %v700
      %v831 = vunpack.c.l.b16 %v701
      %v832 = vunpack.c.h.b16 %v701
      %v833 = vunpack.c.l.b16 %v702
      %v834 = vunpack.c.h.b16 %v702
      %v835 = vunpack.c.l.b16 %v703
      %v836 = vunpack.c.h.b16 %v703
      %v837 = vunpack.c.l.b16 %v704
      %v838 = vunpack.c.h.b16 %v704
      %v839 = vunpack.c.l.b16 %v705
      %v840 = vunpack.c.h.b16 %v705
      %v841 = vunpack.c.l.b16 %v706
      %v842 = vunpack.c.h.b16 %v706
      %v843 = vunpack.c.l.b16 %v707
      %v844 = vunpack.c.h.b16 %v707
      %v845 = vunpack.c.l.b16 %v708
      %v846 = vunpack.c.h.b16 %v708
      %v847 = vunpack.c.l.b16 %v709
      %v848 = vunpack.c.h.b16 %v709
      %v849 = vunpack.c.l.b16 %v710
      %v850 = vunpack.c.h.b16 %v710
      %v851 = vunpack.c.l.b16 %v711
      %v852 = vunpack.c.h.b16 %v711
      %v853 = vunpack.c.l.b16 %v712
      %v854 = vunpack.c.h.b16 %v712
      %v855 = vunpack.c.l.b16 %v713
      %v856 = vunpack.c.h.b16 %v713
      %v857 = vunpack.c.l.b16 %v714
      %v858 = vunpack.c.h.b16 %v714
      %v859 = vunpack.c.l.b16 %v715
      %v860 = vunpack.c.h.b16 %v715
      %v861 = vunpack.c.l.b16 %v716
      %v862 = vunpack.c.h.b16 %v716
      %v863 = vunpack.c.l.b16 %v717
      %v864 = vunpack.c.h.b16 %v717
      %v865 = vunpack.c.l.b16 %v718
      %v866 = vunpack.c.h.b16 %v718
      %v867 = vunpack.c.l.b16 %v719
      %v868 = vunpack.c.h.b16 %v719
      %v869 = vunpack.c.l.b16 %v720
      %v870 = vunpack.c.h.b16 %v720
      %v871 = vunpack.c.l.b16 %v721
      %v872 = vunpack.c.h.b16 %v721
      %v873 = vunpack.c.l.b16 %v722
      %v874 = vunpack.c.h.b16 %v722
      %v875 = vunpack.c.l.b16 %v723
      %v876 = vunpack.c.h.b16 %v723
      %v877 = vunpack.c.l.b16 %v724
      %v878 = vunpack.c.h.b16 %v724
      %v879 = vunpack.c.l.b16 %v725
      %v880 = vunpack.c.h.b16 %v725
      %v881 = vunpack.c.l.b16 %v726
      %v882 = vunpack.c.h.b16 %v726
      %v883 = vunpack.c.l.b16 %v727
      %v884 = vunpack.c.h.b16 %v727
      %v885 = vunpack.c.l.b16 %v728
      %v886 = vunpack.c.h.b16 %v728
      %v887 = vunpack.c.l.b16 %v729
      %v888 = vunpack.c.h.b16 %v729
      %v889 = vunpack.c.l.b16 %v730
      %v890 = vunpack.c.h.b16 %v730
      %v891 = vunpack.c.l.b16 %v731
      %v892 = vunpack.c.h.b16 %v731
      %v893 = vunpack.c.l.b16 %v732
      %v894 = vunpack.c.h.b16 %v732
      %v895 = vunpack.c.l.b16 %v733
      %v896 = vunpack.c.h.b16 %v733
      %v897 = vunpack.c.l.b16 %v734
      %v898 = vunpack.c.h.b16 %v734
      %v899 = vunpack.c.l.b16 %v735
      %v900 = vunpack.c.h.b16 %v735
      %v901 = vunpack.c.l.b16 %v736
      %v902 = vunpack.c.h.b16 %v736
      %v903 = vunpack.c.l.b16 %v737
      %v904 = vunpack.c.h.b16 %v737
      %v905 = vunpack.c.l.b16 %v738
      %v906 = vunpack.c.h.b16 %v738
      %v907 = vunpack.c.l.b16 %v739
      %v908 = vunpack.c.h.b16 %v739
      %v909 = vunpack.c.l.b16 %v740
      %v910 = vunpack.c.h.b16 %v740
      %v911 = vunpack.c.l.b16 %v741
      %v912 = vunpack.c.h.b16 %v741
      %v913 = vunpack.c.l.b16 %v742
      %v914 = vunpack.c.h.b16 %v742
      %v915 = vunpack.c.l.b16 %v743
      %v916 = vunpack.c.h.b16 %v743
      %v917 = vunpack.c.l.b16 %v744
      %v918 = vunpack.c.h.b16 %v744
      %v919 = vpack.c.b16 %v815, %v811
      %v920 = vpack.c.b16 %v816, %v812
      %v921 = vpack.c.b16 %v817, %v813
      %v922 = vpack.c.b16 %v818, %v814
      %v923 = vpack.c.b16 %v823, %v819
      %v924 = vpack.c.b16 %v824, %v820
      %v925 = vpack.c.b16 %v825, %v821
      %v926 = vpack.c.b16 %v826, %v822
      %v927 = vpack.c.b16 %v831, %v827
      %v928 = vpack.c.b16 %v832, %v828
      %v929 = vpack.c.b16 %v833, %v829
      %v930 = vpack.c.b16 %v834, %v830
      %v931 = vpack.c.b16 %v839, %v835
      %v932 = vpack.c.b16 %v840, %v836
      %v933 = vpack.c.b16 %v841, %v837
      %v934 = vpack.c.b16 %v842, %v838
      %v935 = vpack.c.b16 %v847, %v843
      %v936 = vpack.c.b16 %v848, %v844
      %v937 = vpack.c.b16 %v849, %v845
      %v938 = vpack.c.b16 %v850, %v846
      %v939 = vpack.c.b16 %v855, %v851
      %v940 = vpack.c.b16 %v856, %v852
      %v941 = vpack.c.b16 %v857, %v853
      %v942 = vpack.c.b16 %v858, %v854
      %v943 = vpack.c.b16 %v863, %v859
      %v944 = vpack.c.b16 %v864, %v860
      %v945 = vpack.c.b16 %v865, %v861
      %v946 = vpack.c.b16 %v866, %v862
      %v947 = vpack.c.b16 %v871, %v867
      %v948 = vpack.c.b16 %v872, %v868
      %v949 = vpack.c.b16 %v873, %v869
      %v950 = vpack.c.b16 %v874, %v870
      %v951 = vpack.c.b16 %v879, %v875
      %v952 = vpack.c.b16 %v880, %v876
      %v953 = vpack.c.b16 %v881, %v877
      %v954 = vpack.c.b16 %v882, %v878
      %v955 = vpack.c.b16 %v887, %v883
      %v956 = vpack.c.b16 %v888, %v884
      %v957 = vpack.c.b16 %v889, %v885
      %v958 = vpack.c.b16 %v890, %v886
      %v959 = vpack.c.b16 %v895, %v891
      %v960 = vpack.c.b16 %v896, %v892
      %v961 = vpack.c.b16 %v897, %v893
      %v962 = vpack.c.b16 %v898, %v894
      %v963 = vpack.c.b16 %v903, %v899
      %v964 = vpack.c.b16 %v904, %v900
      %v965 = vpack.c.b16 %v905, %v901
      %v966 = vpack.c.b16 %v906, %v902
      %v967 = vpack.c.b16 %v911, %v907
      %v968 = vpack.c.b16 %v912, %v908
      %v969 = vpack.c.b16 %v913, %v909
      %v970 = vpack.c.b16 %v914, %v910
      %v971 = vpack.c.b16 %v915, %v915
      %v972 = vpack.c.b16 %v916, %v916
      %v973 = vpack.c.b16 %v917, %v917
      %v974 = vpack.c.b16 %v918, %v918
      %vm1027 = vcmask 719872
      %v1029 = vsel %vm1027, %v755, 0
      %vm1031 = vcmask 1043456
      %v1033 = vsel %vm1031, %v971, 0
      %v1036 = vsel %vm1031, %v972, 0
      %v1039 = vsel %vm1031, %v973, 0
      %v1042 = vsel %vm1031, %v974, 0
      %1044 = vmatprep.subr.bf16.mxu0 %v948
      %1045 = vmatpush1.bf16.msra.mxu0 %v947
      %1046 = vmatprep.subr.bf16.mxu0 %v944
      %1047 = vmatpush1.bf16.msra.mxu0 %v943
      %1048 = vmatprep.subr.bf16.mxu0 %v940
      %1049 = vmatpush1.bf16.msra.mxu0 %v939
      %1050 = vmatprep.subr.bf16.mxu0 %v936
      %1051 = vmatpush1.bf16.msra.mxu0 %v935
      %1052 = vmatprep.subr.bf16.mxu0 %v932
      %1053 = vmatpush1.bf16.msra.mxu0 %v931
      %1054 = vmatprep.subr.bf16.mxu0 %v928
      %1055 = vmatpush1.bf16.msra.mxu0 %v927
      %1056 = vmatprep.subr.bf16.mxu0 %v924
      %1057 = vmatpush1.bf16.msra.mxu0 %v923
      %1058 = vmatprep.subr.bf16.mxu0 %v920
      %1059 = vmatpush1.bf16.msra.mxu0 %v919
      %1060 = vmatprep.subr.bf16.mxu0 0
      %1061 = vmatpush2.bf16.msra.mxu0 0
      %1062 = vmatprep.subr.bf16.mxu0 0
      %1063 = vmatpush2.bf16.msra.mxu0 0
      %1064 = vmatprep.subr.bf16.mxu0 %v1036
      %1065 = vmatpush2.bf16.msra.mxu0 %v1033
      %1066 = vmatprep.subr.bf16.mxu0 %v968
      %1067 = vmatpush2.bf16.msra.mxu0 %v967
      %1068 = vmatprep.subr.bf16.mxu0 %v964
      %1069 = vmatpush2.bf16.msra.mxu0 %v963
      %1070 = vmatprep.subr.bf16.mxu0 %v960
      %1071 = vmatpush2.bf16.msra.mxu0 %v959
      %1072 = vmatprep.subr.bf16.mxu0 %v956
      %1073 = vmatpush2.bf16.msra.mxu0 %v955
      %1074 = vmatprep.subr.bf16.mxu0 %v952
      %1075 = vmatpush2.bf16.msra.mxu0 %v951
      %1076 = vmatprep.mubr.bf16.mxu0 %v1029
      %1077 = vmatmul.mubr.bf16.gmra.mxu0 %v754
      %v1078 = vpop.f32.mrf.mxu0
      %v1079 = vadd.f32 %v749, %v1078
      %v1080 = vpop.f32.mrf.mxu0
      %v1081 = vadd.f32 %v749, %v1080
      %v1082 = vpop.f32.mrf.mxu0
      %v1083 = vpop.f32.mrf.mxu0
      %1084 = vdwg.mxu0
      %1085 = vmatprep.subr.bf16.mxu0 %v950
      %1086 = vmatpush1.bf16.msra.mxu0 %v949
      %1087 = vmatprep.subr.bf16.mxu0 %v946
      %1088 = vmatpush1.bf16.msra.mxu0 %v945
      %1089 = vmatprep.subr.bf16.mxu0 %v942
      %1090 = vmatpush1.bf16.msra.mxu0 %v941
      %1091 = vmatprep.subr.bf16.mxu0 %v938
      %1092 = vmatpush1.bf16.msra.mxu0 %v937
      %1093 = vmatprep.subr.bf16.mxu0 %v934
      %1094 = vmatpush1.bf16.msra.mxu0 %v933
      %1095 = vmatprep.subr.bf16.mxu0 %v930
      %1096 = vmatpush1.bf16.msra.mxu0 %v929
      %1097 = vmatprep.subr.bf16.mxu0 %v926
      %1098 = vmatpush1.bf16.msra.mxu0 %v925
      %1099 = vmatprep.subr.bf16.mxu0 %v922
      %1100 = vmatpush1.bf16.msra.mxu0 %v921
      %1101 = vmatprep.subr.bf16.mxu0 0
      %1102 = vmatpush2.bf16.msra.mxu0 0
      %1103 = vmatprep.subr.bf16.mxu0 0
      %1104 = vmatpush2.bf16.msra.mxu0 0
      %1105 = vmatprep.subr.bf16.mxu0 %v1042
      %1106 = vmatpush2.bf16.msra.mxu0 %v1039
      %1107 = vmatprep.subr.bf16.mxu0 %v970
      %1108 = vmatpush2.bf16.msra.mxu0 %v969
      %1109 = vmatprep.subr.bf16.mxu0 %v966
      %1110 = vmatpush2.bf16.msra.mxu0 %v965
      %1111 = vmatprep.subr.bf16.mxu0 %v962
      %1112 = vmatpush2.bf16.msra.mxu0 %v961
      %1113 = vmatprep.subr.bf16.mxu0 %v958
      %1114 = vmatpush2.bf16.msra.mxu0 %v957
      %1115 = vmatprep.subr.bf16.mxu0 %v954
      %1116 = vmatpush2.bf16.msra.mxu0 %v953
      %1117 = vmatprep.mubr.bf16.mxu0 %v1029
      %1118 = vmatmul.mubr.bf16.gmra.mxu0 %v754
      %v1119 = vpop.f32.mrf.mxu0
      %v1120 = vadd.f32 %v749, %v1119
      %v1121 = vpop.f32.mrf.mxu0
      %v1122 = vadd.f32 %v749, %v1121
      %v1123 = vpop.f32.mrf.mxu0
      %v1124 = vpop.f32.mrf.mxu0
      %1125 = vdwg.mxu0
      %v1126 = vmax.f32 %v1079, 0.0
      %v1127 = vmax.f32 %v1081, 0.0
      %v1128 = vmax.f32 %v1120, 0.0
      %v1129 = vmax.f32 %v1122, 0.0
      %v1130 = vpack.c.bf16 %v1126, %v1126
      %v1131 = vpack.c.bf16 %v1127, %v1127
      %v1132 = vpack.c.bf16 %v1128, %v1128
      %v1133 = vpack.c.bf16 %v1129, %v1129
      %v1138 = vunpack.c.l.b16 %v1130
      %v1139 = vunpack.c.l.b16 %v1131
      %v1140 = vunpack.c.l.b16 %v1132
      %v1141 = vunpack.c.l.b16 %v1133
      %v1142 = vpack.c.b16 %v1139, %v1138
      %v1143 = vpack.c.b16 %v1141, %v1140
      %1146 = vst [vmem:[%s206] sm:$0xff] %v1142
      %1147 = vst [vmem:[%s206 + $0x8] sm:$0xff] %v1143
      %s1148 = smul.u32 4, %s19
      %p1149 = scmp.lt.s32.totalorder %s18, 1
      %s1150 = scalar_select %p1149, %s18, 1
      %p1151 = scmp.lt.s32.totalorder %s1148, 47
      %s1152 = scalar_select %p1151, %s1148, 47
      %s1153 = smul.addr %s1150, 48
      %s1154 = sadd.s32 %s1152, %s1153
      %s1155 = smul.addr %s1154, 4
      %s1156 = scalar_lea.vmem %s3, %s1155
      // Predicated region
      $region33: #{forward.6} parent=31 // pred_check
        %p1157 = pneg %p116
      $region34: #{forward.6} parent=31 // pred_check_branch
        %1159 = sbr.rel (%p1157) target = $region36
      $region35: #{forward.6} parent=31 // pred_region
        %s1160 = smul.u32 4, %s19
      $region36: #{forward.6} parent=31 // pred_fallthru
        _
    $region32: #{forward.6} parent=5 // pred_fallthru
      _
    %p1161 = scmp.le.s32.totalorder 2, %s9
    // Predicated region
    $region37: #{forward.6} parent=5 // pred_check
      %p1162 = pneg %p1161
    $region38: #{forward.6} parent=5 // pred_check_branch
      %1164 = sbr.rel (%p1162) target = $region40
    $region39: #{forward.6} parent=5 // pred_region
      %s1165 = ssub.s32 %s9, 2
      // Predicated region
      $region41: #{forward.6} parent=39 // pred_check
        %p1166 = pneg %p122
      $region42: #{forward.6} parent=39 // pred_check_branch
        %1168 = sbr.rel (%p1166) target = $region44
      $region43: #{forward.6} parent=39 // pred_region
        %s1169 = smul.u32 4, %s21
        %p1170 = scmp.lt.s32.totalorder %s20, 1
        %s1171 = scalar_select %p1170, %s20, 1
        %p1172 = scmp.lt.s32.totalorder %s1169, 47
        %s1173 = scalar_select %p1172, %s1169, 47
        %s1174 = smul.addr %s1171, 48
        %s1175 = sadd.s32 %s1173, %s1174
        %s1176 = smul.addr %s1175, 4
        %s1177 = scalar_lea.vmem %s3, %s1176
      $region44: #{forward.6} parent=39 // pred_fallthru
        _
    $region40: #{forward.6} parent=5 // pred_fallthru
      _
  $region6: #{forward.6} parent=0 // loop_footer
    %s13 = sadd.s32 1, %s9
  $region7: #{forward.6} parent=0 // loop_footer_branch
    %8 = sbr.rel target = $region3
  $region8: #{forward.6} parent=0 // loop_exit
    _

// kernel: forward.7
$region0: #{forward.7}
  #allocation0 [shape = 'u32[]', space=smem, size = 0x4, offset = 0x4, fixed_abs, tag = 'smem constant byte address 0x4 - core index']
  #allocation1 [shape = 'u32[144,128]{1,0:T(1,128)}', space=vmem, size = 0x12000, scoped, tag = 'internal scratch']
  #allocation2 [shape = 'bf16[216,512]{1,0:T(8,128)(2,1)}', space=vmem, size = 0x36000, scoped, tag = 'scratch operand']
  %s0 = inlined_call_operand.vmem [shape: bf16[2,12,8,1198], index: 0, kind: input, shape index: {}]
  %s1 = inlined_call_operand.vmem [shape: bf16[8,216], index: 1, kind: input, shape index: {}]
  %s2 = inlined_call_operand.vmem [shape: f32[8,1], index: 2, kind: input, shape index: {}]
  %s3 = inlined_call_operand.vmem [shape: f32[2,8,6144], index: 3, kind: output, shape index: {}]
  %s4 = sld [smem:[#allocation0]]
  $region45: #{forward.7} parent=0
    _
  %s6 = ssub.s32 1, %s4
  %s7 = scalar_select 0, %s6, %s4
  loop: start=0, step=1, limit=26
  $region2: #{forward.7} parent=0 // loop_pre_header
    _
  $region3: #{forward.7} parent=0 // loop_header
    %s9 = sphi 0, %s13
    %p10 = scmp.ge.s32.totalorder %s9, 26
    %s16 = sphi 0, %s28
    %s17 = sphi 0, %s24
    %s18 = sphi 0, %s16
    %s19 = sphi 0, %s17
    %s20 = sphi 0, %s18
    %s21 = sphi 0, %s19
    %s33 = sphi 0, %s35
    %s36 = sphi 0, %s33
    %s37 = sphi 0, %s36
    %s53 = sphi 0, %s37
    %s57 = sphi 0, %s57
    %s59 = sphi 0, %s57
    %s60 = sphi 0, %s59
    %s74 = sphi 0, %s60
    %s78 = sphi 0, %s78
    %s80 = sphi 0, %s78
    %s81 = sphi 0, %s80
    %s95 = sphi 0, %s81
    %s103 = sphi 0, %s105
    %s106 = sphi 0, %s103
    %s107 = sphi 0, %s106
    %s123 = sphi 0, %s107
  $region4: #{forward.7} parent=0 // loop_header_branch
    %12 = sbr.rel (%p10) target = $region8
  $region5: #{forward.7} parent=0 // loop_body
    %s14 = ssub.s32 %s9, 1
    %s15 = ssub.s32 %s9, 2
    %s22 = sadd.s32 1, %s17
    %p23 = scmp.ge.s32.totalorder %s22, 12
    %s24 = scalar_select %p23, 0, %s22
    %s25 = sadd.s32 1, %s16
    %s26 = scalar_select %p23, %s25, %s16
    %p27 = scmp.ge.s32.totalorder %s26, 2
    %s28 = scalar_select %p27, 0, %s26
    %s29 = ssub.s32 %s16, %s28
    %s30 = ssub.s32 %s17, %s24
    %s31 = sor.u32 %s29, %s30
    %p32 = scmp.eq.s32.totalorder %s31, 0
    %s34 = sadd.s32 %s33, 1
    %s35 = scalar_select %p32, %s33, %s34
    %p38 = pneg %p32
    %p39 = scmp.eq.s32.totalorder %s9, 23
    %p40 = por %p38, %p39
    %p41 = scmp.ne.s32.totalorder %s33, %s36
    %p42 = scmp.eq.s32.totalorder %s9, 0
    %p43 = por %p41, %p42
    %p44 = scmp.ne.s32.totalorder %s33, %s36
    %p45 = scmp.eq.s32.totalorder %s14, 23
    %p46 = por %p44, %p45
    %p47 = scmp.ne.s32.totalorder %s36, %s37
    %p48 = scmp.eq.s32.totalorder %s14, 0
    %p49 = por %p47, %p48
    %p50 = scmp.ne.s32.totalorder %s36, %s37
    %p51 = scmp.eq.s32.totalorder %s15, 23
    %p52 = por %p50, %p51
    %p54 = scmp.ne.s32.totalorder %s37, %s53
    %p55 = scmp.eq.s32.totalorder %s15, 0
    %p56 = por %p54, %p55
    %s58 = sadd.s32 %s57, 1
    %p61 = scmp.eq.s32.totalorder %s9, 23
    %p62 = scmp.ne.s32.totalorder %s57, %s59
    %p63 = scmp.eq.s32.totalorder %s9, 0
    %p64 = por %p62, %p63
    %p65 = scmp.ne.s32.totalorder %s57, %s59
    %p66 = scmp.eq.s32.totalorder %s14, 23
    %p67 = por %p65, %p66
    %p68 = scmp.ne.s32.totalorder %s59, %s60
    %p69 = scmp.eq.s32.totalorder %s14, 0
    %p70 = por %p68, %p69
    %p71 = scmp.ne.s32.totalorder %s59, %s60
    %p72 = scmp.eq.s32.totalorder %s15, 23
    %p73 = por %p71, %p72
    %p75 = scmp.ne.s32.totalorder %s60, %s74
    %p76 = scmp.eq.s32.totalorder %s15, 0
    %p77 = por %p75, %p76
    %s79 = sadd.s32 %s78, 1
    %p82 = scmp.eq.s32.totalorder %s9, 23
    %p83 = scmp.ne.s32.totalorder %s78, %s80
    %p84 = scmp.eq.s32.totalorder %s9, 0
    %p85 = por %p83, %p84
    %p86 = scmp.ne.s32.totalorder %s78, %s80
    %p87 = scmp.eq.s32.totalorder %s14, 23
    %p88 = por %p86, %p87
    %p89 = scmp.ne.s32.totalorder %s80, %s81
    %p90 = scmp.eq.s32.totalorder %s14, 0
    %p91 = por %p89, %p90
    %p92 = scmp.ne.s32.totalorder %s80, %s81
    %p93 = scmp.eq.s32.totalorder %s15, 23
    %p94 = por %p92, %p93
    %p96 = scmp.ne.s32.totalorder %s81, %s95
    %p97 = scmp.eq.s32.totalorder %s15, 0
    %p98 = por %p96, %p97
    %s99 = ssub.s32 %s16, %s28
    %s100 = ssub.s32 %s17, %s24
    %s101 = sor.u32 %s99, %s100
    %p102 = scmp.eq.s32.totalorder %s101, 0
    %s104 = sadd.s32 %s103, 1
    %s105 = scalar_select %p102, %s103, %s104
    %p108 = pneg %p102
    %p109 = scmp.eq.s32.totalorder %s9, 23
    %p110 = por %p108, %p109
    %p111 = scmp.ne.s32.totalorder %s103, %s106
    %p112 = scmp.eq.s32.totalorder %s9, 0
    %p113 = por %p111, %p112
    %p114 = scmp.ne.s32.totalorder %s103, %s106
    %p115 = scmp.eq.s32.totalorder %s14, 23
    %p116 = por %p114, %p115
    %p117 = scmp.ne.s32.totalorder %s106, %s107
    %p118 = scmp.eq.s32.totalorder %s14, 0
    %p119 = por %p117, %p118
    %p120 = scmp.ne.s32.totalorder %s106, %s107
    %p121 = scmp.eq.s32.totalorder %s15, 23
    %p122 = por %p120, %p121
    %p124 = scmp.ne.s32.totalorder %s107, %s123
    %p125 = scmp.eq.s32.totalorder %s15, 0
    %p126 = por %p124, %p125
    %p127 = scmp.le.s32.totalorder 1, %s9
    %p128 = scmp.lt.s32.totalorder %s9, 25
    %p129 = pnand %p127, %p128
    %p130 = pneg %p129
    // Predicated region
    $region9: #{forward.7} parent=5 // pred_check
      _
    $region10: #{forward.7} parent=5 // pred_check_branch
      %132 = sbr.rel (%p129) target = $region12
    $region11: #{forward.7} parent=5 // pred_region
      %s133 = ssub.s32 %s9, 1
      // Predicated region
      $region13: #{forward.7} parent=11 // pred_check
        %p134 = pneg %p70
      $region14: #{forward.7} parent=11 // pred_check_branch
        %136 = sbr.rel (%p134) target = $region16
      $region15: #{forward.7} parent=11 // pred_region
        _
      $region16: #{forward.7} parent=11 // pred_fallthru
        _
      // Predicated region
      $region17: #{forward.7} parent=11 // pred_check
        %p137 = pneg %p91
      $region18: #{forward.7} parent=11 // pred_check_branch
        %139 = sbr.rel (%p137) target = $region20
      $region19: #{forward.7} parent=11 // pred_region
        _
      $region20: #{forward.7} parent=11 // pred_fallthru
        _
    $region12: #{forward.7} parent=5 // pred_fallthru
      _
    %p140 = scmp.lt.s32.totalorder %s9, 24
    // Predicated region
    $region21: #{forward.7} parent=5 // pred_check
      %p141 = pneg %p140
    $region22: #{forward.7} parent=5 // pred_check_branch
      %143 = sbr.rel (%p141) target = $region24
    $region23: #{forward.7} parent=5 // pred_region
      // Predicated region
      $region25: #{forward.7} parent=23 // pred_check
        %p144 = pneg %p43
      $region26: #{forward.7} parent=23 // pred_check_branch
        %146 = sbr.rel (%p144) target = $region28
      $region27: #{forward.7} parent=23 // pred_region
        %p147 = scmp.lt.s32.totalorder %s16, 1
        %s148 = scalar_select %p147, %s16, 1
        %p149 = scmp.lt.s32.totalorder %s17, 11
        %s150 = scalar_select %p149, %s17, 11
        %s151 = smul.addr %s150, 10
        %s152 = smul.addr %s148, 120
        %s153 = sadd.s32 %s151, %s152
        %s154 = smul.addr %s153, 4
        %s155 = scalar_lea.vmem %s0, %s154
      $region28: #{forward.7} parent=23 // pred_fallthru
        _
    $region24: #{forward.7} parent=5 // pred_fallthru
      _
    %p156 = scmp.le.s32.totalorder 1, %s9
    %p157 = scmp.lt.s32.totalorder %s9, 25
    %p158 = pnand %p156, %p157
    %p159 = pneg %p158
    // Predicated region
    $region29: #{forward.7} parent=5 // pred_check
      _
    $region30: #{forward.7} parent=5 // pred_check_branch
      %161 = sbr.rel (%p158) target = $region32
    $region31: #{forward.7} parent=5 // pred_region
      %s162 = ssub.s32 %s9, 1
      %p163 = scmp.lt.s32.totalorder %s18, 1
      %s164 = scalar_select %p163, %s18, 1
      %p165 = scmp.lt.s32.totalorder %s19, 11
      %s166 = scalar_select %p165, %s19, 11
      %s167 = smul.addr %s166, 10
      %s168 = smul.addr %s164, 120
      %s169 = sadd.s32 %s167, %s168
      %s170 = smul.addr %s169, 4
      %s171 = scalar_lea.vmem %s0, %s170
      %p172 = pneg %p49
      %p173 = pneg %p46
      %p174 = pneg %p70
      %p175 = pneg %p67
      %p176 = pneg %p91
      %p177 = pneg %p88
      %p178 = pneg %p119
      %p179 = pneg %p116
      %s180 = smul.u32 4, %s19
      %p181 = scmp.lt.s32.totalorder %s18, 1
      %s182 = scalar_select %p181, %s18, 1
      %p183 = scmp.lt.s32.totalorder %s180, 47
      %s184 = scalar_select %p183, %s180, 47
      %s185 = smul.addr %s182, 48
      %s186 = sadd.s32 %s184, %s185
      %s187 = smul.addr %s186, 8
      %s188 = scalar_lea.vmem %s3, %s187
      %p189 = scmp.lt.s32.totalorder %s18, 1
      %s190 = scalar_select %p189, %s18, 1
      %p191 = scmp.lt.s32.totalorder %s19, 11
      %s192 = scalar_select %p191, %s19, 11
      %s193 = smul.addr %s192, 10
      %s194 = smul.addr %s190, 120
      %s195 = sadd.s32 %s193, %s194
      %s196 = smul.addr %s195, 4
      %s197 = scalar_lea.vmem %s0, %s196
      %s198 = smul.u32 4, %s19
      %p199 = scmp.lt.s32.totalorder %s18, 1
      %s200 = scalar_select %p199, %s18, 1
      %p201 = scmp.lt.s32.totalorder %s198, 47
      %s202 = scalar_select %p201, %s198, 47
      %s203 = smul.addr %s200, 48
      %s204 = sadd.s32 %s202, %s203
      %s205 = smul.addr %s204, 8
      %s206 = scalar_lea.vmem %s3, %s205
      %s207 = smul.u32 4, %s19
      %v209 = vld [vmem:[%s197] sm:$0xff]
      %v210 = vld [vmem:[%s197 + $0x8] sm:$0xff]
      %v211 = vld [vmem:[%s197 + $0x10] sm:$0xff]
      %v212 = vld [vmem:[%s197 + $0x18] sm:$0xff]
      %v213 = vld [vmem:[%s197 + $0x20] sm:$0xff]
      %214 = vst [vmem:[#allocation2] sm:$0xff] %v209
      %215 = vst [vmem:[#allocation2 + $0x8] sm:$0xff] %v210
      %219 = vrot.lane.b32.xlu0 %v209, 127
      %v220 = vpop.permute.xlu0 %219
      %221 = vrot.lane.b32.xlu0 %v210, 127
      %v222 = vpop.permute.xlu0 %221
      %223 = vrot.lane.b32.xlu0 %v211, 127
      %v224 = vpop.permute.xlu0 %223
      %v225 = vrot.slane %v220, 4
      %v226 = vrot.slane %v222, 4
      %v227 = vrot.slane %v224, 4
      %vm228 = vcmask 1043456
      %v229 = vsel %vm228, %v225, %v226
      %vm230 = vcmask 1039360
      %v231 = vsel %vm230, %v220, %v229
      %v232 = vsel %vm228, %v226, %v227
      %v233 = vsel %vm230, %v222, %v232
      %236 = vst [vmem:[#allocation2 + $0x10] sm:$0xff] %v231
      %237 = vst [vmem:[#allocation2 + $0x18] sm:$0xff] %v233
      %238 = vrot.lane.b32.xlu0 %v209, 126
      %v239 = vpop.permute.xlu0 %238
      %240 = vrot.lane.b32.xlu0 %v210, 126
      %v241 = vpop.permute.xlu0 %240
      %242 = vrot.lane.b32.xlu0 %v211, 126
      %v243 = vpop.permute.xlu0 %242
      %v244 = vrot.slane %v239, 4
      %v245 = vrot.slane %v241, 4
      %v246 = vrot.slane %v243, 4
      %v247 = vsel %vm228, %v244, %v245
      %vm248 = vcmask 1031168
      %v249 = vsel %vm248, %v239, %v247
      %v250 = vsel %vm228, %v245, %v246
      %v251 = vsel %vm248, %v241, %v250
      %254 = vst [vmem:[#allocation2 + $0x20] sm:$0xff] %v249
      %255 = vst [vmem:[#allocation2 + $0x28] sm:$0xff] %v251
      %256 = vrot.lane.b32.xlu0 %v209, 110
      %v257 = vpop.permute.xlu0 %256
      %258 = vrot.lane.b32.xlu0 %v210, 110
      %v259 = vpop.permute.xlu0 %258
      %260 = vrot.lane.b32.xlu0 %v211, 110
      %v261 = vpop.permute.xlu0 %260
      %v262 = vrot.slane %v257, 4
      %v263 = vrot.slane %v259, 4
      %v264 = vrot.slane %v261, 4
      %v265 = vsel %vm228, %v262, %v263
      %vm266 = vcmask 900096
      %v267 = vsel %vm266, %v257, %v265
      %v268 = vsel %vm228, %v263, %v264
      %v269 = vsel %vm266, %v259, %v268
      %272 = vst [vmem:[#allocation2 + $0x30] sm:$0xff] %v267
      %273 = vst [vmem:[#allocation2 + $0x38] sm:$0xff] %v269
      %274 = vrot.lane.b32.xlu0 %v209, 109
      %v275 = vpop.permute.xlu0 %274
      %276 = vrot.lane.b32.xlu0 %v210, 109
      %v277 = vpop.permute.xlu0 %276
      %278 = vrot.lane.b32.xlu0 %v211, 109
      %v279 = vpop.permute.xlu0 %278
      %v280 = vrot.slane %v275, 4
      %v281 = vrot.slane %v277, 4
      %v282 = vrot.slane %v279, 4
      %v283 = vsel %vm228, %v280, %v281
      %vm284 = vcmask 891904
      %v285 = vsel %vm284, %v275, %v283
      %v286 = vsel %vm228, %v281, %v282
      %v287 = vsel %vm284, %v277, %v286
      %290 = vst [vmem:[#allocation2 + $0x40] sm:$0xff] %v285
      %291 = vst [vmem:[#allocation2 + $0x48] sm:$0xff] %v287
      %292 = vrot.lane.b32.xlu0 %v209, 108
      %v293 = vpop.permute.xlu0 %292
      %294 = vrot.lane.b32.xlu0 %v210, 108
      %v295 = vpop.permute.xlu0 %294
      %296 = vrot.lane.b32.xlu0 %v211, 108
      %v297 = vpop.permute.xlu0 %296
      %v298 = vrot.slane %v293, 4
      %v299 = vrot.slane %v295, 4
      %v300 = vrot.slane %v297, 4
      %v301 = vsel %vm228, %v298, %v299
      %vm302 = vcmask 883712
      %v303 = vsel %vm302, %v293, %v301
      %v304 = vsel %vm228, %v299, %v300
      %v305 = vsel %vm302, %v295, %v304
      %308 = vst [vmem:[#allocation2 + $0x50] sm:$0xff] %v303
      %309 = vst [vmem:[#allocation2 + $0x58] sm:$0xff] %v305
      %310 = vrot.lane.b32.xlu0 %v209, 92
      %v311 = vpop.permute.xlu0 %310
      %312 = vrot.lane.b32.xlu0 %v210, 92
      %v313 = vpop.permute.xlu0 %312
      %314 = vrot.lane.b32.xlu0 %v211, 92
      %v315 = vpop.permute.xlu0 %314
      %v316 = vrot.slane %v311, 4
      %v317 = vrot.slane %v313, 4
      %v318 = vrot.slane %v315, 4
      %v319 = vsel %vm228, %v316, %v317
      %vm320 = vcmask 752640
      %v321 = vsel %vm320, %v311, %v319
      %v322 = vsel %vm228, %v317, %v318
      %v323 = vsel %vm320, %v313, %v322
      %326 = vst [vmem:[#allocation2 + $0x60] sm:$0xff] %v321
      %327 = vst [vmem:[#allocation2 + $0x68] sm:$0xff] %v323
      %328 = vrot.lane.b32.xlu0 %v209, 91
      %v329 = vpop.permute.xlu0 %328
      %330 = vrot.lane.b32.xlu0 %v210, 91
      %v331 = vpop.permute.xlu0 %330
      %332 = vrot.lane.b32.xlu0 %v211, 91
      %v333 = vpop.permute.xlu0 %332
      %v334 = vrot.slane %v329, 4
      %v335 = vrot.slane %v331, 4
      %v336 = vrot.slane %v333, 4
      %v337 = vsel %vm228, %v334, %v335
      %vm338 = vcmask 744448
      %v339 = vsel %vm338, %v329, %v337
      %v340 = vsel %vm228, %v335, %v336
      %v341 = vsel %vm338, %v331, %v340
      %344 = vst [vmem:[#allocation2 + $0x70] sm:$0xff] %v339
      %345 = vst [vmem:[#allocation2 + $0x78] sm:$0xff] %v341
      %346 = vrot.lane.b32.xlu0 %v209, 90
      %v347 = vpop.permute.xlu0 %346
      %348 = vrot.lane.b32.xlu0 %v210, 90
      %v349 = vpop.permute.xlu0 %348
      %350 = vrot.lane.b32.xlu0 %v211, 90
      %v351 = vpop.permute.xlu0 %350
      %v352 = vrot.slane %v347, 4
      %v353 = vrot.slane %v349, 4
      %v354 = vrot.slane %v351, 4
      %v355 = vsel %vm228, %v352, %v353
      %vm356 = vcmask 736256
      %v357 = vsel %vm356, %v347, %v355
      %v358 = vsel %vm228, %v353, %v354
      %v359 = vsel %vm356, %v349, %v358
      %362 = vst [vmem:[#allocation2 + $0x80] sm:$0xff] %v357
      %363 = vst [vmem:[#allocation2 + $0x88] sm:$0xff] %v359
      %365 = vrot.lane.b32.xlu0 %v210, 60
      %v366 = vpop.permute.xlu0 %365
      %367 = vrot.lane.b32.xlu0 %v211, 60
      %v368 = vpop.permute.xlu0 %367
      %369 = vrot.lane.b32.xlu0 %v212, 60
      %v370 = vpop.permute.xlu0 %369
      %v371 = vrot.slane %v366, 4
      %v372 = vrot.slane %v368, 4
      %v373 = vrot.slane %v370, 4
      %v374 = vsel %vm228, %v371, %v372
      %vm375 = vcmask 490496
      %v376 = vsel %vm375, %v366, %v374
      %v377 = vsel %vm228, %v372, %v373
      %v378 = vsel %vm375, %v368, %v377
      %381 = vst [vmem:[#allocation2 + $0x90] sm:$0xff] %v376
      %382 = vst [vmem:[#allocation2 + $0x98] sm:$0xff] %v378
      %383 = vrot.lane.b32.xlu0 %v210, 59
      %v384 = vpop.permute.xlu0 %383
      %385 = vrot.lane.b32.xlu0 %v211, 59
      %v386 = vpop.permute.xlu0 %385
      %387 = vrot.lane.b32.xlu0 %v212, 59
      %v388 = vpop.permute.xlu0 %387
      %v389 = vrot.slane %v384, 4
      %v390 = vrot.slane %v386, 4
      %v391 = vrot.slane %v388, 4
      %v392 = vsel %vm228, %v389, %v390
      %vm393 = vcmask 482304
      %v394 = vsel %vm393, %v384, %v392
      %v395 = vsel %vm228, %v390, %v391
      %v396 = vsel %vm393, %v386, %v395
      %399 = vst [vmem:[#allocation2 + $0xa0] sm:$0xff] %v394
      %400 = vst [vmem:[#allocation2 + $0xa8] sm:$0xff] %v396
      %401 = vrot.lane.b32.xlu0 %v210, 58
      %v402 = vpop.permute.xlu0 %401
      %403 = vrot.lane.b32.xlu0 %v211, 58
      %v404 = vpop.permute.xlu0 %403
      %405 = vrot.lane.b32.xlu0 %v212, 58
      %v406 = vpop.permute.xlu0 %405
      %v407 = vrot.slane %v402, 4
      %v408 = vrot.slane %v404, 4
      %v409 = vrot.slane %v406, 4
      %v410 = vsel %vm228, %v407, %v408
      %vm411 = vcmask 474112
      %v412 = vsel %vm411, %v402, %v410
      %v413 = vsel %vm228, %v408, %v409
      %v414 = vsel %vm411, %v404, %v413
      %417 = vst [vmem:[#allocation2 + $0xb0] sm:$0xff] %v412
      %418 = vst [vmem:[#allocation2 + $0xb8] sm:$0xff] %v414
      %419 = vrot.lane.b32.xlu0 %v210, 42
      %v420 = vpop.permute.xlu0 %419
      %421 = vrot.lane.b32.xlu0 %v211, 42
      %v422 = vpop.permute.xlu0 %421
      %423 = vrot.lane.b32.xlu0 %v212, 42
      %v424 = vpop.permute.xlu0 %423
      %v425 = vrot.slane %v420, 4
      %v426 = vrot.slane %v422, 4
      %v427 = vrot.slane %v424, 4
      %v428 = vsel %vm228, %v425, %v426
      %vm429 = vcmask 343040
      %v430 = vsel %vm429, %v420, %v428
      %v431 = vsel %vm228, %v426, %v427
      %v432 = vsel %vm429, %v422, %v431
      %435 = vst [vmem:[#allocation2 + $0xc0] sm:$0xff] %v430
      %436 = vst [vmem:[#allocation2 + $0xc8] sm:$0xff] %v432
      %437 = vrot.lane.b32.xlu0 %v210, 41
      %v438 = vpop.permute.xlu0 %437
      %439 = vrot.lane.b32.xlu0 %v211, 41
      %v440 = vpop.permute.xlu0 %439
      %441 = vrot.lane.b32.xlu0 %v212, 41
      %v442 = vpop.permute.xlu0 %441
      %v443 = vrot.slane %v438, 4
      %v444 = vrot.slane %v440, 4
      %v445 = vrot.slane %v442, 4
      %v446 = vsel %vm228, %v443, %v444
      %vm447 = vcmask 334848
      %v448 = vsel %vm447, %v438, %v446
      %v449 = vsel %vm228, %v444, %v445
      %v450 = vsel %vm447, %v440, %v449
      %453 = vst [vmem:[#allocation2 + $0xd0] sm:$0xff] %v448
      %454 = vst [vmem:[#allocation2 + $0xd8] sm:$0xff] %v450
      %455 = vrot.lane.b32.xlu0 %v210, 40
      %v456 = vpop.permute.xlu0 %455
      %457 = vrot.lane.b32.xlu0 %v211, 40
      %v458 = vpop.permute.xlu0 %457
      %459 = vrot.lane.b32.xlu0 %v212, 40
      %v460 = vpop.permute.xlu0 %459
      %v461 = vrot.slane %v456, 4
      %v462 = vrot.slane %v458, 4
      %v463 = vrot.slane %v460, 4
      %v464 = vsel %vm228, %v461, %v462
      %vm465 = vcmask 326656
      %v466 = vsel %vm465, %v456, %v464
      %v467 = vsel %vm228, %v462, %v463
      %v468 = vsel %vm465, %v458, %v467
      %471 = vst [vmem:[#allocation2 + $0xe0] sm:$0xff] %v466
      %472 = vst [vmem:[#allocation2 + $0xe8] sm:$0xff] %v468
      %473 = vrot.lane.b32.xlu0 %v210, 24
      %v474 = vpop.permute.xlu0 %473
      %475 = vrot.lane.b32.xlu0 %v211, 24
      %v476 = vpop.permute.xlu0 %475
      %477 = vrot.lane.b32.xlu0 %v212, 24
      %v478 = vpop.permute.xlu0 %477
      %v479 = vrot.slane %v474, 4
      %v480 = vrot.slane %v476, 4
      %v481 = vrot.slane %v478, 4
      %v482 = vsel %vm228, %v479, %v480
      %vm483 = vcmask 195584
      %v484 = vsel %vm483, %v474, %v482
      %v485 = vsel %vm228, %v480, %v481
      %v486 = vsel %vm483, %v476, %v485
      %489 = vst [vmem:[#allocation2 + $0xf0] sm:$0xff] %v484
      %490 = vst [vmem:[#allocation2 + $0xf8] sm:$0xff] %v486
      %491 = vrot.lane.b32.xlu0 %v210, 23
      %v492 = vpop.permute.xlu0 %491
      %493 = vrot.lane.b32.xlu0 %v211, 23
      %v494 = vpop.permute.xlu0 %493
      %495 = vrot.lane.b32.xlu0 %v212, 23
      %v496 = vpop.permute.xlu0 %495
      %v497 = vrot.slane %v492, 4
      %v498 = vrot.slane %v494, 4
      %v499 = vrot.slane %v496, 4
      %v500 = vsel %vm228, %v497, %v498
      %vm501 = vcmask 187392
      %v502 = vsel %vm501, %v492, %v500
      %v503 = vsel %vm228, %v498, %v499
      %v504 = vsel %vm501, %v494, %v503
      %507 = vst [vmem:[#allocation2 + $0x100] sm:$0xff] %v502
      %508 = vst [vmem:[#allocation2 + $0x108] sm:$0xff] %v504
      %509 = vrot.lane.b32.xlu0 %v210, 22
      %v510 = vpop.permute.xlu0 %509
      %511 = vrot.lane.b32.xlu0 %v211, 22
      %v512 = vpop.permute.xlu0 %511
      %513 = vrot.lane.b32.xlu0 %v212, 22
      %v514 = vpop.permute.xlu0 %513
      %v515 = vrot.slane %v510, 4
      %v516 = vrot.slane %v512, 4
      %v517 = vrot.slane %v514, 4
      %v518 = vsel %vm228, %v515, %v516
      %vm519 = vcmask 179200
      %v520 = vsel %vm519, %v510, %v518
      %v521 = vsel %vm228, %v516, %v517
      %v522 = vsel %vm519, %v512, %v521
      %525 = vst [vmem:[#allocation2 + $0x110] sm:$0xff] %v520
      %526 = vst [vmem:[#allocation2 + $0x118] sm:$0xff] %v522
      %528 = vrot.lane.b32.xlu0 %v211, 120
      %v529 = vpop.permute.xlu0 %528
      %530 = vrot.lane.b32.xlu0 %v212, 120
      %v531 = vpop.permute.xlu0 %530
      %532 = vrot.lane.b32.xlu0 %v213, 120
      %v533 = vpop.permute.xlu0 %532
      %v534 = vrot.slane %v529, 4
      %v535 = vrot.slane %v531, 4
      %v536 = vrot.slane %v533, 4
      %v537 = vsel %vm228, %v534, %v535
      %vm538 = vcmask 982016
      %v539 = vsel %vm538, %v537, %v531
      %v540 = vsel %vm228, %v535, %v536
      %v541 = vsel %vm538, %v540, %v533
      %544 = vst [vmem:[#allocation2 + $0x120] sm:$0xff] %v539
      %545 = vst [vmem:[#allocation2 + $0x128] sm:$0xff] %v541
      %546 = vrot.lane.b32.xlu0 %v211, 119
      %v547 = vpop.permute.xlu0 %546
      %548 = vrot.lane.b32.xlu0 %v212, 119
      %v549 = vpop.permute.xlu0 %548
      %550 = vrot.lane.b32.xlu0 %v213, 119
      %v551 = vpop.permute.xlu0 %550
      %v552 = vrot.slane %v547, 4
      %v553 = vrot.slane %v549, 4
      %v554 = vrot.slane %v551, 4
      %v555 = vsel %vm228, %v552, %v553
      %vm556 = vcmask 973824
      %v557 = vsel %vm556, %v555, %v549
      %v558 = vsel %vm228, %v553, %v554
      %v559 = vsel %vm556, %v558, %v551
      %562 = vst [vmem:[#allocation2 + $0x130] sm:$0xff] %v557
      %563 = vst [vmem:[#allocation2 + $0x138] sm:$0xff] %v559
      %564 = vrot.lane.b32.xlu0 %v211, 118
      %v565 = vpop.permute.xlu0 %564
      %566 = vrot.lane.b32.xlu0 %v212, 118
      %v567 = vpop.permute.xlu0 %566
      %568 = vrot.lane.b32.xlu0 %v213, 118
      %v569 = vpop.permute.xlu0 %568
      %v570 = vrot.slane %v565, 4
      %v571 = vrot.slane %v567, 4
      %v572 = vrot.slane %v569, 4
      %v573 = vsel %vm228, %v570, %v571
      %vm574 = vcmask 965632
      %v575 = vsel %vm574, %v573, %v567
      %v576 = vsel %vm228, %v571, %v572
      %v577 = vsel %vm574, %v576, %v569
      %580 = vst [vmem:[#allocation2 + $0x140] sm:$0xff] %v575
      %581 = vst [vmem:[#allocation2 + $0x148] sm:$0xff] %v577
      %582 = vrot.lane.b32.xlu0 %v211, 102
      %v583 = vpop.permute.xlu0 %582
      %584 = vrot.lane.b32.xlu0 %v212, 102
      %v585 = vpop.permute.xlu0 %584
      %586 = vrot.lane.b32.xlu0 %v213, 102
      %v587 = vpop.permute.xlu0 %586
      %v588 = vrot.slane %v583, 4
      %v589 = vrot.slane %v585, 4
      %v590 = vrot.slane %v587, 4
      %v591 = vsel %vm228, %v588, %v589
      %vm592 = vcmask 834560
      %v593 = vsel %vm592, %v591, %v585
      %v594 = vsel %vm228, %v589, %v590
      %v595 = vsel %vm592, %v594, %v587
      %598 = vst [vmem:[#allocation2 + $0x150] sm:$0xff] %v593
      %599 = vst [vmem:[#allocation2 + $0x158] sm:$0xff] %v595
      %600 = vrot.lane.b32.xlu0 %v211, 101
      %v601 = vpop.permute.xlu0 %600
      %602 = vrot.lane.b32.xlu0 %v212, 101
      %v603 = vpop.permute.xlu0 %602
      %604 = vrot.lane.b32.xlu0 %v213, 101
      %v605 = vpop.permute.xlu0 %604
      %v606 = vrot.slane %v601, 4
      %v607 = vrot.slane %v603, 4
      %v608 = vrot.slane %v605, 4
      %v609 = vsel %vm228, %v606, %v607
      %vm610 = vcmask 826368
      %v611 = vsel %vm610, %v609, %v603
      %v612 = vsel %vm228, %v607, %v608
      %v613 = vsel %vm610, %v612, %v605
      %616 = vst [vmem:[#allocation2 + $0x160] sm:$0xff] %v611
      %617 = vst [vmem:[#allocation2 + $0x168] sm:$0xff] %v613
      %618 = vrot.lane.b32.xlu0 %v211, 100
      %v619 = vpop.permute.xlu0 %618
      %620 = vrot.lane.b32.xlu0 %v212, 100
      %v621 = vpop.permute.xlu0 %620
      %622 = vrot.lane.b32.xlu0 %v213, 100
      %v623 = vpop.permute.xlu0 %622
      %v624 = vrot.slane %v619, 4
      %v625 = vrot.slane %v621, 4
      %v626 = vrot.slane %v623, 4
      %v627 = vsel %vm228, %v624, %v625
      %vm628 = vcmask 818176
      %v629 = vsel %vm628, %v627, %v621
      %v630 = vsel %vm228, %v625, %v626
      %v631 = vsel %vm628, %v630, %v623
      %634 = vst [vmem:[#allocation2 + $0x170] sm:$0xff] %v629
      %635 = vst [vmem:[#allocation2 + $0x178] sm:$0xff] %v631
      %636 = vrot.lane.b32.xlu0 %v211, 84
      %v637 = vpop.permute.xlu0 %636
      %638 = vrot.lane.b32.xlu0 %v212, 84
      %v639 = vpop.permute.xlu0 %638
      %640 = vrot.lane.b32.xlu0 %v213, 84
      %v641 = vpop.permute.xlu0 %640
      %v642 = vrot.slane %v637, 4
      %v643 = vrot.slane %v639, 4
      %v644 = vrot.slane %v641, 4
      %v645 = vsel %vm228, %v642, %v643
      %vm646 = vcmask 687104
      %v647 = vsel %vm646, %v645, %v639
      %v648 = vsel %vm228, %v643, %v644
      %v649 = vsel %vm646, %v648, %v641
      %652 = vst [vmem:[#allocation2 + $0x180] sm:$0xff] %v647
      %653 = vst [vmem:[#allocation2 + $0x188] sm:$0xff] %v649
      %654 = vrot.lane.b32.xlu0 %v211, 83
      %v655 = vpop.permute.xlu0 %654
      %656 = vrot.lane.b32.xlu0 %v212, 83
      %v657 = vpop.permute.xlu0 %656
      %658 = vrot.lane.b32.xlu0 %v213, 83
      %v659 = vpop.permute.xlu0 %658
      %v660 = vrot.slane %v655, 4
      %v661 = vrot.slane %v657, 4
      %v662 = vrot.slane %v659, 4
      %v663 = vsel %vm228, %v660, %v661
      %vm664 = vcmask 678912
      %v665 = vsel %vm664, %v663, %v657
      %v666 = vsel %vm228, %v661, %v662
      %v667 = vsel %vm664, %v666, %v659
      %670 = vst [vmem:[#allocation2 + $0x190] sm:$0xff] %v665
      %671 = vst [vmem:[#allocation2 + $0x198] sm:$0xff] %v667
      %672 = vrot.lane.b32.xlu0 %v211, 82
      %v673 = vpop.permute.xlu0 %672
      %674 = vrot.lane.b32.xlu0 %v212, 82
      %v675 = vpop.permute.xlu0 %674
      %676 = vrot.lane.b32.xlu0 %v213, 82
      %v677 = vpop.permute.xlu0 %676
      %v678 = vrot.slane %v673, 4
      %v679 = vrot.slane %v675, 4
      %v680 = vrot.slane %v677, 4
      %v681 = vsel %vm228, %v678, %v679
      %vm682 = vcmask 670720
      %v683 = vsel %vm682, %v681, %v675
      %v684 = vsel %vm228, %v679, %v680
      %v685 = vsel %vm682, %v684, %v677
      %688 = vst [vmem:[#allocation2 + $0x1a0] sm:$0xff] %v683
      %689 = vst [vmem:[#allocation2 + $0x1a8] sm:$0xff] %v685
      %v690 = vld [vmem:[%s1] sm:$0xff]
      %v691 = vld [vmem:[#allocation2] sm:$0xff]
      %v692 = vld [vmem:[#allocation2 + $0x8] sm:$0xff]
      %v693 = vld [vmem:[#allocation2 + $0x10] sm:$0xff]
      %v694 = vld [vmem:[#allocation2 + $0x18] sm:$0xff]
      %v695 = vld [vmem:[#allocation2 + $0x20] sm:$0xff]
      %v696 = vld [vmem:[#allocation2 + $0x28] sm:$0xff]
      %v697 = vld [vmem:[#allocation2 + $0x30] sm:$0xff]
      %v698 = vld [vmem:[#allocation2 + $0x38] sm:$0xff]
      %v699 = vld [vmem:[#allocation2 + $0x40] sm:$0xff]
      %v700 = vld [vmem:[#allocation2 + $0x48] sm:$0xff]
      %v701 = vld [vmem:[#allocation2 + $0x50] sm:$0xff]
      %v702 = vld [vmem:[#allocation2 + $0x58] sm:$0xff]
      %v703 = vld [vmem:[#allocation2 + $0x60] sm:$0xff]
      %v704 = vld [vmem:[#allocation2 + $0x68] sm:$0xff]
      %v705 = vld [vmem:[#allocation2 + $0x70] sm:$0xff]
      %v706 = vld [vmem:[#allocation2 + $0x78] sm:$0xff]
      %v707 = vld [vmem:[#allocation2 + $0x80] sm:$0xff]
      %v708 = vld [vmem:[#allocation2 + $0x88] sm:$0xff]
      %v709 = vld [vmem:[#allocation2 + $0x90] sm:$0xff]
      %v710 = vld [vmem:[#allocation2 + $0x98] sm:$0xff]
      %v711 = vld [vmem:[#allocation2 + $0xa0] sm:$0xff]
      %v712 = vld [vmem:[#allocation2 + $0xa8] sm:$0xff]
      %v713 = vld [vmem:[#allocation2 + $0xb0] sm:$0xff]
      %v714 = vld [vmem:[#allocation2 + $0xb8] sm:$0xff]
      %v715 = vld [vmem:[#allocation2 + $0xc0] sm:$0xff]
      %v716 = vld [vmem:[#allocation2 + $0xc8] sm:$0xff]
      %v717 = vld [vmem:[#allocation2 + $0xd0] sm:$0xff]
      %v718 = vld [vmem:[#allocation2 + $0xd8] sm:$0xff]
      %v719 = vld [vmem:[#allocation2 + $0xe0] sm:$0xff]
      %v720 = vld [vmem:[#allocation2 + $0xe8] sm:$0xff]
      %v721 = vld [vmem:[#allocation2 + $0xf0] sm:$0xff]
      %v722 = vld [vmem:[#allocation2 + $0xf8] sm:$0xff]
      %v723 = vld [vmem:[#allocation2 + $0x100] sm:$0xff]
      %v724 = vld [vmem:[#allocation2 + $0x108] sm:$0xff]
      %v725 = vld [vmem:[#allocation2 + $0x110] sm:$0xff]
      %v726 = vld [vmem:[#allocation2 + $0x118] sm:$0xff]
      %v727 = vld [vmem:[#allocation2 + $0x120] sm:$0xff]
      %v728 = vld [vmem:[#allocation2 + $0x128] sm:$0xff]
      %v729 = vld [vmem:[#allocation2 + $0x130] sm:$0xff]
      %v730 = vld [vmem:[#allocation2 + $0x138] sm:$0xff]
      %v731 = vld [vmem:[#allocation2 + $0x140] sm:$0xff]
      %v732 = vld [vmem:[#allocation2 + $0x148] sm:$0xff]
      %v733 = vld [vmem:[#allocation2 + $0x150] sm:$0xff]
      %v734 = vld [vmem:[#allocation2 + $0x158] sm:$0xff]
      %v735 = vld [vmem:[#allocation2 + $0x160] sm:$0xff]
      %v736 = vld [vmem:[#allocation2 + $0x168] sm:$0xff]
      %v737 = vld [vmem:[#allocation2 + $0x170] sm:$0xff]
      %v738 = vld [vmem:[#allocation2 + $0x178] sm:$0xff]
      %v739 = vld [vmem:[#allocation2 + $0x180] sm:$0xff]
      %v740 = vld [vmem:[#allocation2 + $0x188] sm:$0xff]
      %v741 = vld [vmem:[#allocation2 + $0x190] sm:$0xff]
      %v742 = vld [vmem:[#allocation2 + $0x198] sm:$0xff]
      %v743 = vld [vmem:[#allocation2 + $0x1a0] sm:$0xff]
      %v744 = vld [vmem:[#allocation2 + $0x1a8] sm:$0xff]
      %v745 = vld [vmem:[%s2] sm:$0xff]
      %747 = vset.pattern.permute.xlu0 0
      %748 = vperm.xlu0 %747, %v745
      %v749 = vpop.permute.xlu0 %748
      %v752 = vunpack.c.l.b16 %v690
      %v753 = vunpack.c.h.b16 %v690
      %v754 = vpack.c.b16 %v752, %v752
      %v755 = vpack.c.b16 %v753, %v753
      %v811 = vunpack.c.l.b16 %v691
      %v812 = vunpack.c.h.b16 %v691
      %v813 = vunpack.c.l.b16 %v692
      %v814 = vunpack.c.h.b16 %v692
      %v815 = vunpack.c.l.b16 %v693
      %v816 = vunpack.c.h.b16 %v693
      %v817 = vunpack.c.l.b16 %v694
      %v818 = vunpack.c.h.b16 %v694
      %v819 = vunpack.c.l.b16 %v695
      %v820 = vunpack.c.h.b16 %v695
      %v821 = vunpack.c.l.b16 %v696
      %v822 = vunpack.c.h.b16 %v696
      %v823 = vunpack.c.l.b16 %v697
      %v824 = vunpack.c.h.b16 %v697
      %v825 = vunpack.c.l.b16 %v698
      %v826 = vunpack.c.h.b16 %v698
      %v827 = vunpack.c.l.b16 %v699
      %v828 = vunpack.c.h.b16 %v699
      %v829 = vunpack.c.l.b16 %v700
      %v830 = vunpack.c.h.b16 %v700
      %v831 = vunpack.c.l.b16 %v701
      %v832 = vunpack.c.h.b16 %v701
      %v833 = vunpack.c.l.b16 %v702
      %v834 = vunpack.c.h.b16 %v702
      %v835 = vunpack.c.l.b16 %v703
      %v836 = vunpack.c.h.b16 %v703
      %v837 = vunpack.c.l.b16 %v704
      %v838 = vunpack.c.h.b16 %v704
      %v839 = vunpack.c.l.b16 %v705
      %v840 = vunpack.c.h.b16 %v705
      %v841 = vunpack.c.l.b16 %v706
      %v842 = vunpack.c.h.b16 %v706
      %v843 = vunpack.c.l.b16 %v707
      %v844 = vunpack.c.h.b16 %v707
      %v845 = vunpack.c.l.b16 %v708
      %v846 = vunpack.c.h.b16 %v708
      %v847 = vunpack.c.l.b16 %v709
      %v848 = vunpack.c.h.b16 %v709
      %v849 = vunpack.c.l.b16 %v710
      %v850 = vunpack.c.h.b16 %v710
      %v851 = vunpack.c.l.b16 %v711
      %v852 = vunpack.c.h.b16 %v711
      %v853 = vunpack.c.l.b16 %v712
      %v854 = vunpack.c.h.b16 %v712
      %v855 = vunpack.c.l.b16 %v713
      %v856 = vunpack.c.h.b16 %v713
      %v857 = vunpack.c.l.b16 %v714
      %v858 = vunpack.c.h.b16 %v714
      %v859 = vunpack.c.l.b16 %v715
      %v860 = vunpack.c.h.b16 %v715
      %v861 = vunpack.c.l.b16 %v716
      %v862 = vunpack.c.h.b16 %v716
      %v863 = vunpack.c.l.b16 %v717
      %v864 = vunpack.c.h.b16 %v717
      %v865 = vunpack.c.l.b16 %v718
      %v866 = vunpack.c.h.b16 %v718
      %v867 = vunpack.c.l.b16 %v719
      %v868 = vunpack.c.h.b16 %v719
      %v869 = vunpack.c.l.b16 %v720
      %v870 = vunpack.c.h.b16 %v720
      %v871 = vunpack.c.l.b16 %v721
      %v872 = vunpack.c.h.b16 %v721
      %v873 = vunpack.c.l.b16 %v722
      %v874 = vunpack.c.h.b16 %v722
      %v875 = vunpack.c.l.b16 %v723
      %v876 = vunpack.c.h.b16 %v723
      %v877 = vunpack.c.l.b16 %v724
      %v878 = vunpack.c.h.b16 %v724
      %v879 = vunpack.c.l.b16 %v725
      %v880 = vunpack.c.h.b16 %v725
      %v881 = vunpack.c.l.b16 %v726
      %v882 = vunpack.c.h.b16 %v726
      %v883 = vunpack.c.l.b16 %v727
      %v884 = vunpack.c.h.b16 %v727
      %v885 = vunpack.c.l.b16 %v728
      %v886 = vunpack.c.h.b16 %v728
      %v887 = vunpack.c.l.b16 %v729
      %v888 = vunpack.c.h.b16 %v729
      %v889 = vunpack.c.l.b16 %v730
      %v890 = vunpack.c.h.b16 %v730
      %v891 = vunpack.c.l.b16 %v731
      %v892 = vunpack.c.h.b16 %v731
      %v893 = vunpack.c.l.b16 %v732
      %v894 = vunpack.c.h.b16 %v732
      %v895 = vunpack.c.l.b16 %v733
      %v896 = vunpack.c.h.b16 %v733
      %v897 = vunpack.c.l.b16 %v734
      %v898 = vunpack.c.h.b16 %v734
      %v899 = vunpack.c.l.b16 %v735
      %v900 = vunpack.c.h.b16 %v735
      %v901 = vunpack.c.l.b16 %v736
      %v902 = vunpack.c.h.b16 %v736
      %v903 = vunpack.c.l.b16 %v737
      %v904 = vunpack.c.h.b16 %v737
      %v905 = vunpack.c.l.b16 %v738
      %v906 = vunpack.c.h.b16 %v738
      %v907 = vunpack.c.l.b16 %v739
      %v908 = vunpack.c.h.b16 %v739
      %v909 = vunpack.c.l.b16 %v740
      %v910 = vunpack.c.h.b16 %v740
      %v911 = vunpack.c.l.b16 %v741
      %v912 = vunpack.c.h.b16 %v741
      %v913 = vunpack.c.l.b16 %v742
      %v914 = vunpack.c.h.b16 %v742
      %v915 = vunpack.c.l.b16 %v743
      %v916 = vunpack.c.h.b16 %v743
      %v917 = vunpack.c.l.b16 %v744
      %v918 = vunpack.c.h.b16 %v744
      %v919 = vpack.c.b16 %v815, %v811
      %v920 = vpack.c.b16 %v816, %v812
      %v921 = vpack.c.b16 %v817, %v813
      %v922 = vpack.c.b16 %v818, %v814
      %v923 = vpack.c.b16 %v823, %v819
      %v924 = vpack.c.b16 %v824, %v820
      %v925 = vpack.c.b16 %v825, %v821
      %v926 = vpack.c.b16 %v826, %v822
      %v927 = vpack.c.b16 %v831, %v827
      %v928 = vpack.c.b16 %v832, %v828
      %v929 = vpack.c.b16 %v833, %v829
      %v930 = vpack.c.b16 %v834, %v830
      %v931 = vpack.c.b16 %v839, %v835
      %v932 = vpack.c.b16 %v840, %v836
      %v933 = vpack.c.b16 %v841, %v837
      %v934 = vpack.c.b16 %v842, %v838
      %v935 = vpack.c.b16 %v847, %v843
      %v936 = vpack.c.b16 %v848, %v844
      %v937 = vpack.c.b16 %v849, %v845
      %v938 = vpack.c.b16 %v850, %v846
      %v939 = vpack.c.b16 %v855, %v851
      %v940 = vpack.c.b16 %v856, %v852
      %v941 = vpack.c.b16 %v857, %v853
      %v942 = vpack.c.b16 %v858, %v854
      %v943 = vpack.c.b16 %v863, %v859
      %v944 = vpack.c.b16 %v864, %v860
      %v945 = vpack.c.b16 %v865, %v861
      %v946 = vpack.c.b16 %v866, %v862
      %v947 = vpack.c.b16 %v871, %v867
      %v948 = vpack.c.b16 %v872, %v868
      %v949 = vpack.c.b16 %v873, %v869
      %v950 = vpack.c.b16 %v874, %v870
      %v951 = vpack.c.b16 %v879, %v875
      %v952 = vpack.c.b16 %v880, %v876
      %v953 = vpack.c.b16 %v881, %v877
      %v954 = vpack.c.b16 %v882, %v878
      %v955 = vpack.c.b16 %v887, %v883
      %v956 = vpack.c.b16 %v888, %v884
      %v957 = vpack.c.b16 %v889, %v885
      %v958 = vpack.c.b16 %v890, %v886
      %v959 = vpack.c.b16 %v895, %v891
      %v960 = vpack.c.b16 %v896, %v892
      %v961 = vpack.c.b16 %v897, %v893
      %v962 = vpack.c.b16 %v898, %v894
      %v963 = vpack.c.b16 %v903, %v899
      %v964 = vpack.c.b16 %v904, %v900
      %v965 = vpack.c.b16 %v905, %v901
      %v966 = vpack.c.b16 %v906, %v902
      %v967 = vpack.c.b16 %v911, %v907
      %v968 = vpack.c.b16 %v912, %v908
      %v969 = vpack.c.b16 %v913, %v909
      %v970 = vpack.c.b16 %v914, %v910
      %v971 = vpack.c.b16 %v915, %v915
      %v972 = vpack.c.b16 %v916, %v916
      %v973 = vpack.c.b16 %v917, %v917
      %v974 = vpack.c.b16 %v918, %v918
      %vm1027 = vcmask 719872
      %v1029 = vsel %vm1027, %v755, 0
      %vm1031 = vcmask 1043456
      %v1033 = vsel %vm1031, %v971, 0
      %v1036 = vsel %vm1031, %v972, 0
      %v1039 = vsel %vm1031, %v973, 0
      %v1042 = vsel %vm1031, %v974, 0
      %1044 = vmatprep.subr.bf16.mxu0 %v948
      %1045 = vmatpush1.bf16.msra.mxu0 %v947
      %1046 = vmatprep.subr.bf16.mxu0 %v944
      %1047 = vmatpush1.bf16.msra.mxu0 %v943
      %1048 = vmatprep.subr.bf16.mxu0 %v940
      %1049 = vmatpush1.bf16.msra.mxu0 %v939
      %1050 = vmatprep.subr.bf16.mxu0 %v936
      %1051 = vmatpush1.bf16.msra.mxu0 %v935
      %1052 = vmatprep.subr.bf16.mxu0 %v932
      %1053 = vmatpush1.bf16.msra.mxu0 %v931
      %1054 = vmatprep.subr.bf16.mxu0 %v928
      %1055 = vmatpush1.bf16.msra.mxu0 %v927
      %1056 = vmatprep.subr.bf16.mxu0 %v924
      %1057 = vmatpush1.bf16.msra.mxu0 %v923
      %1058 = vmatprep.subr.bf16.mxu0 %v920
      %1059 = vmatpush1.bf16.msra.mxu0 %v919
      %1060 = vmatprep.subr.bf16.mxu0 0
      %1061 = vmatpush2.bf16.msra.mxu0 0
      %1062 = vmatprep.subr.bf16.mxu0 0
      %1063 = vmatpush2.bf16.msra.mxu0 0
      %1064 = vmatprep.subr.bf16.mxu0 %v1036
      %1065 = vmatpush2.bf16.msra.mxu0 %v1033
      %1066 = vmatprep.subr.bf16.mxu0 %v968
      %1067 = vmatpush2.bf16.msra.mxu0 %v967
      %1068 = vmatprep.subr.bf16.mxu0 %v964
      %1069 = vmatpush2.bf16.msra.mxu0 %v963
      %1070 = vmatprep.subr.bf16.mxu0 %v960
      %1071 = vmatpush2.bf16.msra.mxu0 %v959
      %1072 = vmatprep.subr.bf16.mxu0 %v956
      %1073 = vmatpush2.bf16.msra.mxu0 %v955
      %1074 = vmatprep.subr.bf16.mxu0 %v952
      %1075 = vmatpush2.bf16.msra.mxu0 %v951
      %1076 = vmatprep.mubr.bf16.mxu0 %v1029
      %1077 = vmatmul.mubr.bf16.gmra.mxu0 %v754
      %v1078 = vpop.f32.mrf.mxu0
      %v1079 = vadd.f32 %v749, %v1078
      %v1080 = vpop.f32.mrf.mxu0
      %v1081 = vadd.f32 %v749, %v1080
      %v1082 = vpop.f32.mrf.mxu0
      %v1083 = vpop.f32.mrf.mxu0
      %1084 = vdwg.mxu0
      %1085 = vmatprep.subr.bf16.mxu0 %v950
      %1086 = vmatpush1.bf16.msra.mxu0 %v949
      %1087 = vmatprep.subr.bf16.mxu0 %v946
      %1088 = vmatpush1.bf16.msra.mxu0 %v945
      %1089 = vmatprep.subr.bf16.mxu0 %v942
      %1090 = vmatpush1.bf16.msra.mxu0 %v941
      %1091 = vmatprep.subr.bf16.mxu0 %v938
      %1092 = vmatpush1.bf16.msra.mxu0 %v937
      %1093 = vmatprep.subr.bf16.mxu0 %v934
      %1094 = vmatpush1.bf16.msra.mxu0 %v933
      %1095 = vmatprep.subr.bf16.mxu0 %v930
      %1096 = vmatpush1.bf16.msra.mxu0 %v929
      %1097 = vmatprep.subr.bf16.mxu0 %v926
      %1098 = vmatpush1.bf16.msra.mxu0 %v925
      %1099 = vmatprep.subr.bf16.mxu0 %v922
      %1100 = vmatpush1.bf16.msra.mxu0 %v921
      %1101 = vmatprep.subr.bf16.mxu0 0
      %1102 = vmatpush2.bf16.msra.mxu0 0
      %1103 = vmatprep.subr.bf16.mxu0 0
      %1104 = vmatpush2.bf16.msra.mxu0 0
      %1105 = vmatprep.subr.bf16.mxu0 %v1042
      %1106 = vmatpush2.bf16.msra.mxu0 %v1039
      %1107 = vmatprep.subr.bf16.mxu0 %v970
      %1108 = vmatpush2.bf16.msra.mxu0 %v969
      %1109 = vmatprep.subr.bf16.mxu0 %v966
      %1110 = vmatpush2.bf16.msra.mxu0 %v965
      %1111 = vmatprep.subr.bf16.mxu0 %v962
      %1112 = vmatpush2.bf16.msra.mxu0 %v961
      %1113 = vmatprep.subr.bf16.mxu0 %v958
      %1114 = vmatpush2.bf16.msra.mxu0 %v957
      %1115 = vmatprep.subr.bf16.mxu0 %v954
      %1116 = vmatpush2.bf16.msra.mxu0 %v953
      %1117 = vmatprep.mubr.bf16.mxu0 %v1029
      %1118 = vmatmul.mubr.bf16.gmra.mxu0 %v754
      %v1119 = vpop.f32.mrf.mxu0
      %v1120 = vadd.f32 %v749, %v1119
      %v1121 = vpop.f32.mrf.mxu0
      %v1122 = vadd.f32 %v749, %v1121
      %v1123 = vpop.f32.mrf.mxu0
      %v1124 = vpop.f32.mrf.mxu0
      %1125 = vdwg.mxu0
      %1126 = vst [vmem:[%s206] sm:$0xff] %v1079
      %1127 = vst [vmem:[%s206 + $0x8] sm:$0xff] %v1081
      %1128 = vst [vmem:[%s206 + $0x10] sm:$0xff] %v1120
      %1129 = vst [vmem:[%s206 + $0x18] sm:$0xff] %v1122
      %s1130 = smul.u32 4, %s19
      %p1131 = scmp.lt.s32.totalorder %s18, 1
      %s1132 = scalar_select %p1131, %s18, 1
      %p1133 = scmp.lt.s32.totalorder %s1130, 47
      %s1134 = scalar_select %p1133, %s1130, 47
      %s1135 = smul.addr %s1132, 48
      %s1136 = sadd.s32 %s1134, %s1135
      %s1137 = smul.addr %s1136, 8
      %s1138 = scalar_lea.vmem %s3, %s1137
      // Predicated region
      $region33: #{forward.7} parent=31 // pred_check
        %p1139 = pneg %p116
      $region34: #{forward.7} parent=31 // pred_check_branch
        %1141 = sbr.rel (%p1139) target = $region36
      $region35: #{forward.7} parent=31 // pred_region
        %s1142 = smul.u32 4, %s19
      $region36: #{forward.7} parent=31 // pred_fallthru
        _
    $region32: #{forward.7} parent=5 // pred_fallthru
      _
    %p1143 = scmp.le.s32.totalorder 2, %s9
    // Predicated region
    $region37: #{forward.7} parent=5 // pred_check
      %p1144 = pneg %p1143
    $region38: #{forward.7} parent=5 // pred_check_branch
      %1146 = sbr.rel (%p1144) target = $region40
    $region39: #{forward.7} parent=5 // pred_region
      %s1147 = ssub.s32 %s9, 2
      // Predicated region
      $region41: #{forward.7} parent=39 // pred_check
        %p1148 = pneg %p122
      $region42: #{forward.7} parent=39 // pred_check_branch
        %1150 = sbr.rel (%p1148) target = $region44
      $region43: #{forward.7} parent=39 // pred_region
        %s1151 = smul.u32 4, %s21
        %p1152 = scmp.lt.s32.totalorder %s20, 1
        %s1153 = scalar_select %p1152, %s20, 1
        %p1154 = scmp.lt.s32.totalorder %s1151, 47
        %s1155 = scalar_select %p1154, %s1151, 47
        %s1156 = smul.addr %s1153, 48
        %s1157 = sadd.s32 %s1155, %s1156
        %s1158 = smul.addr %s1157, 8
        %s1159 = scalar_lea.vmem %s3, %s1158
      $region44: #{forward.7} parent=39 // pred_fallthru
        _
    $region40: #{forward.7} parent=5 // pred_fallthru
      _
  $region6: #{forward.7} parent=0 // loop_footer
    %s13 = sadd.s32 1, %s9
  $region7: #{forward.7} parent=0 // loop_footer_branch
    %8 = sbr.rel target = $region3
  $region8: #{forward.7} parent=0 // loop_exit
    _

</llo_original>
